<compile_context>
chip_gen: v5e
topology: v5e:2x2
jax: 0.10.0
libtpu: 0.0.40
codegen_flags: <defaults>
</compile_context>

<pallas_src>
import jax
import jax.numpy as jnp
from jax.experimental import pallas as pl
from jax.experimental.pallas import tpu as pltpu

DW_K = 5            # unified depthwise tap extent; the 3x3 group is zero-padded to 5x5
DW_PAD = DW_K // 2  # = kernel_size // 2 padding of the PyTorch MDConv
PACK = 2            # images packed per grid step along the lane (channel) axis


# --------------------------------------------------------------------------
# Fused Pallas kernel (one grid step = PACK channel-packed images)
# --------------------------------------------------------------------------

def mixnet_fused_kernel(x_ref, w_exp_ref, s1_ref, b1_ref,
                        w_dw_ref, s2_ref, b2_ref,
                        w_se1_ref, bse1_ref, w_se2_ref, bse2_ref,
                        w_proj_ref, s3_ref, b3_ref,
                        o_ref, pad_ref):
    """Fused MixNetBlock forward for PACK channel-packed images per step.

    x_ref:       (1, HW, PACK*Cin)       packed input (also the residual)
    w_exp_ref:   (PACK*Cin, PACK*Cexp)   block-diagonal 1x1 expansion weight
    s1/b1:       (1, PACK*Cexp)          folded BN after expansion
    w_dw_ref:    (25, PACK*Cexp)         depthwise taps (3x3 group padded to 5x5)
    s2/b2:       (1, PACK*Cexp)          folded BN after depthwise conv
    w_se1/bse1:  (PACK*Cexp, PACK*Csq), (1, PACK*Csq)   SE reduce (block-diag)
    w_se2/bse2:  (PACK*Csq, PACK*Cexp), (1, PACK*Cexp)  SE expand (block-diag)
    w_proj_ref:  (PACK*Cexp, PACK*Cout)  block-diagonal 1x1 projection weight
    s3/b3:       (1, PACK*Cout)          folded BN after projection
    o_ref:       (1, HW, PACK*Cout)
    pad_ref:     (H+4, W+4, PACK*Cexp)   VMEM scratch (zero halo + interior)
    """
    Hp, Wp, Cp = pad_ref.shape
    H = Hp - 2 * DW_PAD
    W = Wp - 2 * DW_PAD
    HW = H * W

    x = x_ref[0]                                               # (HW, PACK*Cin)

    # ---- Stage 1: pointwise (1x1) expansion on the MXU + folded BN + ReLU ----
    t1 = jnp.dot(x, w_exp_ref[...], preferred_element_type=jnp.float32)
    t1 = jnp.maximum(t1 * s1_ref[...] + b1_ref[...], 0.0)      # (HW, Cp)

    # ---- Stage 2: mixed depthwise 5x5/3x3 conv + folded BN + ReLU ----
    # Zero only the 2-wide halo strips each step (the interior is fully
    # overwritten), instead of zero-filling the whole scratch.
    pad_ref[0:DW_PAD, :, :] = jnp.zeros((DW_PAD, Wp, Cp), jnp.float32)
    pad_ref[DW_PAD + H:Hp, :, :] = jnp.zeros((DW_PAD, Wp, Cp), jnp.float32)
    pad_ref[DW_PAD:DW_PAD + H, 0:DW_PAD, :] = jnp.zeros((H, DW_PAD, Cp), jnp.float32)
    pad_ref[DW_PAD:DW_PAD + H, DW_PAD + W:Wp, :] = jnp.zeros((H, DW_PAD, Cp), jnp.float32)
    pad_ref[DW_PAD:DW_PAD + H, DW_PAD:DW_PAD + W, :] = t1.reshape(H, W, Cp)

    acc = jnp.zeros((H, W, Cp), jnp.float32)
    for kh in range(DW_K):            # 25 shifted MACs, all 128 lanes busy
        for kw in range(DW_K):
            tap = w_dw_ref[kh * DW_K + kw, :].reshape(1, 1, Cp)
            acc = acc + pad_ref[kh:kh + H, kw:kw + W, :] * tap
    t2 = jnp.maximum(acc * s2_ref[...].reshape(1, 1, Cp)
                     + b2_ref[...].reshape(1, 1, Cp), 0.0)
    t2 = t2.reshape(HW, Cp)

    # ---- Stage 3: squeeze-and-excite (per-image via block-diag weights) ----
    pooled = jnp.sum(t2, axis=0, keepdims=True) * (1.0 / HW)   # (1, Cp)
    h = jnp.dot(pooled, w_se1_ref[...],
                preferred_element_type=jnp.float32) + bse1_ref[...]
    h = jnp.maximum(h, 0.0)                                    # (1, PACK*Csq)
    z = jnp.dot(h, w_se2_ref[...],
                preferred_element_type=jnp.float32) + bse2_ref[...]
    z = jnp.clip(z, -30.0, 30.0)                               # overflow-safe sigmoid
    gate = 1.0 / (1.0 + jnp.exp(-z))                           # (1, Cp)
    t3 = t2 * gate

    # ---- Stage 4: pointwise projection (MXU) + folded BN + residual ----
    proj = jnp.dot(t3, w_proj_ref[...], preferred_element_type=jnp.float32)
    # residual_connection is True for this config (stride==1, Cin==Cout)
    o_ref[0] = proj * s3_ref[...] + b3_ref[...] + x


# --------------------------------------------------------------------------
# Wrapper (layout glue / parameter packing stays in plain JAX)
# --------------------------------------------------------------------------

def _fold_bn(gamma, beta, mean, var, eps=1e-5):
    scale = gamma / jnp.sqrt(var + eps)
    bias = beta - mean * scale
    return scale.reshape(1, -1), bias.reshape(1, -1)


def _block_diag(w, n):
    a, b = w.shape
    out = jnp.zeros((n * a, n * b), w.dtype)
    for i in range(n):
        out = out.at[i * a:(i + 1) * a, i * b:(i + 1) * b].set(w)
    return out


def mixnet_block_forward(x_nchw, p, pack=PACK):
    N, Cin, H, W = x_nchw.shape
    assert N % pack == 0, "batch must be divisible by the image pack factor"
    Cexp = p["w_exp"].shape[1]
    Csq = p["w_se1"].shape[1]
    Cout = p["w_proj"].shape[1]
    HW = H * W
    G = N // pack

    # NCHW -> NHWC -> channel-packed (G, HW, pack*Cin): image (g*pack + j)'s
    # channel c sits at lane j*Cin + c.  Pure-JAX glue, tiny vs. the kernel.
    x_nhwc = jnp.transpose(x_nchw, (0, 2, 3, 1))
    x_pack = (x_nhwc.reshape(G, pack, H, W, Cin)
              .transpose(0, 2, 3, 1, 4)
              .reshape(G, HW, pack * Cin))

    tile = lambda v: jnp.tile(v, (1, pack))
    w_exp_p = _block_diag(p["w_exp"], pack)
    w_se1_p = _block_diag(p["w_se1"], pack)
    w_se2_p = _block_diag(p["w_se2"], pack)
    w_proj_p = _block_diag(p["w_proj"], pack)
    w_dw_p = jnp.tile(p["w_dw"], (1, pack))
    s1_p, b1_p = tile(p["s1"]), tile(p["b1"])
    s2_p, b2_p = tile(p["s2"]), tile(p["b2"])
    s3_p, b3_p = tile(p["s3"]), tile(p["b3"])
    bse1_p, bse2_p = tile(p["b_se1"]), tile(p["b_se2"])

    def const_spec(shape):
        zeros = (0,) * len(shape)
        return pl.BlockSpec(shape, lambda g, z=zeros: z)

    out_packed = pl.pallas_call(
        mixnet_fused_kernel,
        out_shape=jax.ShapeDtypeStruct((G, HW, pack * Cout), jnp.float32),
        grid_spec=pltpu.PrefetchScalarGridSpec(
            num_scalar_prefetch=0,
            grid=(G,),
            in_specs=[
                pl.BlockSpec((1, HW, pack * Cin), lambda g: (g, 0, 0)),
                const_spec((pack * Cin, pack * Cexp)),
                const_spec((1, pack * Cexp)),
                const_spec((1, pack * Cexp)),
                const_spec((DW_K * DW_K, pack * Cexp)),
                const_spec((1, pack * Cexp)),
                const_spec((1, pack * Cexp)),
                const_spec((pack * Cexp, pack * Csq)),
                const_spec((1, pack * Csq)),
                const_spec((pack * Csq, pack * Cexp)),
                const_spec((1, pack * Cexp)),
                const_spec((pack * Cexp, pack * Cout)),
                const_spec((1, pack * Cout)),
                const_spec((1, pack * Cout)),
            ],
            out_specs=pl.BlockSpec((1, HW, pack * Cout), lambda g: (g, 0, 0)),
            scratch_shapes=[
                pltpu.VMEM((H + 2 * DW_PAD, W + 2 * DW_PAD, pack * Cexp),
                           jnp.float32)
            ],
        ),
        compiler_params=pltpu.CompilerParams(
            dimension_semantics=("parallel",)),   # shard image-pairs over TCs (v7x)
    )(x_pack, w_exp_p, s1_p, b1_p, w_dw_p, s2_p, b2_p,
      w_se1_p, bse1_p, w_se2_p, bse2_p, w_proj_p, s3_p, b3_p)

    # unpack: (G, HW, pack*Cout) -> (N, H, W, Cout) -> NCHW
    out = (out_packed.reshape(G, H, W, pack, Cout)
           .transpose(0, 3, 1, 2, 4)
           .reshape(N, H, W, Cout))
    return jnp.transpose(out, (0, 3, 1, 2))


# --------------------------------------------------------------------------
# Deterministic parameter construction (shapes follow the PyTorch __init__)
# --------------------------------------------------------------------------

def init_params(key, in_channels=32, out_channels=32, expand_ratio=2,
                se_ratio=0.5, kernel_size=(3, 5)):
    Cin, Cout = in_channels, out_channels
    Cexp = Cin * expand_ratio
    Csq = int(Cin * se_ratio)

    # _SplitChannels(Cexp, num_groups)
    ng = len(kernel_size)
    splits = [Cexp // ng] * ng
    splits[0] += Cexp - sum(splits)

    keys = iter(jax.random.split(key, 32))

    def nrm(shape, scale=0.1):
        return scale * jax.random.normal(next(keys), shape, jnp.float32)

    # pointwise expansion: Conv2d(Cin, Cexp, 1, bias=False) weight (Cexp,Cin,1,1)
    w_exp = nrm((Cexp, Cin)).T                                # -> (Cin, Cexp)

    # MDConv: per-group depthwise Conv2d(c, c, k, groups=c, bias=False), (c,1,k,k)
    taps = []
    for ks, c in zip(kernel_size, splits):
        w = nrm((c, 1, ks, ks))
        w = jnp.transpose(w.reshape(c, ks, ks), (1, 2, 0))    # (ks, ks, c)
        pad = (DW_K - ks) // 2
        taps.append(jnp.pad(w, ((pad, pad), (pad, pad), (0, 0))))  # zero-pad to 5x5
    w_dw = jnp.concatenate(taps, axis=-1).reshape(DW_K * DW_K, Cexp)

    # SqueezeAndExcite: Conv2d(Cexp, Csq, 1, bias=True), Conv2d(Csq, Cexp, 1, bias=True)
    w_se1 = nrm((Csq, Cexp)).T                                # (Cexp, Csq)
    b_se1 = nrm((1, Csq))
    w_se2 = nrm((Cexp, Csq)).T                                # (Csq, Cexp)
    b_se2 = nrm((1, Cexp))

    # pointwise projection: Conv2d(Cexp, Cout, 1, bias=False) weight (Cout,Cexp,1,1)
    w_proj = nrm((Cout, Cexp)).T                              # (Cexp, Cout)

    # BatchNorm2d parameters (inference mode), folded to scale/bias
    def bn(c):
        gamma = 1.0 + 0.1 * jax.random.normal(next(keys), (c,), jnp.float32)
        beta = 0.1 * jax.random.normal(next(keys), (c,), jnp.float32)
        mean = 0.05 * jax.random.normal(next(keys), (c,), jnp.float32)
        var = jax.random.uniform(next(keys), (c,), jnp.float32, minval=0.5, maxval=1.5)
        return _fold_bn(gamma, beta, mean, var)

    s1, b1 = bn(Cexp)   # after expansion
    s2, b2 = bn(Cexp)   # after MDConv
    s3, b3 = bn(Cout)   # after projection

    return dict(w_exp=w_exp, s1=s1, b1=b1,
                w_dw=w_dw, s2=s2, b2=b2,
                w_se1=w_se1, b_se1=b_se1, w_se2=w_se2, b_se2=b_se2,
                w_proj=w_proj, s3=s3, b3=b3)


# --------------------------------------------------------------------------
# Pure-JAX reference (same math, unpacked) for a correctness check
# --------------------------------------------------------------------------

def reference_forward(x_nchw, p):
    N, Cin, H, W = x_nchw.shape
    Cexp = p["w_exp"].shape[1]
    x = jnp.transpose(x_nchw, (0, 2, 3, 1))
    xf = x.reshape(-1, Cin)
    t = jnp.maximum(xf @ p["w_exp"] * p["s1"] + p["b1"], 0.0).reshape(N, H, W, Cexp)
    tp = jnp.pad(t, ((0, 0), (DW_PAD, DW_PAD), (DW_PAD, DW_PAD), (0, 0)))
    wdw = p["w_dw"].reshape(DW_K, DW_K, Cexp)
    acc = jnp.zeros_like(t)
    for kh in range(DW_K):
        for kw in range(DW_K):
            acc = acc + tp[:, kh:kh + H, kw:kw + W, :] * wdw[kh, kw]
    t2 = jnp.maximum(acc * p["s2"] + p["b2"], 0.0)
    y = jnp.mean(t2, axis=(1, 2))
    h = jnp.maximum(y @ p["w_se1"] + p["b_se1"], 0.0)
    g = jax.nn.sigmoid(h @ p["w_se2"] + p["b_se2"])
    t3 = (t2 * g[:, None, None, :]).reshape(-1, Cexp)
    out = t3 @ p["w_proj"] * p["s3"] + p["b3"] + xf
    return jnp.transpose(out.reshape(N, H, W, -1), (0, 3, 1, 2))


if __name__ == "__main__":
    key = jax.random.PRNGKey(0)
    kx, kp = jax.random.split(key)

    N, Cin, H, W = 4, 32, 16, 16
    x = jax.random.normal(kx, (N, Cin, H, W), jnp.float32)
    params = init_params(kp, in_channels=Cin, out_channels=Cin,
                         expand_ratio=2, se_ratio=0.5, kernel_size=(3, 5))

    out = mixnet_block_forward(x, params)
    out = jax.block_until_ready(out)
    assert out.shape == (N, Cin, H, W) and out.dtype == jnp.float32

    ref = reference_forward(x, params)
    err = float(jnp.max(jnp.abs(out - ref)))
    if err > 1e-3:
        raise AssertionError(f"kernel / reference mismatch: max abs err = {err}")

    print("KERNEL_OK")
</pallas_src>

<mosaic_0001>
module attributes {stable_mosaic.version = 11 : i64} {
  func.func @mixnet_fused_kernel(%arg0: i32, %arg1: memref<1x256x64xf32, #tpu.memory_space<vmem>>, %arg2: memref<64x128xf32, #tpu.memory_space<vmem>>, %arg3: memref<1x128xf32, #tpu.memory_space<vmem>>, %arg4: memref<1x128xf32, #tpu.memory_space<vmem>>, %arg5: memref<25x128xf32, #tpu.memory_space<vmem>>, %arg6: memref<1x128xf32, #tpu.memory_space<vmem>>, %arg7: memref<1x128xf32, #tpu.memory_space<vmem>>, %arg8: memref<128x32xf32, #tpu.memory_space<vmem>>, %arg9: memref<1x32xf32, #tpu.memory_space<vmem>>, %arg10: memref<32x128xf32, #tpu.memory_space<vmem>>, %arg11: memref<1x128xf32, #tpu.memory_space<vmem>>, %arg12: memref<128x64xf32, #tpu.memory_space<vmem>>, %arg13: memref<1x64xf32, #tpu.memory_space<vmem>>, %arg14: memref<1x64xf32, #tpu.memory_space<vmem>>, %arg15: memref<1x256x64xf32, #tpu.memory_space<vmem>>, %arg16: memref<20x20x128xf32, #tpu.memory_space<vmem>>) attributes {dimension_semantics = [#tpu.dimension_semantics<parallel>], iteration_bounds = array<i64: 2>, scalar_prefetch = 0 : i64, scratch_operands = 1 : i64, tpu.core_type = #tpu.core_type<tc>, window_params = [{transform_indices = @transform_0, window_bounds = array<i64: 1, 256, 64>}, {pipeline_mode = #tpu.pipeline_mode<synchronous>, transform_indices = @transform_1, window_bounds = array<i64: 64, 128>}, {pipeline_mode = #tpu.pipeline_mode<synchronous>, transform_indices = @transform_2, window_bounds = array<i64: 1, 128>}, {pipeline_mode = #tpu.pipeline_mode<synchronous>, transform_indices = @transform_3, window_bounds = array<i64: 1, 128>}, {pipeline_mode = #tpu.pipeline_mode<synchronous>, transform_indices = @transform_4, window_bounds = array<i64: 25, 128>}, {pipeline_mode = #tpu.pipeline_mode<synchronous>, transform_indices = @transform_5, window_bounds = array<i64: 1, 128>}, {pipeline_mode = #tpu.pipeline_mode<synchronous>, transform_indices = @transform_6, window_bounds = array<i64: 1, 128>}, {pipeline_mode = #tpu.pipeline_mode<synchronous>, transform_indices = @transform_7, window_bounds = array<i64: 128, 32>}, {pipeline_mode = #tpu.pipeline_mode<synchronous>, transform_indices = @transform_8, window_bounds = array<i64: 1, 32>}, {pipeline_mode = #tpu.pipeline_mode<synchronous>, transform_indices = @transform_9, window_bounds = array<i64: 32, 128>}, {pipeline_mode = #tpu.pipeline_mode<synchronous>, transform_indices = @transform_10, window_bounds = array<i64: 1, 128>}, {pipeline_mode = #tpu.pipeline_mode<synchronous>, transform_indices = @transform_11, window_bounds = array<i64: 128, 64>}, {pipeline_mode = #tpu.pipeline_mode<synchronous>, transform_indices = @transform_12, window_bounds = array<i64: 1, 64>}, {pipeline_mode = #tpu.pipeline_mode<synchronous>, transform_indices = @transform_13, window_bounds = array<i64: 1, 64>}, {transform_indices = @transform_14, window_bounds = array<i64: 1, 256, 64>}]} {
    %c0 = arith.constant 0 : index
    %c0_0 = arith.constant 0 : index
    %c0_1 = arith.constant 0 : index
    %0 = vector.load %arg1[%c0, %c0_0, %c0_1] : memref<1x256x64xf32, #tpu.memory_space<vmem>>, vector<1x256x64xf32>
    %1 = vector.shape_cast %0 : vector<1x256x64xf32> to vector<256x64xf32>
    %c0_2 = arith.constant 0 : index
    %c0_3 = arith.constant 0 : index
    %2 = vector.load %arg2[%c0_2, %c0_3] : memref<64x128xf32, #tpu.memory_space<vmem>>, vector<64x128xf32>
    %cst = arith.constant dense<0.000000e+00> : vector<256x128xf32>
    %3 = tpu.matmul %1, %2, %cst {dimension_numbers = #tpu.dot_dimension_numbers<[1], [0], [0], [1], [0, 0, 1, 1], [], []>} : vector<256x64xf32>, vector<64x128xf32>, vector<256x128xf32> -> vector<256x128xf32>
    %c0_4 = arith.constant 0 : index
    %c0_5 = arith.constant 0 : index
    %4 = vector.load %arg3[%c0_4, %c0_5] : memref<1x128xf32, #tpu.memory_space<vmem>>, vector<1x128xf32>
    %5 = vector.broadcast %4 : vector<1x128xf32> to vector<256x128xf32>
    %6 = arith.mulf %3, %5 : vector<256x128xf32>
    %c0_6 = arith.constant 0 : index
    %c0_7 = arith.constant 0 : index
    %7 = vector.load %arg4[%c0_6, %c0_7] : memref<1x128xf32, #tpu.memory_space<vmem>>, vector<1x128xf32>
    %8 = vector.broadcast %7 : vector<1x128xf32> to vector<256x128xf32>
    %9 = arith.addf %6, %8 : vector<256x128xf32>
    %cst_8 = arith.constant 0.000000e+00 : f32
    %10 = vector.broadcast %cst_8 : f32 to vector<256x128xf32>
    %11 = arith.maximumf %9, %10 : vector<256x128xf32>
    %cst_9 = arith.constant 0.000000e+00 : f32
    %12 = vector.broadcast %cst_9 : f32 to vector<2x20x128xf32>
    %c0_10 = arith.constant 0 : index
    %c0_11 = arith.constant 0 : index
    %c0_12 = arith.constant 0 : index
    %13 = vector.load %arg16[%c0_10, %c0_11, %c0_12] : memref<20x20x128xf32, #tpu.memory_space<vmem>>, vector<2x20x128xf32>
    tpu.vector_store %arg16[%c0_10, %c0_11, %c0_12], %12 {strides = array<i32>} : memref<20x20x128xf32, #tpu.memory_space<vmem>>, vector<2x20x128xf32>,
    %cst_13 = arith.constant 0.000000e+00 : f32
    %14 = vector.broadcast %cst_13 : f32 to vector<2x20x128xf32>
    %c18 = arith.constant 18 : index
    %c0_14 = arith.constant 0 : index
    %c0_15 = arith.constant 0 : index
    %15 = vector.load %arg16[%c18, %c0_14, %c0_15] : memref<20x20x128xf32, #tpu.memory_space<vmem>>, vector<2x20x128xf32>
    tpu.vector_store %arg16[%c18, %c0_14, %c0_15], %14 {strides = array<i32>} : memref<20x20x128xf32, #tpu.memory_space<vmem>>, vector<2x20x128xf32>,
    %cst_16 = arith.constant 0.000000e+00 : f32
    %16 = vector.broadcast %cst_16 : f32 to vector<16x2x128xf32>
    %c2 = arith.constant 2 : index
    %c0_17 = arith.constant 0 : index
    %c0_18 = arith.constant 0 : index
    %17 = vector.load %arg16[%c2, %c0_17, %c0_18] : memref<20x20x128xf32, #tpu.memory_space<vmem>>, vector<16x2x128xf32>
    tpu.vector_store %arg16[%c2, %c0_17, %c0_18], %16 {strides = array<i32>} : memref<20x20x128xf32, #tpu.memory_space<vmem>>, vector<16x2x128xf32>,
    %cst_19 = arith.constant 0.000000e+00 : f32
    %18 = vector.broadcast %cst_19 : f32 to vector<16x2x128xf32>
    %c2_20 = arith.constant 2 : index
    %c18_21 = arith.constant 18 : index
    %c0_22 = arith.constant 0 : index
    %19 = vector.load %arg16[%c2_20, %c18_21, %c0_22] : memref<20x20x128xf32, #tpu.memory_space<vmem>>, vector<16x2x128xf32>
    tpu.vector_store %arg16[%c2_20, %c18_21, %c0_22], %18 {strides = array<i32>} : memref<20x20x128xf32, #tpu.memory_space<vmem>>, vector<16x2x128xf32>,
    %20 = vector.shape_cast %11 : vector<256x128xf32> to vector<16x16x128xf32>
    %c2_23 = arith.constant 2 : index
    %c2_24 = arith.constant 2 : index
    %c0_25 = arith.constant 0 : index
    %21 = vector.load %arg16[%c2_23, %c2_24, %c0_25] : memref<20x20x128xf32, #tpu.memory_space<vmem>>, vector<16x16x128xf32>
    tpu.vector_store %arg16[%c2_23, %c2_24, %c0_25], %20 {strides = array<i32>} : memref<20x20x128xf32, #tpu.memory_space<vmem>>, vector<16x16x128xf32>,
    %cst_26 = arith.constant 0.000000e+00 : f32
    %22 = vector.broadcast %cst_26 : f32 to vector<16x16x128xf32>
    %c0_27 = arith.constant 0 : index
    %c0_28 = arith.constant 0 : index
    %23 = vector.load %arg5[%c0_27, %c0_28] : memref<25x128xf32, #tpu.memory_space<vmem>>, vector<1x128xf32>
    %24 = vector.shape_cast %23 : vector<1x128xf32> to vector<128xf32>
    %25 = vector.shape_cast %24 : vector<128xf32> to vector<1x1x128xf32>
    %c0_29 = arith.constant 0 : index
    %c0_30 = arith.constant 0 : index
    %c0_31 = arith.constant 0 : index
    %26 = vector.load %arg16[%c0_29, %c0_30, %c0_31] : memref<20x20x128xf32, #tpu.memory_space<vmem>>, vector<16x16x128xf32>
    %27 = vector.broadcast %25 : vector<1x1x128xf32> to vector<16x16x128xf32>
    %28 = arith.mulf %26, %27 : vector<16x16x128xf32>
    %29 = arith.addf %22, %28 : vector<16x16x128xf32>
    %c1 = arith.constant 1 : index
    %c0_32 = arith.constant 0 : index
    %30 = vector.load %arg5[%c1, %c0_32] : memref<25x128xf32, #tpu.memory_space<vmem>>, vector<1x128xf32>
    %31 = vector.shape_cast %30 : vector<1x128xf32> to vector<128xf32>
    %32 = vector.shape_cast %31 : vector<128xf32> to vector<1x1x128xf32>
    %c0_33 = arith.constant 0 : index
    %c1_34 = arith.constant 1 : index
    %c0_35 = arith.constant 0 : index
    %33 = vector.load %arg16[%c0_33, %c1_34, %c0_35] : memref<20x20x128xf32, #tpu.memory_space<vmem>>, vector<16x16x128xf32>
    %34 = vector.broadcast %32 : vector<1x1x128xf32> to vector<16x16x128xf32>
    %35 = arith.mulf %33, %34 : vector<16x16x128xf32>
    %36 = arith.addf %29, %35 : vector<16x16x128xf32>
    %c2_36 = arith.constant 2 : index
    %c0_37 = arith.constant 0 : index
    %37 = vector.load %arg5[%c2_36, %c0_37] : memref<25x128xf32, #tpu.memory_space<vmem>>, vector<1x128xf32>
    %38 = vector.shape_cast %37 : vector<1x128xf32> to vector<128xf32>
    %39 = vector.shape_cast %38 : vector<128xf32> to vector<1x1x128xf32>
    %c0_38 = arith.constant 0 : index
    %c2_39 = arith.constant 2 : index
    %c0_40 = arith.constant 0 : index
    %40 = vector.load %arg16[%c0_38, %c2_39, %c0_40] : memref<20x20x128xf32, #tpu.memory_space<vmem>>, vector<16x16x128xf32>
    %41 = vector.broadcast %39 : vector<1x1x128xf32> to vector<16x16x128xf32>
    %42 = arith.mulf %40, %41 : vector<16x16x128xf32>
    %43 = arith.addf %36, %42 : vector<16x16x128xf32>
    %c3 = arith.constant 3 : index
    %c0_41 = arith.constant 0 : index
    %44 = vector.load %arg5[%c3, %c0_41] : memref<25x128xf32, #tpu.memory_space<vmem>>, vector<1x128xf32>
    %45 = vector.shape_cast %44 : vector<1x128xf32> to vector<128xf32>
    %46 = vector.shape_cast %45 : vector<128xf32> to vector<1x1x128xf32>
    %c0_42 = arith.constant 0 : index
    %c3_43 = arith.constant 3 : index
    %c0_44 = arith.constant 0 : index
    %47 = vector.load %arg16[%c0_42, %c3_43, %c0_44] : memref<20x20x128xf32, #tpu.memory_space<vmem>>, vector<16x16x128xf32>
    %48 = vector.broadcast %46 : vector<1x1x128xf32> to vector<16x16x128xf32>
    %49 = arith.mulf %47, %48 : vector<16x16x128xf32>
    %50 = arith.addf %43, %49 : vector<16x16x128xf32>
    %c4 = arith.constant 4 : index
    %c0_45 = arith.constant 0 : index
    %51 = vector.load %arg5[%c4, %c0_45] : memref<25x128xf32, #tpu.memory_space<vmem>>, vector<1x128xf32>
    %52 = vector.shape_cast %51 : vector<1x128xf32> to vector<128xf32>
    %53 = vector.shape_cast %52 : vector<128xf32> to vector<1x1x128xf32>
    %c0_46 = arith.constant 0 : index
    %c4_47 = arith.constant 4 : index
    %c0_48 = arith.constant 0 : index
    %54 = vector.load %arg16[%c0_46, %c4_47, %c0_48] : memref<20x20x128xf32, #tpu.memory_space<vmem>>, vector<16x16x128xf32>
    %55 = vector.broadcast %53 : vector<1x1x128xf32> to vector<16x16x128xf32>
    %56 = arith.mulf %54, %55 : vector<16x16x128xf32>
    %57 = arith.addf %50, %56 : vector<16x16x128xf32>
    %c5 = arith.constant 5 : index
    %c0_49 = arith.constant 0 : index
    %58 = vector.load %arg5[%c5, %c0_49] : memref<25x128xf32, #tpu.memory_space<vmem>>, vector<1x128xf32>
    %59 = vector.shape_cast %58 : vector<1x128xf32> to vector<128xf32>
    %60 = vector.shape_cast %59 : vector<128xf32> to vector<1x1x128xf32>
    %c1_50 = arith.constant 1 : index
    %c0_51 = arith.constant 0 : index
    %c0_52 = arith.constant 0 : index
    %61 = vector.load %arg16[%c1_50, %c0_51, %c0_52] : memref<20x20x128xf32, #tpu.memory_space<vmem>>, vector<16x16x128xf32>
    %62 = vector.broadcast %60 : vector<1x1x128xf32> to vector<16x16x128xf32>
    %63 = arith.mulf %61, %62 : vector<16x16x128xf32>
    %64 = arith.addf %57, %63 : vector<16x16x128xf32>
    %c6 = arith.constant 6 : index
    %c0_53 = arith.constant 0 : index
    %65 = vector.load %arg5[%c6, %c0_53] : memref<25x128xf32, #tpu.memory_space<vmem>>, vector<1x128xf32>
    %66 = vector.shape_cast %65 : vector<1x128xf32> to vector<128xf32>
    %67 = vector.shape_cast %66 : vector<128xf32> to vector<1x1x128xf32>
    %c1_54 = arith.constant 1 : index
    %c1_55 = arith.constant 1 : index
    %c0_56 = arith.constant 0 : index
    %68 = vector.load %arg16[%c1_54, %c1_55, %c0_56] : memref<20x20x128xf32, #tpu.memory_space<vmem>>, vector<16x16x128xf32>
    %69 = vector.broadcast %67 : vector<1x1x128xf32> to vector<16x16x128xf32>
    %70 = arith.mulf %68, %69 : vector<16x16x128xf32>
    %71 = arith.addf %64, %70 : vector<16x16x128xf32>
    %c7 = arith.constant 7 : index
    %c0_57 = arith.constant 0 : index
    %72 = vector.load %arg5[%c7, %c0_57] : memref<25x128xf32, #tpu.memory_space<vmem>>, vector<1x128xf32>
    %73 = vector.shape_cast %72 : vector<1x128xf32> to vector<128xf32>
    %74 = vector.shape_cast %73 : vector<128xf32> to vector<1x1x128xf32>
    %c1_58 = arith.constant 1 : index
    %c2_59 = arith.constant 2 : index
    %c0_60 = arith.constant 0 : index
    %75 = vector.load %arg16[%c1_58, %c2_59, %c0_60] : memref<20x20x128xf32, #tpu.memory_space<vmem>>, vector<16x16x128xf32>
    %76 = vector.broadcast %74 : vector<1x1x128xf32> to vector<16x16x128xf32>
    %77 = arith.mulf %75, %76 : vector<16x16x128xf32>
    %78 = arith.addf %71, %77 : vector<16x16x128xf32>
    %c8 = arith.constant 8 : index
    %c0_61 = arith.constant 0 : index
    %79 = vector.load %arg5[%c8, %c0_61] : memref<25x128xf32, #tpu.memory_space<vmem>>, vector<1x128xf32>
    %80 = vector.shape_cast %79 : vector<1x128xf32> to vector<128xf32>
    %81 = vector.shape_cast %80 : vector<128xf32> to vector<1x1x128xf32>
    %c1_62 = arith.constant 1 : index
    %c3_63 = arith.constant 3 : index
    %c0_64 = arith.constant 0 : index
    %82 = vector.load %arg16[%c1_62, %c3_63, %c0_64] : memref<20x20x128xf32, #tpu.memory_space<vmem>>, vector<16x16x128xf32>
    %83 = vector.broadcast %81 : vector<1x1x128xf32> to vector<16x16x128xf32>
    %84 = arith.mulf %82, %83 : vector<16x16x128xf32>
    %85 = arith.addf %78, %84 : vector<16x16x128xf32>
    %c9 = arith.constant 9 : index
    %c0_65 = arith.constant 0 : index
    %86 = vector.load %arg5[%c9, %c0_65] : memref<25x128xf32, #tpu.memory_space<vmem>>, vector<1x128xf32>
    %87 = vector.shape_cast %86 : vector<1x128xf32> to vector<128xf32>
    %88 = vector.shape_cast %87 : vector<128xf32> to vector<1x1x128xf32>
    %c1_66 = arith.constant 1 : index
    %c4_67 = arith.constant 4 : index
    %c0_68 = arith.constant 0 : index
    %89 = vector.load %arg16[%c1_66, %c4_67, %c0_68] : memref<20x20x128xf32, #tpu.memory_space<vmem>>, vector<16x16x128xf32>
    %90 = vector.broadcast %88 : vector<1x1x128xf32> to vector<16x16x128xf32>
    %91 = arith.mulf %89, %90 : vector<16x16x128xf32>
    %92 = arith.addf %85, %91 : vector<16x16x128xf32>
    %c10 = arith.constant 10 : index
    %c0_69 = arith.constant 0 : index
    %93 = vector.load %arg5[%c10, %c0_69] : memref<25x128xf32, #tpu.memory_space<vmem>>, vector<1x128xf32>
    %94 = vector.shape_cast %93 : vector<1x128xf32> to vector<128xf32>
    %95 = vector.shape_cast %94 : vector<128xf32> to vector<1x1x128xf32>
    %c2_70 = arith.constant 2 : index
    %c0_71 = arith.constant 0 : index
    %c0_72 = arith.constant 0 : index
    %96 = vector.load %arg16[%c2_70, %c0_71, %c0_72] : memref<20x20x128xf32, #tpu.memory_space<vmem>>, vector<16x16x128xf32>
    %97 = vector.broadcast %95 : vector<1x1x128xf32> to vector<16x16x128xf32>
    %98 = arith.mulf %96, %97 : vector<16x16x128xf32>
    %99 = arith.addf %92, %98 : vector<16x16x128xf32>
    %c11 = arith.constant 11 : index
    %c0_73 = arith.constant 0 : index
    %100 = vector.load %arg5[%c11, %c0_73] : memref<25x128xf32, #tpu.memory_space<vmem>>, vector<1x128xf32>
    %101 = vector.shape_cast %100 : vector<1x128xf32> to vector<128xf32>
    %102 = vector.shape_cast %101 : vector<128xf32> to vector<1x1x128xf32>
    %c2_74 = arith.constant 2 : index
    %c1_75 = arith.constant 1 : index
    %c0_76 = arith.constant 0 : index
    %103 = vector.load %arg16[%c2_74, %c1_75, %c0_76] : memref<20x20x128xf32, #tpu.memory_space<vmem>>, vector<16x16x128xf32>
    %104 = vector.broadcast %102 : vector<1x1x128xf32> to vector<16x16x128xf32>
    %105 = arith.mulf %103, %104 : vector<16x16x128xf32>
    %106 = arith.addf %99, %105 : vector<16x16x128xf32>
    %c12 = arith.constant 12 : index
    %c0_77 = arith.constant 0 : index
    %107 = vector.load %arg5[%c12, %c0_77] : memref<25x128xf32, #tpu.memory_space<vmem>>, vector<1x128xf32>
    %108 = vector.shape_cast %107 : vector<1x128xf32> to vector<128xf32>
    %109 = vector.shape_cast %108 : vector<128xf32> to vector<1x1x128xf32>
    %c2_78 = arith.constant 2 : index
    %c2_79 = arith.constant 2 : index
    %c0_80 = arith.constant 0 : index
    %110 = vector.load %arg16[%c2_78, %c2_79, %c0_80] : memref<20x20x128xf32, #tpu.memory_space<vmem>>, vector<16x16x128xf32>
    %111 = vector.broadcast %109 : vector<1x1x128xf32> to vector<16x16x128xf32>
    %112 = arith.mulf %110, %111 : vector<16x16x128xf32>
    %113 = arith.addf %106, %112 : vector<16x16x128xf32>
    %c13 = arith.constant 13 : index
    %c0_81 = arith.constant 0 : index
    %114 = vector.load %arg5[%c13, %c0_81] : memref<25x128xf32, #tpu.memory_space<vmem>>, vector<1x128xf32>
    %115 = vector.shape_cast %114 : vector<1x128xf32> to vector<128xf32>
    %116 = vector.shape_cast %115 : vector<128xf32> to vector<1x1x128xf32>
    %c2_82 = arith.constant 2 : index
    %c3_83 = arith.constant 3 : index
    %c0_84 = arith.constant 0 : index
    %117 = vector.load %arg16[%c2_82, %c3_83, %c0_84] : memref<20x20x128xf32, #tpu.memory_space<vmem>>, vector<16x16x128xf32>
    %118 = vector.broadcast %116 : vector<1x1x128xf32> to vector<16x16x128xf32>
    %119 = arith.mulf %117, %118 : vector<16x16x128xf32>
    %120 = arith.addf %113, %119 : vector<16x16x128xf32>
    %c14 = arith.constant 14 : index
    %c0_85 = arith.constant 0 : index
    %121 = vector.load %arg5[%c14, %c0_85] : memref<25x128xf32, #tpu.memory_space<vmem>>, vector<1x128xf32>
    %122 = vector.shape_cast %121 : vector<1x128xf32> to vector<128xf32>
    %123 = vector.shape_cast %122 : vector<128xf32> to vector<1x1x128xf32>
    %c2_86 = arith.constant 2 : index
    %c4_87 = arith.constant 4 : index
    %c0_88 = arith.constant 0 : index
    %124 = vector.load %arg16[%c2_86, %c4_87, %c0_88] : memref<20x20x128xf32, #tpu.memory_space<vmem>>, vector<16x16x128xf32>
    %125 = vector.broadcast %123 : vector<1x1x128xf32> to vector<16x16x128xf32>
    %126 = arith.mulf %124, %125 : vector<16x16x128xf32>
    %127 = arith.addf %120, %126 : vector<16x16x128xf32>
    %c15 = arith.constant 15 : index
    %c0_89 = arith.constant 0 : index
    %128 = vector.load %arg5[%c15, %c0_89] : memref<25x128xf32, #tpu.memory_space<vmem>>, vector<1x128xf32>
    %129 = vector.shape_cast %128 : vector<1x128xf32> to vector<128xf32>
    %130 = vector.shape_cast %129 : vector<128xf32> to vector<1x1x128xf32>
    %c3_90 = arith.constant 3 : index
    %c0_91 = arith.constant 0 : index
    %c0_92 = arith.constant 0 : index
    %131 = vector.load %arg16[%c3_90, %c0_91, %c0_92] : memref<20x20x128xf32, #tpu.memory_space<vmem>>, vector<16x16x128xf32>
    %132 = vector.broadcast %130 : vector<1x1x128xf32> to vector<16x16x128xf32>
    %133 = arith.mulf %131, %132 : vector<16x16x128xf32>
    %134 = arith.addf %127, %133 : vector<16x16x128xf32>
    %c16 = arith.constant 16 : index
    %c0_93 = arith.constant 0 : index
    %135 = vector.load %arg5[%c16, %c0_93] : memref<25x128xf32, #tpu.memory_space<vmem>>, vector<1x128xf32>
    %136 = vector.shape_cast %135 : vector<1x128xf32> to vector<128xf32>
    %137 = vector.shape_cast %136 : vector<128xf32> to vector<1x1x128xf32>
    %c3_94 = arith.constant 3 : index
    %c1_95 = arith.constant 1 : index
    %c0_96 = arith.constant 0 : index
    %138 = vector.load %arg16[%c3_94, %c1_95, %c0_96] : memref<20x20x128xf32, #tpu.memory_space<vmem>>, vector<16x16x128xf32>
    %139 = vector.broadcast %137 : vector<1x1x128xf32> to vector<16x16x128xf32>
    %140 = arith.mulf %138, %139 : vector<16x16x128xf32>
    %141 = arith.addf %134, %140 : vector<16x16x128xf32>
    %c17 = arith.constant 17 : index
    %c0_97 = arith.constant 0 : index
    %142 = vector.load %arg5[%c17, %c0_97] : memref<25x128xf32, #tpu.memory_space<vmem>>, vector<1x128xf32>
    %143 = vector.shape_cast %142 : vector<1x128xf32> to vector<128xf32>
    %144 = vector.shape_cast %143 : vector<128xf32> to vector<1x1x128xf32>
    %c3_98 = arith.constant 3 : index
    %c2_99 = arith.constant 2 : index
    %c0_100 = arith.constant 0 : index
    %145 = vector.load %arg16[%c3_98, %c2_99, %c0_100] : memref<20x20x128xf32, #tpu.memory_space<vmem>>, vector<16x16x128xf32>
    %146 = vector.broadcast %144 : vector<1x1x128xf32> to vector<16x16x128xf32>
    %147 = arith.mulf %145, %146 : vector<16x16x128xf32>
    %148 = arith.addf %141, %147 : vector<16x16x128xf32>
    %c18_101 = arith.constant 18 : index
    %c0_102 = arith.constant 0 : index
    %149 = vector.load %arg5[%c18_101, %c0_102] : memref<25x128xf32, #tpu.memory_space<vmem>>, vector<1x128xf32>
    %150 = vector.shape_cast %149 : vector<1x128xf32> to vector<128xf32>
    %151 = vector.shape_cast %150 : vector<128xf32> to vector<1x1x128xf32>
    %c3_103 = arith.constant 3 : index
    %c3_104 = arith.constant 3 : index
    %c0_105 = arith.constant 0 : index
    %152 = vector.load %arg16[%c3_103, %c3_104, %c0_105] : memref<20x20x128xf32, #tpu.memory_space<vmem>>, vector<16x16x128xf32>
    %153 = vector.broadcast %151 : vector<1x1x128xf32> to vector<16x16x128xf32>
    %154 = arith.mulf %152, %153 : vector<16x16x128xf32>
    %155 = arith.addf %148, %154 : vector<16x16x128xf32>
    %c19 = arith.constant 19 : index
    %c0_106 = arith.constant 0 : index
    %156 = vector.load %arg5[%c19, %c0_106] : memref<25x128xf32, #tpu.memory_space<vmem>>, vector<1x128xf32>
    %157 = vector.shape_cast %156 : vector<1x128xf32> to vector<128xf32>
    %158 = vector.shape_cast %157 : vector<128xf32> to vector<1x1x128xf32>
    %c3_107 = arith.constant 3 : index
    %c4_108 = arith.constant 4 : index
    %c0_109 = arith.constant 0 : index
    %159 = vector.load %arg16[%c3_107, %c4_108, %c0_109] : memref<20x20x128xf32, #tpu.memory_space<vmem>>, vector<16x16x128xf32>
    %160 = vector.broadcast %158 : vector<1x1x128xf32> to vector<16x16x128xf32>
    %161 = arith.mulf %159, %160 : vector<16x16x128xf32>
    %162 = arith.addf %155, %161 : vector<16x16x128xf32>
    %c20 = arith.constant 20 : index
    %c0_110 = arith.constant 0 : index
    %163 = vector.load %arg5[%c20, %c0_110] : memref<25x128xf32, #tpu.memory_space<vmem>>, vector<1x128xf32>
    %164 = vector.shape_cast %163 : vector<1x128xf32> to vector<128xf32>
    %165 = vector.shape_cast %164 : vector<128xf32> to vector<1x1x128xf32>
    %c4_111 = arith.constant 4 : index
    %c0_112 = arith.constant 0 : index
    %c0_113 = arith.constant 0 : index
    %166 = vector.load %arg16[%c4_111, %c0_112, %c0_113] : memref<20x20x128xf32, #tpu.memory_space<vmem>>, vector<16x16x128xf32>
    %167 = vector.broadcast %165 : vector<1x1x128xf32> to vector<16x16x128xf32>
    %168 = arith.mulf %166, %167 : vector<16x16x128xf32>
    %169 = arith.addf %162, %168 : vector<16x16x128xf32>
    %c21 = arith.constant 21 : index
    %c0_114 = arith.constant 0 : index
    %170 = vector.load %arg5[%c21, %c0_114] : memref<25x128xf32, #tpu.memory_space<vmem>>, vector<1x128xf32>
    %171 = vector.shape_cast %170 : vector<1x128xf32> to vector<128xf32>
    %172 = vector.shape_cast %171 : vector<128xf32> to vector<1x1x128xf32>
    %c4_115 = arith.constant 4 : index
    %c1_116 = arith.constant 1 : index
    %c0_117 = arith.constant 0 : index
    %173 = vector.load %arg16[%c4_115, %c1_116, %c0_117] : memref<20x20x128xf32, #tpu.memory_space<vmem>>, vector<16x16x128xf32>
    %174 = vector.broadcast %172 : vector<1x1x128xf32> to vector<16x16x128xf32>
    %175 = arith.mulf %173, %174 : vector<16x16x128xf32>
    %176 = arith.addf %169, %175 : vector<16x16x128xf32>
    %c22 = arith.constant 22 : index
    %c0_118 = arith.constant 0 : index
    %177 = vector.load %arg5[%c22, %c0_118] : memref<25x128xf32, #tpu.memory_space<vmem>>, vector<1x128xf32>
    %178 = vector.shape_cast %177 : vector<1x128xf32> to vector<128xf32>
    %179 = vector.shape_cast %178 : vector<128xf32> to vector<1x1x128xf32>
    %c4_119 = arith.constant 4 : index
    %c2_120 = arith.constant 2 : index
    %c0_121 = arith.constant 0 : index
    %180 = vector.load %arg16[%c4_119, %c2_120, %c0_121] : memref<20x20x128xf32, #tpu.memory_space<vmem>>, vector<16x16x128xf32>
    %181 = vector.broadcast %179 : vector<1x1x128xf32> to vector<16x16x128xf32>
    %182 = arith.mulf %180, %181 : vector<16x16x128xf32>
    %183 = arith.addf %176, %182 : vector<16x16x128xf32>
    %c23 = arith.constant 23 : index
    %c0_122 = arith.constant 0 : index
    %184 = vector.load %arg5[%c23, %c0_122] : memref<25x128xf32, #tpu.memory_space<vmem>>, vector<1x128xf32>
    %185 = vector.shape_cast %184 : vector<1x128xf32> to vector<128xf32>
    %186 = vector.shape_cast %185 : vector<128xf32> to vector<1x1x128xf32>
    %c4_123 = arith.constant 4 : index
    %c3_124 = arith.constant 3 : index
    %c0_125 = arith.constant 0 : index
    %187 = vector.load %arg16[%c4_123, %c3_124, %c0_125] : memref<20x20x128xf32, #tpu.memory_space<vmem>>, vector<16x16x128xf32>
    %188 = vector.broadcast %186 : vector<1x1x128xf32> to vector<16x16x128xf32>
    %189 = arith.mulf %187, %188 : vector<16x16x128xf32>
    %190 = arith.addf %183, %189 : vector<16x16x128xf32>
    %c24 = arith.constant 24 : index
    %c0_126 = arith.constant 0 : index
    %191 = vector.load %arg5[%c24, %c0_126] : memref<25x128xf32, #tpu.memory_space<vmem>>, vector<1x128xf32>
    %192 = vector.shape_cast %191 : vector<1x128xf32> to vector<128xf32>
    %193 = vector.shape_cast %192 : vector<128xf32> to vector<1x1x128xf32>
    %c4_127 = arith.constant 4 : index
    %c4_128 = arith.constant 4 : index
    %c0_129 = arith.constant 0 : index
    %194 = vector.load %arg16[%c4_127, %c4_128, %c0_129] : memref<20x20x128xf32, #tpu.memory_space<vmem>>, vector<16x16x128xf32>
    %195 = vector.broadcast %193 : vector<1x1x128xf32> to vector<16x16x128xf32>
    %196 = arith.mulf %194, %195 : vector<16x16x128xf32>
    %197 = arith.addf %190, %196 : vector<16x16x128xf32>
    %c0_130 = arith.constant 0 : index
    %c0_131 = arith.constant 0 : index
    %198 = vector.load %arg6[%c0_130, %c0_131] : memref<1x128xf32, #tpu.memory_space<vmem>>, vector<1x128xf32>
    %199 = vector.shape_cast %198 : vector<1x128xf32> to vector<1x1x128xf32>
    %200 = vector.broadcast %199 : vector<1x1x128xf32> to vector<16x16x128xf32>
    %201 = arith.mulf %197, %200 : vector<16x16x128xf32>
    %c0_132 = arith.constant 0 : index
    %c0_133 = arith.constant 0 : index
    %202 = vector.load %arg7[%c0_132, %c0_133] : memref<1x128xf32, #tpu.memory_space<vmem>>, vector<1x128xf32>
    %203 = vector.shape_cast %202 : vector<1x128xf32> to vector<1x1x128xf32>
    %204 = vector.broadcast %203 : vector<1x1x128xf32> to vector<16x16x128xf32>
    %205 = arith.addf %201, %204 : vector<16x16x128xf32>
    %cst_134 = arith.constant 0.000000e+00 : f32
    %206 = vector.broadcast %cst_134 : f32 to vector<16x16x128xf32>
    %207 = arith.maximumf %205, %206 : vector<16x16x128xf32>
    %208 = vector.shape_cast %207 : vector<16x16x128xf32> to vector<256x128xf32>
    %cst_135 = arith.constant dense<0.000000e+00> : vector<128xf32>
    %209 = vector.multi_reduction <add>, %208, %cst_135 [0] : vector<256x128xf32> to vector<128xf32>
    %210 = vector.shape_cast %209 : vector<128xf32> to vector<1x128xf32>
    %cst_136 = arith.constant 3.906250e-03 : f32
    %211 = vector.broadcast %cst_136 : f32 to vector<1x128xf32>
    %212 = arith.mulf %210, %211 : vector<1x128xf32>
    %c0_137 = arith.constant 0 : index
    %c0_138 = arith.constant 0 : index
    %213 = vector.load %arg8[%c0_137, %c0_138] : memref<128x32xf32, #tpu.memory_space<vmem>>, vector<128x32xf32>
    %cst_139 = arith.constant dense<0.000000e+00> : vector<1x32xf32>
    %214 = tpu.matmul %212, %213, %cst_139 {dimension_numbers = #tpu.dot_dimension_numbers<[1], [0], [0], [1], [0, 0, 1, 1], [], []>} : vector<1x128xf32>, vector<128x32xf32>, vector<1x32xf32> -> vector<1x32xf32>
    %c0_140 = arith.constant 0 : index
    %c0_141 = arith.constant 0 : index
    %215 = vector.load %arg9[%c0_140, %c0_141] : memref<1x32xf32, #tpu.memory_space<vmem>>, vector<1x32xf32>
    %216 = arith.addf %214, %215 : vector<1x32xf32>
    %cst_142 = arith.constant 0.000000e+00 : f32
    %217 = vector.broadcast %cst_142 : f32 to vector<1x32xf32>
    %218 = arith.maximumf %216, %217 : vector<1x32xf32>
    %c0_143 = arith.constant 0 : index
    %c0_144 = arith.constant 0 : index
    %219 = vector.load %arg10[%c0_143, %c0_144] : memref<32x128xf32, #tpu.memory_space<vmem>>, vector<32x128xf32>
    %cst_145 = arith.constant dense<0.000000e+00> : vector<1x128xf32>
    %220 = tpu.matmul %218, %219, %cst_145 {dimension_numbers = #tpu.dot_dimension_numbers<[1], [0], [0], [1], [0, 0, 1, 1], [], []>} : vector<1x32xf32>, vector<32x128xf32>, vector<1x128xf32> -> vector<1x128xf32>
    %c0_146 = arith.constant 0 : index
    %c0_147 = arith.constant 0 : index
    %221 = vector.load %arg11[%c0_146, %c0_147] : memref<1x128xf32, #tpu.memory_space<vmem>>, vector<1x128xf32>
    %222 = arith.addf %220, %221 : vector<1x128xf32>
    %cst_148 = arith.constant -3.000000e+01 : f32
    %cst_149 = arith.constant 3.000000e+01 : f32
    %223 = vector.broadcast %cst_148 : f32 to vector<1x128xf32>
    %224 = arith.maximumf %223, %222 : vector<1x128xf32>
    %225 = vector.broadcast %cst_149 : f32 to vector<1x128xf32>
    %226 = arith.minimumf %225, %224 : vector<1x128xf32>
    %cst_150 = arith.constant 0.000000e+00 : f32
    %227 = vector.broadcast %cst_150 : f32 to vector<1x128xf32>
    %228 = arith.subf %227, %226 : vector<1x128xf32>
    %229 = math.exp %228 : vector<1x128xf32>
    %cst_151 = arith.constant 1.000000e+00 : f32
    %230 = vector.broadcast %cst_151 : f32 to vector<1x128xf32>
    %231 = arith.addf %230, %229 : vector<1x128xf32>
    %cst_152 = arith.constant 1.000000e+00 : f32
    %232 = vector.broadcast %cst_152 : f32 to vector<1x128xf32>
    %233 = arith.divf %232, %231 : vector<1x128xf32>
    %234 = vector.broadcast %233 : vector<1x128xf32> to vector<256x128xf32>
    %235 = arith.mulf %208, %234 : vector<256x128xf32>
    %c0_153 = arith.constant 0 : index
    %c0_154 = arith.constant 0 : index
    %236 = vector.load %arg12[%c0_153, %c0_154] : memref<128x64xf32, #tpu.memory_space<vmem>>, vector<128x64xf32>
    %cst_155 = arith.constant dense<0.000000e+00> : vector<256x64xf32>
    %237 = tpu.matmul %235, %236, %cst_155 {dimension_numbers = #tpu.dot_dimension_numbers<[1], [0], [0], [1], [0, 0, 1, 1], [], []>} : vector<256x128xf32>, vector<128x64xf32>, vector<256x64xf32> -> vector<256x64xf32>
    %c0_156 = arith.constant 0 : index
    %c0_157 = arith.constant 0 : index
    %238 = vector.load %arg13[%c0_156, %c0_157] : memref<1x64xf32, #tpu.memory_space<vmem>>, vector<1x64xf32>
    %239 = vector.broadcast %238 : vector<1x64xf32> to vector<256x64xf32>
    %240 = arith.mulf %237, %239 : vector<256x64xf32>
    %c0_158 = arith.constant 0 : index
    %c0_159 = arith.constant 0 : index
    %241 = vector.load %arg14[%c0_158, %c0_159] : memref<1x64xf32, #tpu.memory_space<vmem>>, vector<1x64xf32>
    %242 = vector.broadcast %241 : vector<1x64xf32> to vector<256x64xf32>
    %243 = arith.addf %240, %242 : vector<256x64xf32>
    %244 = arith.addf %243, %1 : vector<256x64xf32>
    %c0_160 = arith.constant 0 : index
    %c0_161 = arith.constant 0 : index
    %c0_162 = arith.constant 0 : index
    %245 = vector.load %arg15[%c0_160, %c0_161, %c0_162] : memref<1x256x64xf32, #tpu.memory_space<vmem>>, vector<1x256x64xf32>
    %246 = vector.shape_cast %245 : vector<1x256x64xf32> to vector<256x64xf32>
    %247 = vector.shape_cast %244 : vector<256x64xf32> to vector<1x256x64xf32>
    tpu.vector_store %arg15[%c0_160, %c0_161, %c0_162], %247 {strides = array<i32>} : memref<1x256x64xf32, #tpu.memory_space<vmem>>, vector<1x256x64xf32>,
    return
  }
  func.func @transform_0(%arg0: i32) -> (i32, i32, i32) {
    %c0_i32 = arith.constant 0 : i32
    %c0_i32_0 = arith.constant 0 : i32
    %c0_i32_1 = arith.constant 0 : i32
    return %arg0, %c0_i32, %c0_i32_0 : i32, i32, i32
  }
  func.func @transform_1(%arg0: i32) -> (i32, i32) {
    %c0_i32 = arith.constant 0 : i32
    %c0_i32_0 = arith.constant 0 : i32
    %c0_i32_1 = arith.constant 0 : i32
    return %c0_i32, %c0_i32_0 : i32, i32
  }
  func.func @transform_2(%arg0: i32) -> (i32, i32) {
    %c0_i32 = arith.constant 0 : i32
    %c0_i32_0 = arith.constant 0 : i32
    %c0_i32_1 = arith.constant 0 : i32
    return %c0_i32, %c0_i32_0 : i32, i32
  }
  func.func @transform_3(%arg0: i32) -> (i32, i32) {
    %c0_i32 = arith.constant 0 : i32
    %c0_i32_0 = arith.constant 0 : i32
    %c0_i32_1 = arith.constant 0 : i32
    return %c0_i32, %c0_i32_0 : i32, i32
  }
  func.func @transform_4(%arg0: i32) -> (i32, i32) {
    %c0_i32 = arith.constant 0 : i32
    %c0_i32_0 = arith.constant 0 : i32
    %c0_i32_1 = arith.constant 0 : i32
    return %c0_i32, %c0_i32_0 : i32, i32
  }
  func.func @transform_5(%arg0: i32) -> (i32, i32) {
    %c0_i32 = arith.constant 0 : i32
    %c0_i32_0 = arith.constant 0 : i32
    %c0_i32_1 = arith.constant 0 : i32
    return %c0_i32, %c0_i32_0 : i32, i32
  }
  func.func @transform_6(%arg0: i32) -> (i32, i32) {
    %c0_i32 = arith.constant 0 : i32
    %c0_i32_0 = arith.constant 0 : i32
    %c0_i32_1 = arith.constant 0 : i32
    return %c0_i32, %c0_i32_0 : i32, i32
  }
  func.func @transform_7(%arg0: i32) -> (i32, i32) {
    %c0_i32 = arith.constant 0 : i32
    %c0_i32_0 = arith.constant 0 : i32
    %c0_i32_1 = arith.constant 0 : i32
    return %c0_i32, %c0_i32_0 : i32, i32
  }
  func.func @transform_8(%arg0: i32) -> (i32, i32) {
    %c0_i32 = arith.constant 0 : i32
    %c0_i32_0 = arith.constant 0 : i32
    %c0_i32_1 = arith.constant 0 : i32
    return %c0_i32, %c0_i32_0 : i32, i32
  }
  func.func @transform_9(%arg0: i32) -> (i32, i32) {
    %c0_i32 = arith.constant 0 : i32
    %c0_i32_0 = arith.constant 0 : i32
    %c0_i32_1 = arith.constant 0 : i32
    return %c0_i32, %c0_i32_0 : i32, i32
  }
  func.func @transform_10(%arg0: i32) -> (i32, i32) {
    %c0_i32 = arith.constant 0 : i32
    %c0_i32_0 = arith.constant 0 : i32
    %c0_i32_1 = arith.constant 0 : i32
    return %c0_i32, %c0_i32_0 : i32, i32
  }
  func.func @transform_11(%arg0: i32) -> (i32, i32) {
    %c0_i32 = arith.constant 0 : i32
    %c0_i32_0 = arith.constant 0 : i32
    %c0_i32_1 = arith.constant 0 : i32
    return %c0_i32, %c0_i32_0 : i32, i32
  }
  func.func @transform_12(%arg0: i32) -> (i32, i32) {
    %c0_i32 = arith.constant 0 : i32
    %c0_i32_0 = arith.constant 0 : i32
    %c0_i32_1 = arith.constant 0 : i32
    return %c0_i32, %c0_i32_0 : i32, i32
  }
  func.func @transform_13(%arg0: i32) -> (i32, i32) {
    %c0_i32 = arith.constant 0 : i32
    %c0_i32_0 = arith.constant 0 : i32
    %c0_i32_1 = arith.constant 0 : i32
    return %c0_i32, %c0_i32_0 : i32, i32
  }
  func.func @transform_14(%arg0: i32) -> (i32, i32, i32) {
    %c0_i32 = arith.constant 0 : i32
    %c0_i32_0 = arith.constant 0 : i32
    %c0_i32_1 = arith.constant 0 : i32
    return %arg0, %c0_i32, %c0_i32_0 : i32, i32, i32
  }
}

</mosaic_0001>

<llo_original>
// kernel: tpu_custom_call.1
$region0: #{tpu_custom_call.1}
  #allocation0 [shape = 'u32[]', space=smem, size = 0x4, offset = 0x4, fixed_abs, tag = 'smem constant byte address 0x4 - core index']
  #allocation1 [shape = 'u32[72,128]{1,0:T(1,128)}', space=vmem, size = 0x9000, scoped, tag = 'internal scratch']
  #allocation2 [shape = 'f32[20,20,128]{2,1,0:T(8,128)}', space=vmem, size = 0x3c000, scoped, tag = 'scratch operand']
  %s0 = inlined_call_operand.vmem [shape: f32[2,256,64], index: 0, kind: input, shape index: {}]
  %s1 = inlined_call_operand.vmem [shape: f32[64,128], index: 1, kind: input, shape index: {}]
  %s2 = inlined_call_operand.vmem [shape: f32[1,128], index: 2, kind: input, shape index: {}]
  %s3 = inlined_call_operand.vmem [shape: f32[1,128], index: 3, kind: input, shape index: {}]
  %s4 = inlined_call_operand.vmem [shape: f32[25,128], index: 4, kind: input, shape index: {}]
  %s5 = inlined_call_operand.vmem [shape: f32[1,128], index: 5, kind: input, shape index: {}]
  %s6 = inlined_call_operand.vmem [shape: f32[1,128], index: 6, kind: input, shape index: {}]
  %s7 = inlined_call_operand.vmem [shape: f32[128,32], index: 7, kind: input, shape index: {}]
  %s8 = inlined_call_operand.vmem [shape: f32[1,32], index: 8, kind: input, shape index: {}]
  %s9 = inlined_call_operand.vmem [shape: f32[32,128], index: 9, kind: input, shape index: {}]
  %s10 = inlined_call_operand.vmem [shape: f32[1,128], index: 10, kind: input, shape index: {}]
  %s11 = inlined_call_operand.vmem [shape: f32[128,64], index: 11, kind: input, shape index: {}]
  %s12 = inlined_call_operand.vmem [shape: f32[1,64], index: 12, kind: input, shape index: {}]
  %s13 = inlined_call_operand.vmem [shape: f32[1,64], index: 13, kind: input, shape index: {}]
  %s14 = inlined_call_operand.vmem [shape: f32[2,256,64], index: 14, kind: output, shape index: {}]
  %s15 = sld [smem:[#allocation0]]
  $region89: #{tpu_custom_call.1} parent=0
    _
  %s17 = ssub.s32 1, %s15
  %s18 = scalar_select 0, %s17, %s15
  loop: start=0, step=1, limit=4
  $region2: #{tpu_custom_call.1} parent=0 // loop_pre_header
    _
  $region3: #{tpu_custom_call.1} parent=0 // loop_header
    %s20 = sphi 0, %s24
    %p21 = scmp.ge.s32.totalorder %s20, 4
    %s30 = sphi 0, %s32
    %s33 = sphi 0, %s30
    %s34 = sphi 0, %s33
    %s50 = sphi 0, %s34
    %s54 = sphi 0, %s54
    %s56 = sphi 0, %s54
    %s57 = sphi 0, %s56
    %s71 = sphi 0, %s57
    %s75 = sphi 0, %s75
    %s77 = sphi 0, %s75
    %s78 = sphi 0, %s77
    %s92 = sphi 0, %s78
    %s96 = sphi 0, %s96
    %s98 = sphi 0, %s96
    %s99 = sphi 0, %s98
    %s113 = sphi 0, %s99
    %s117 = sphi 0, %s117
    %s119 = sphi 0, %s117
    %s120 = sphi 0, %s119
    %s134 = sphi 0, %s120
    %s138 = sphi 0, %s138
    %s140 = sphi 0, %s138
    %s141 = sphi 0, %s140
    %s155 = sphi 0, %s141
    %s159 = sphi 0, %s159
    %s161 = sphi 0, %s159
    %s162 = sphi 0, %s161
    %s176 = sphi 0, %s162
    %s180 = sphi 0, %s180
    %s182 = sphi 0, %s180
    %s183 = sphi 0, %s182
    %s197 = sphi 0, %s183
    %s201 = sphi 0, %s201
    %s203 = sphi 0, %s201
    %s204 = sphi 0, %s203
    %s218 = sphi 0, %s204
    %s222 = sphi 0, %s222
    %s224 = sphi 0, %s222
    %s225 = sphi 0, %s224
    %s239 = sphi 0, %s225
    %s243 = sphi 0, %s243
    %s245 = sphi 0, %s243
    %s246 = sphi 0, %s245
    %s260 = sphi 0, %s246
    %s264 = sphi 0, %s264
    %s266 = sphi 0, %s264
    %s267 = sphi 0, %s266
    %s281 = sphi 0, %s267
    %s285 = sphi 0, %s285
    %s287 = sphi 0, %s285
    %s288 = sphi 0, %s287
    %s302 = sphi 0, %s288
    %s306 = sphi 0, %s306
    %s308 = sphi 0, %s306
    %s309 = sphi 0, %s308
    %s323 = sphi 0, %s309
    %s329 = sphi 0, %s331
    %s332 = sphi 0, %s329
    %s333 = sphi 0, %s332
    %s349 = sphi 0, %s333
  $region4: #{tpu_custom_call.1} parent=0 // loop_header_branch
    %23 = sbr.rel (%p21) target = $region8
  $region5: #{tpu_custom_call.1} parent=0 // loop_body
    %s25 = ssub.s32 %s20, 1
    %s26 = ssub.s32 %s20, 2
    %s27 = sadd.s32 %s20, 1
    %s28 = ssub.s32 %s20, %s27
    %p29 = scmp.eq.s32.totalorder %s28, 0
    %s31 = sadd.s32 %s30, 1
    %s32 = scalar_select %p29, %s30, %s31
    %p35 = pneg %p29
    %p36 = scmp.eq.s32.totalorder %s20, 1
    %p37 = por %p35, %p36
    %p38 = scmp.ne.s32.totalorder %s30, %s33
    %p39 = scmp.eq.s32.totalorder %s20, 0
    %p40 = por %p38, %p39
    %p41 = scmp.ne.s32.totalorder %s30, %s33
    %p42 = scmp.eq.s32.totalorder %s25, 1
    %p43 = por %p41, %p42
    %p44 = scmp.ne.s32.totalorder %s33, %s34
    %p45 = scmp.eq.s32.totalorder %s25, 0
    %p46 = por %p44, %p45
    %p47 = scmp.ne.s32.totalorder %s33, %s34
    %p48 = scmp.eq.s32.totalorder %s26, 1
    %p49 = por %p47, %p48
    %p51 = scmp.ne.s32.totalorder %s34, %s50
    %p52 = scmp.eq.s32.totalorder %s26, 0
    %p53 = por %p51, %p52
    %s55 = sadd.s32 %s54, 1
    %p58 = scmp.eq.s32.totalorder %s20, 1
    %p59 = scmp.ne.s32.totalorder %s54, %s56
    %p60 = scmp.eq.s32.totalorder %s20, 0
    %p61 = por %p59, %p60
    %p62 = scmp.ne.s32.totalorder %s54, %s56
    %p63 = scmp.eq.s32.totalorder %s25, 1
    %p64 = por %p62, %p63
    %p65 = scmp.ne.s32.totalorder %s56, %s57
    %p66 = scmp.eq.s32.totalorder %s25, 0
    %p67 = por %p65, %p66
    %p68 = scmp.ne.s32.totalorder %s56, %s57
    %p69 = scmp.eq.s32.totalorder %s26, 1
    %p70 = por %p68, %p69
    %p72 = scmp.ne.s32.totalorder %s57, %s71
    %p73 = scmp.eq.s32.totalorder %s26, 0
    %p74 = por %p72, %p73
    %s76 = sadd.s32 %s75, 1
    %p79 = scmp.eq.s32.totalorder %s20, 1
    %p80 = scmp.ne.s32.totalorder %s75, %s77
    %p81 = scmp.eq.s32.totalorder %s20, 0
    %p82 = por %p80, %p81
    %p83 = scmp.ne.s32.totalorder %s75, %s77
    %p84 = scmp.eq.s32.totalorder %s25, 1
    %p85 = por %p83, %p84
    %p86 = scmp.ne.s32.totalorder %s77, %s78
    %p87 = scmp.eq.s32.totalorder %s25, 0
    %p88 = por %p86, %p87
    %p89 = scmp.ne.s32.totalorder %s77, %s78
    %p90 = scmp.eq.s32.totalorder %s26, 1
    %p91 = por %p89, %p90
    %p93 = scmp.ne.s32.totalorder %s78, %s92
    %p94 = scmp.eq.s32.totalorder %s26, 0
    %p95 = por %p93, %p94
    %s97 = sadd.s32 %s96, 1
    %p100 = scmp.eq.s32.totalorder %s20, 1
    %p101 = scmp.ne.s32.totalorder %s96, %s98
    %p102 = scmp.eq.s32.totalorder %s20, 0
    %p103 = por %p101, %p102
    %p104 = scmp.ne.s32.totalorder %s96, %s98
    %p105 = scmp.eq.s32.totalorder %s25, 1
    %p106 = por %p104, %p105
    %p107 = scmp.ne.s32.totalorder %s98, %s99
    %p108 = scmp.eq.s32.totalorder %s25, 0
    %p109 = por %p107, %p108
    %p110 = scmp.ne.s32.totalorder %s98, %s99
    %p111 = scmp.eq.s32.totalorder %s26, 1
    %p112 = por %p110, %p111
    %p114 = scmp.ne.s32.totalorder %s99, %s113
    %p115 = scmp.eq.s32.totalorder %s26, 0
    %p116 = por %p114, %p115
    %s118 = sadd.s32 %s117, 1
    %p121 = scmp.eq.s32.totalorder %s20, 1
    %p122 = scmp.ne.s32.totalorder %s117, %s119
    %p123 = scmp.eq.s32.totalorder %s20, 0
    %p124 = por %p122, %p123
    %p125 = scmp.ne.s32.totalorder %s117, %s119
    %p126 = scmp.eq.s32.totalorder %s25, 1
    %p127 = por %p125, %p126
    %p128 = scmp.ne.s32.totalorder %s119, %s120
    %p129 = scmp.eq.s32.totalorder %s25, 0
    %p130 = por %p128, %p129
    %p131 = scmp.ne.s32.totalorder %s119, %s120
    %p132 = scmp.eq.s32.totalorder %s26, 1
    %p133 = por %p131, %p132
    %p135 = scmp.ne.s32.totalorder %s120, %s134
    %p136 = scmp.eq.s32.totalorder %s26, 0
    %p137 = por %p135, %p136
    %s139 = sadd.s32 %s138, 1
    %p142 = scmp.eq.s32.totalorder %s20, 1
    %p143 = scmp.ne.s32.totalorder %s138, %s140
    %p144 = scmp.eq.s32.totalorder %s20, 0
    %p145 = por %p143, %p144
    %p146 = scmp.ne.s32.totalorder %s138, %s140
    %p147 = scmp.eq.s32.totalorder %s25, 1
    %p148 = por %p146, %p147
    %p149 = scmp.ne.s32.totalorder %s140, %s141
    %p150 = scmp.eq.s32.totalorder %s25, 0
    %p151 = por %p149, %p150
    %p152 = scmp.ne.s32.totalorder %s140, %s141
    %p153 = scmp.eq.s32.totalorder %s26, 1
    %p154 = por %p152, %p153
    %p156 = scmp.ne.s32.totalorder %s141, %s155
    %p157 = scmp.eq.s32.totalorder %s26, 0
    %p158 = por %p156, %p157
    %s160 = sadd.s32 %s159, 1
    %p163 = scmp.eq.s32.totalorder %s20, 1
    %p164 = scmp.ne.s32.totalorder %s159, %s161
    %p165 = scmp.eq.s32.totalorder %s20, 0
    %p166 = por %p164, %p165
    %p167 = scmp.ne.s32.totalorder %s159, %s161
    %p168 = scmp.eq.s32.totalorder %s25, 1
    %p169 = por %p167, %p168
    %p170 = scmp.ne.s32.totalorder %s161, %s162
    %p171 = scmp.eq.s32.totalorder %s25, 0
    %p172 = por %p170, %p171
    %p173 = scmp.ne.s32.totalorder %s161, %s162
    %p174 = scmp.eq.s32.totalorder %s26, 1
    %p175 = por %p173, %p174
    %p177 = scmp.ne.s32.totalorder %s162, %s176
    %p178 = scmp.eq.s32.totalorder %s26, 0
    %p179 = por %p177, %p178
    %s181 = sadd.s32 %s180, 1
    %p184 = scmp.eq.s32.totalorder %s20, 1
    %p185 = scmp.ne.s32.totalorder %s180, %s182
    %p186 = scmp.eq.s32.totalorder %s20, 0
    %p187 = por %p185, %p186
    %p188 = scmp.ne.s32.totalorder %s180, %s182
    %p189 = scmp.eq.s32.totalorder %s25, 1
    %p190 = por %p188, %p189
    %p191 = scmp.ne.s32.totalorder %s182, %s183
    %p192 = scmp.eq.s32.totalorder %s25, 0
    %p193 = por %p191, %p192
    %p194 = scmp.ne.s32.totalorder %s182, %s183
    %p195 = scmp.eq.s32.totalorder %s26, 1
    %p196 = por %p194, %p195
    %p198 = scmp.ne.s32.totalorder %s183, %s197
    %p199 = scmp.eq.s32.totalorder %s26, 0
    %p200 = por %p198, %p199
    %s202 = sadd.s32 %s201, 1
    %p205 = scmp.eq.s32.totalorder %s20, 1
    %p206 = scmp.ne.s32.totalorder %s201, %s203
    %p207 = scmp.eq.s32.totalorder %s20, 0
    %p208 = por %p206, %p207
    %p209 = scmp.ne.s32.totalorder %s201, %s203
    %p210 = scmp.eq.s32.totalorder %s25, 1
    %p211 = por %p209, %p210
    %p212 = scmp.ne.s32.totalorder %s203, %s204
    %p213 = scmp.eq.s32.totalorder %s25, 0
    %p214 = por %p212, %p213
    %p215 = scmp.ne.s32.totalorder %s203, %s204
    %p216 = scmp.eq.s32.totalorder %s26, 1
    %p217 = por %p215, %p216
    %p219 = scmp.ne.s32.totalorder %s204, %s218
    %p220 = scmp.eq.s32.totalorder %s26, 0
    %p221 = por %p219, %p220
    %s223 = sadd.s32 %s222, 1
    %p226 = scmp.eq.s32.totalorder %s20, 1
    %p227 = scmp.ne.s32.totalorder %s222, %s224
    %p228 = scmp.eq.s32.totalorder %s20, 0
    %p229 = por %p227, %p228
    %p230 = scmp.ne.s32.totalorder %s222, %s224
    %p231 = scmp.eq.s32.totalorder %s25, 1
    %p232 = por %p230, %p231
    %p233 = scmp.ne.s32.totalorder %s224, %s225
    %p234 = scmp.eq.s32.totalorder %s25, 0
    %p235 = por %p233, %p234
    %p236 = scmp.ne.s32.totalorder %s224, %s225
    %p237 = scmp.eq.s32.totalorder %s26, 1
    %p238 = por %p236, %p237
    %p240 = scmp.ne.s32.totalorder %s225, %s239
    %p241 = scmp.eq.s32.totalorder %s26, 0
    %p242 = por %p240, %p241
    %s244 = sadd.s32 %s243, 1
    %p247 = scmp.eq.s32.totalorder %s20, 1
    %p248 = scmp.ne.s32.totalorder %s243, %s245
    %p249 = scmp.eq.s32.totalorder %s20, 0
    %p250 = por %p248, %p249
    %p251 = scmp.ne.s32.totalorder %s243, %s245
    %p252 = scmp.eq.s32.totalorder %s25, 1
    %p253 = por %p251, %p252
    %p254 = scmp.ne.s32.totalorder %s245, %s246
    %p255 = scmp.eq.s32.totalorder %s25, 0
    %p256 = por %p254, %p255
    %p257 = scmp.ne.s32.totalorder %s245, %s246
    %p258 = scmp.eq.s32.totalorder %s26, 1
    %p259 = por %p257, %p258
    %p261 = scmp.ne.s32.totalorder %s246, %s260
    %p262 = scmp.eq.s32.totalorder %s26, 0
    %p263 = por %p261, %p262
    %s265 = sadd.s32 %s264, 1
    %p268 = scmp.eq.s32.totalorder %s20, 1
    %p269 = scmp.ne.s32.totalorder %s264, %s266
    %p270 = scmp.eq.s32.totalorder %s20, 0
    %p271 = por %p269, %p270
    %p272 = scmp.ne.s32.totalorder %s264, %s266
    %p273 = scmp.eq.s32.totalorder %s25, 1
    %p274 = por %p272, %p273
    %p275 = scmp.ne.s32.totalorder %s266, %s267
    %p276 = scmp.eq.s32.totalorder %s25, 0
    %p277 = por %p275, %p276
    %p278 = scmp.ne.s32.totalorder %s266, %s267
    %p279 = scmp.eq.s32.totalorder %s26, 1
    %p280 = por %p278, %p279
    %p282 = scmp.ne.s32.totalorder %s267, %s281
    %p283 = scmp.eq.s32.totalorder %s26, 0
    %p284 = por %p282, %p283
    %s286 = sadd.s32 %s285, 1
    %p289 = scmp.eq.s32.totalorder %s20, 1
    %p290 = scmp.ne.s32.totalorder %s285, %s287
    %p291 = scmp.eq.s32.totalorder %s20, 0
    %p292 = por %p290, %p291
    %p293 = scmp.ne.s32.totalorder %s285, %s287
    %p294 = scmp.eq.s32.totalorder %s25, 1
    %p295 = por %p293, %p294
    %p296 = scmp.ne.s32.totalorder %s287, %s288
    %p297 = scmp.eq.s32.totalorder %s25, 0
    %p298 = por %p296, %p297
    %p299 = scmp.ne.s32.totalorder %s287, %s288
    %p300 = scmp.eq.s32.totalorder %s26, 1
    %p301 = por %p299, %p300
    %p303 = scmp.ne.s32.totalorder %s288, %s302
    %p304 = scmp.eq.s32.totalorder %s26, 0
    %p305 = por %p303, %p304
    %s307 = sadd.s32 %s306, 1
    %p310 = scmp.eq.s32.totalorder %s20, 1
    %p311 = scmp.ne.s32.totalorder %s306, %s308
    %p312 = scmp.eq.s32.totalorder %s20, 0
    %p313 = por %p311, %p312
    %p314 = scmp.ne.s32.totalorder %s306, %s308
    %p315 = scmp.eq.s32.totalorder %s25, 1
    %p316 = por %p314, %p315
    %p317 = scmp.ne.s32.totalorder %s308, %s309
    %p318 = scmp.eq.s32.totalorder %s25, 0
    %p319 = por %p317, %p318
    %p320 = scmp.ne.s32.totalorder %s308, %s309
    %p321 = scmp.eq.s32.totalorder %s26, 1
    %p322 = por %p320, %p321
    %p324 = scmp.ne.s32.totalorder %s309, %s323
    %p325 = scmp.eq.s32.totalorder %s26, 0
    %p326 = por %p324, %p325
    %s327 = ssub.s32 %s20, %s27
    %p328 = scmp.eq.s32.totalorder %s327, 0
    %s330 = sadd.s32 %s329, 1
    %s331 = scalar_select %p328, %s329, %s330
    %p334 = pneg %p328
    %p335 = scmp.eq.s32.totalorder %s20, 1
    %p336 = por %p334, %p335
    %p337 = scmp.ne.s32.totalorder %s329, %s332
    %p338 = scmp.eq.s32.totalorder %s20, 0
    %p339 = por %p337, %p338
    %p340 = scmp.ne.s32.totalorder %s329, %s332
    %p341 = scmp.eq.s32.totalorder %s25, 1
    %p342 = por %p340, %p341
    %p343 = scmp.ne.s32.totalorder %s332, %s333
    %p344 = scmp.eq.s32.totalorder %s25, 0
    %p345 = por %p343, %p344
    %p346 = scmp.ne.s32.totalorder %s332, %s333
    %p347 = scmp.eq.s32.totalorder %s26, 1
    %p348 = por %p346, %p347
    %p350 = scmp.ne.s32.totalorder %s333, %s349
    %p351 = scmp.eq.s32.totalorder %s26, 0
    %p352 = por %p350, %p351
    %p353 = scmp.le.s32.totalorder 1, %s20
    %p354 = scmp.lt.s32.totalorder %s20, 3
    %p355 = pnand %p353, %p354
    %p356 = pneg %p355
    // Predicated region
    $region9: #{tpu_custom_call.1} parent=5 // pred_check
      _
    $region10: #{tpu_custom_call.1} parent=5 // pred_check_branch
      %358 = sbr.rel (%p355) target = $region12
    $region11: #{tpu_custom_call.1} parent=5 // pred_region
      %s359 = ssub.s32 %s20, 1
      // Predicated region
      $region13: #{tpu_custom_call.1} parent=11 // pred_check
        %p360 = pneg %p67
      $region14: #{tpu_custom_call.1} parent=11 // pred_check_branch
        %362 = sbr.rel (%p360) target = $region16
      $region15: #{tpu_custom_call.1} parent=11 // pred_region
        _
      $region16: #{tpu_custom_call.1} parent=11 // pred_fallthru
        _
      // Predicated region
      $region17: #{tpu_custom_call.1} parent=11 // pred_check
        %p363 = pneg %p88
      $region18: #{tpu_custom_call.1} parent=11 // pred_check_branch
        %365 = sbr.rel (%p363) target = $region20
      $region19: #{tpu_custom_call.1} parent=11 // pred_region
        _
      $region20: #{tpu_custom_call.1} parent=11 // pred_fallthru
        _
      // Predicated region
      $region21: #{tpu_custom_call.1} parent=11 // pred_check
        %p366 = pneg %p109
      $region22: #{tpu_custom_call.1} parent=11 // pred_check_branch
        %368 = sbr.rel (%p366) target = $region24
      $region23: #{tpu_custom_call.1} parent=11 // pred_region
        _
      $region24: #{tpu_custom_call.1} parent=11 // pred_fallthru
        _
      // Predicated region
      $region25: #{tpu_custom_call.1} parent=11 // pred_check
        %p369 = pneg %p130
      $region26: #{tpu_custom_call.1} parent=11 // pred_check_branch
        %371 = sbr.rel (%p369) target = $region28
      $region27: #{tpu_custom_call.1} parent=11 // pred_region
        _
      $region28: #{tpu_custom_call.1} parent=11 // pred_fallthru
        _
      // Predicated region
      $region29: #{tpu_custom_call.1} parent=11 // pred_check
        %p372 = pneg %p151
      $region30: #{tpu_custom_call.1} parent=11 // pred_check_branch
        %374 = sbr.rel (%p372) target = $region32
      $region31: #{tpu_custom_call.1} parent=11 // pred_region
        _
      $region32: #{tpu_custom_call.1} parent=11 // pred_fallthru
        _
      // Predicated region
      $region33: #{tpu_custom_call.1} parent=11 // pred_check
        %p375 = pneg %p172
      $region34: #{tpu_custom_call.1} parent=11 // pred_check_branch
        %377 = sbr.rel (%p375) target = $region36
      $region35: #{tpu_custom_call.1} parent=11 // pred_region
        _
      $region36: #{tpu_custom_call.1} parent=11 // pred_fallthru
        _
      // Predicated region
      $region37: #{tpu_custom_call.1} parent=11 // pred_check
        %p378 = pneg %p193
      $region38: #{tpu_custom_call.1} parent=11 // pred_check_branch
        %380 = sbr.rel (%p378) target = $region40
      $region39: #{tpu_custom_call.1} parent=11 // pred_region
        _
      $region40: #{tpu_custom_call.1} parent=11 // pred_fallthru
        _
      // Predicated region
      $region41: #{tpu_custom_call.1} parent=11 // pred_check
        %p381 = pneg %p214
      $region42: #{tpu_custom_call.1} parent=11 // pred_check_branch
        %383 = sbr.rel (%p381) target = $region44
      $region43: #{tpu_custom_call.1} parent=11 // pred_region
        _
      $region44: #{tpu_custom_call.1} parent=11 // pred_fallthru
        _
      // Predicated region
      $region45: #{tpu_custom_call.1} parent=11 // pred_check
        %p384 = pneg %p235
      $region46: #{tpu_custom_call.1} parent=11 // pred_check_branch
        %386 = sbr.rel (%p384) target = $region48
      $region47: #{tpu_custom_call.1} parent=11 // pred_region
        _
      $region48: #{tpu_custom_call.1} parent=11 // pred_fallthru
        _
      // Predicated region
      $region49: #{tpu_custom_call.1} parent=11 // pred_check
        %p387 = pneg %p256
      $region50: #{tpu_custom_call.1} parent=11 // pred_check_branch
        %389 = sbr.rel (%p387) target = $region52
      $region51: #{tpu_custom_call.1} parent=11 // pred_region
        _
      $region52: #{tpu_custom_call.1} parent=11 // pred_fallthru
        _
      // Predicated region
      $region53: #{tpu_custom_call.1} parent=11 // pred_check
        %p390 = pneg %p277
      $region54: #{tpu_custom_call.1} parent=11 // pred_check_branch
        %392 = sbr.rel (%p390) target = $region56
      $region55: #{tpu_custom_call.1} parent=11 // pred_region
        _
      $region56: #{tpu_custom_call.1} parent=11 // pred_fallthru
        _
      // Predicated region
      $region57: #{tpu_custom_call.1} parent=11 // pred_check
        %p393 = pneg %p298
      $region58: #{tpu_custom_call.1} parent=11 // pred_check_branch
        %395 = sbr.rel (%p393) target = $region60
      $region59: #{tpu_custom_call.1} parent=11 // pred_region
        _
      $region60: #{tpu_custom_call.1} parent=11 // pred_fallthru
        _
      // Predicated region
      $region61: #{tpu_custom_call.1} parent=11 // pred_check
        %p396 = pneg %p319
      $region62: #{tpu_custom_call.1} parent=11 // pred_check_branch
        %398 = sbr.rel (%p396) target = $region64
      $region63: #{tpu_custom_call.1} parent=11 // pred_region
        _
      $region64: #{tpu_custom_call.1} parent=11 // pred_fallthru
        _
    $region12: #{tpu_custom_call.1} parent=5 // pred_fallthru
      _
    %p399 = scmp.lt.s32.totalorder %s20, 2
    // Predicated region
    $region65: #{tpu_custom_call.1} parent=5 // pred_check
      %p400 = pneg %p399
    $region66: #{tpu_custom_call.1} parent=5 // pred_check_branch
      %402 = sbr.rel (%p400) target = $region68
    $region67: #{tpu_custom_call.1} parent=5 // pred_region
      // Predicated region
      $region69: #{tpu_custom_call.1} parent=67 // pred_check
        %p403 = pneg %p40
      $region70: #{tpu_custom_call.1} parent=67 // pred_check_branch
        %405 = sbr.rel (%p403) target = $region72
      $region71: #{tpu_custom_call.1} parent=67 // pred_region
        %p406 = scmp.lt.s32.totalorder %s20, 1
        %s407 = scalar_select %p406, %s20, 1
        %s408 = smul.addr %s407, 32
        %s409 = smul.addr %s408, 8
        %s410 = scalar_lea.vmem %s0, %s409
      $region72: #{tpu_custom_call.1} parent=67 // pred_fallthru
        _
    $region68: #{tpu_custom_call.1} parent=5 // pred_fallthru
      _
    %p411 = scmp.le.s32.totalorder 1, %s20
    %p412 = scmp.lt.s32.totalorder %s20, 3
    %p413 = pnand %p411, %p412
    %p414 = pneg %p413
    // Predicated region
    $region73: #{tpu_custom_call.1} parent=5 // pred_check
      _
    $region74: #{tpu_custom_call.1} parent=5 // pred_check_branch
      %416 = sbr.rel (%p413) target = $region76
    $region75: #{tpu_custom_call.1} parent=5 // pred_region
      %s417 = ssub.s32 %s20, 1
      %p418 = scmp.lt.s32.totalorder %s25, 1
      %s419 = scalar_select %p418, %s25, 1
      %s420 = smul.addr %s419, 32
      %s421 = smul.addr %s420, 8
      %s422 = scalar_lea.vmem %s0, %s421
      %p423 = pneg %p46
      %p424 = pneg %p43
      %p425 = pneg %p67
      %p426 = pneg %p64
      %p427 = pneg %p88
      %p428 = pneg %p85
      %p429 = pneg %p109
      %p430 = pneg %p106
      %p431 = pneg %p130
      %p432 = pneg %p127
      %p433 = pneg %p151
      %p434 = pneg %p148
      %p435 = pneg %p172
      %p436 = pneg %p169
      %p437 = pneg %p193
      %p438 = pneg %p190
      %p439 = pneg %p214
      %p440 = pneg %p211
      %p441 = pneg %p235
      %p442 = pneg %p232
      %p443 = pneg %p256
      %p444 = pneg %p253
      %p445 = pneg %p277
      %p446 = pneg %p274
      %p447 = pneg %p298
      %p448 = pneg %p295
      %p449 = pneg %p319
      %p450 = pneg %p316
      %p451 = pneg %p345
      %p452 = pneg %p342
      %p453 = scmp.lt.s32.totalorder %s25, 1
      %s454 = scalar_select %p453, %s25, 1
      %s455 = smul.addr %s454, 32
      %s456 = smul.addr %s455, 8
      %s457 = scalar_lea.vmem %s14, %s456
      %p458 = scmp.lt.s32.totalorder %s25, 1
      %s459 = scalar_select %p458, %s25, 1
      %s460 = smul.addr %s459, 32
      %s461 = smul.addr %s460, 8
      %s462 = scalar_lea.vmem %s0, %s461
      %p463 = scmp.lt.s32.totalorder %s25, 1
      %s464 = scalar_select %p463, %s25, 1
      %s465 = smul.addr %s464, 32
      %s466 = smul.addr %s465, 8
      %s467 = scalar_lea.vmem %s14, %s466
      %v468 = vld [vmem:[%s462] sm:$0xff]
      %v469 = vld [vmem:[%s462 + $0x8] sm:$0xff]
      %v470 = vld [vmem:[%s462 + $0x10] sm:$0xff]
      %v471 = vld [vmem:[%s462 + $0x18] sm:$0xff]
      %v472 = vld [vmem:[%s462 + $0x20] sm:$0xff]
      %v473 = vld [vmem:[%s462 + $0x28] sm:$0xff]
      %v474 = vld [vmem:[%s462 + $0x30] sm:$0xff]
      %v475 = vld [vmem:[%s462 + $0x38] sm:$0xff]
      %v476 = vld [vmem:[%s462 + $0x40] sm:$0xff]
      %v477 = vld [vmem:[%s462 + $0x48] sm:$0xff]
      %v478 = vld [vmem:[%s462 + $0x50] sm:$0xff]
      %v479 = vld [vmem:[%s462 + $0x58] sm:$0xff]
      %v480 = vld [vmem:[%s462 + $0x60] sm:$0xff]
      %v481 = vld [vmem:[%s462 + $0x68] sm:$0xff]
      %v482 = vld [vmem:[%s462 + $0x70] sm:$0xff]
      %v483 = vld [vmem:[%s462 + $0x78] sm:$0xff]
      %v484 = vld [vmem:[%s462 + $0x80] sm:$0xff]
      %v485 = vld [vmem:[%s462 + $0x88] sm:$0xff]
      %v486 = vld [vmem:[%s462 + $0x90] sm:$0xff]
      %v487 = vld [vmem:[%s462 + $0x98] sm:$0xff]
      %v488 = vld [vmem:[%s462 + $0xa0] sm:$0xff]
      %v489 = vld [vmem:[%s462 + $0xa8] sm:$0xff]
      %v490 = vld [vmem:[%s462 + $0xb0] sm:$0xff]
      %v491 = vld [vmem:[%s462 + $0xb8] sm:$0xff]
      %v492 = vld [vmem:[%s462 + $0xc0] sm:$0xff]
      %v493 = vld [vmem:[%s462 + $0xc8] sm:$0xff]
      %v494 = vld [vmem:[%s462 + $0xd0] sm:$0xff]
      %v495 = vld [vmem:[%s462 + $0xd8] sm:$0xff]
      %v496 = vld [vmem:[%s462 + $0xe0] sm:$0xff]
      %v497 = vld [vmem:[%s462 + $0xe8] sm:$0xff]
      %v498 = vld [vmem:[%s462 + $0xf0] sm:$0xff]
      %v499 = vld [vmem:[%s462 + $0xf8] sm:$0xff]
      %v500 = vld [vmem:[%s1] sm:$0xff]
      %v501 = vld [vmem:[%s1 + $0x8] sm:$0xff]
      %v502 = vld [vmem:[%s1 + $0x10] sm:$0xff]
      %v503 = vld [vmem:[%s1 + $0x18] sm:$0xff]
      %v504 = vld [vmem:[%s1 + $0x20] sm:$0xff]
      %v505 = vld [vmem:[%s1 + $0x28] sm:$0xff]
      %v506 = vld [vmem:[%s1 + $0x30] sm:$0xff]
      %v507 = vld [vmem:[%s1 + $0x38] sm:$0xff]
      %vm508 = vcmask 523264
      %v510 = vsel %vm508, %v468, 0
      %v513 = vsel %vm508, %v469, 0
      %v516 = vsel %vm508, %v470, 0
      %v519 = vsel %vm508, %v471, 0
      %v522 = vsel %vm508, %v472, 0
      %v525 = vsel %vm508, %v473, 0
      %v528 = vsel %vm508, %v474, 0
      %v531 = vsel %vm508, %v475, 0
      %v534 = vsel %vm508, %v476, 0
      %v537 = vsel %vm508, %v477, 0
      %v540 = vsel %vm508, %v478, 0
      %v543 = vsel %vm508, %v479, 0
      %v546 = vsel %vm508, %v480, 0
      %v549 = vsel %vm508, %v481, 0
      %v552 = vsel %vm508, %v482, 0
      %v555 = vsel %vm508, %v483, 0
      %v558 = vsel %vm508, %v484, 0
      %v561 = vsel %vm508, %v485, 0
      %v564 = vsel %vm508, %v486, 0
      %v567 = vsel %vm508, %v487, 0
      %v570 = vsel %vm508, %v488, 0
      %v573 = vsel %vm508, %v489, 0
      %v576 = vsel %vm508, %v490, 0
      %v579 = vsel %vm508, %v491, 0
      %v582 = vsel %vm508, %v492, 0
      %v585 = vsel %vm508, %v493, 0
      %v588 = vsel %vm508, %v494, 0
      %v591 = vsel %vm508, %v495, 0
      %v594 = vsel %vm508, %v496, 0
      %v597 = vsel %vm508, %v497, 0
      %v600 = vsel %vm508, %v498, 0
      %v603 = vsel %vm508, %v499, 0
      %605 = vmatpush.msra.mxu0 0.0
      %606 = vmatpush.msra.mxu0 0.0
      %607 = vmatpush.msra.mxu0 0.0
      %608 = vmatpush.msra.mxu0 0.0
      %609 = vmatpush.msra.mxu0 0.0
      %610 = vmatpush.msra.mxu0 0.0
      %611 = vmatpush.msra.mxu0 0.0
      %612 = vmatpush.msra.mxu0 0.0
      %613 = vmatpush.msra.mxu0 %v507
      %614 = vmatpush.msra.mxu0 %v506
      %615 = vmatpush.msra.mxu0 %v505
      %616 = vmatpush.msra.mxu0 %v504
      %617 = vmatpush.msra.mxu0 %v503
      %618 = vmatpush.msra.mxu0 %v502
      %619 = vmatpush.msra.mxu0 %v501
      %620 = vmatpush.msra.mxu0 %v500
      %621 = vmatmul.f32.gmra.mxu0 %v510
      %v622 = vpop.f32.mrf.mxu0
      %v623 = vadd.f32 0.0, %v622
      %624 = vmatmul.f32.gmra.mxu0 %v513
      %v625 = vpop.f32.mrf.mxu0
      %v626 = vadd.f32 0.0, %v625
      %627 = vmatmul.f32.gmra.mxu0 %v516
      %v628 = vpop.f32.mrf.mxu0
      %v629 = vadd.f32 0.0, %v628
      %630 = vmatmul.f32.gmra.mxu0 %v519
      %v631 = vpop.f32.mrf.mxu0
      %v632 = vadd.f32 0.0, %v631
      %633 = vmatmul.f32.gmra.mxu0 %v522
      %v634 = vpop.f32.mrf.mxu0
      %v635 = vadd.f32 0.0, %v634
      %636 = vmatmul.f32.gmra.mxu0 %v525
      %v637 = vpop.f32.mrf.mxu0
      %v638 = vadd.f32 0.0, %v637
      %639 = vmatmul.f32.gmra.mxu0 %v528
      %v640 = vpop.f32.mrf.mxu0
      %v641 = vadd.f32 0.0, %v640
      %642 = vmatmul.f32.gmra.mxu0 %v531
      %v643 = vpop.f32.mrf.mxu0
      %v644 = vadd.f32 0.0, %v643
      %645 = vmatmul.f32.gmra.mxu0 %v534
      %v646 = vpop.f32.mrf.mxu0
      %v647 = vadd.f32 0.0, %v646
      %648 = vmatmul.f32.gmra.mxu0 %v537
      %v649 = vpop.f32.mrf.mxu0
      %v650 = vadd.f32 0.0, %v649
      %651 = vmatmul.f32.gmra.mxu0 %v540
      %v652 = vpop.f32.mrf.mxu0
      %v653 = vadd.f32 0.0, %v652
      %654 = vmatmul.f32.gmra.mxu0 %v543
      %v655 = vpop.f32.mrf.mxu0
      %v656 = vadd.f32 0.0, %v655
      %657 = vmatmul.f32.gmra.mxu0 %v546
      %v658 = vpop.f32.mrf.mxu0
      %v659 = vadd.f32 0.0, %v658
      %660 = vmatmul.f32.gmra.mxu0 %v549
      %v661 = vpop.f32.mrf.mxu0
      %v662 = vadd.f32 0.0, %v661
      %663 = vmatmul.f32.gmra.mxu0 %v552
      %v664 = vpop.f32.mrf.mxu0
      %v665 = vadd.f32 0.0, %v664
      %666 = vmatmul.f32.gmra.mxu0 %v555
      %v667 = vpop.f32.mrf.mxu0
      %v668 = vadd.f32 0.0, %v667
      %669 = vmatmul.f32.gmra.mxu0 %v558
      %v670 = vpop.f32.mrf.mxu0
      %v671 = vadd.f32 0.0, %v670
      %672 = vmatmul.f32.gmra.mxu0 %v561
      %v673 = vpop.f32.mrf.mxu0
      %v674 = vadd.f32 0.0, %v673
      %675 = vmatmul.f32.gmra.mxu0 %v564
      %v676 = vpop.f32.mrf.mxu0
      %v677 = vadd.f32 0.0, %v676
      %678 = vmatmul.f32.gmra.mxu0 %v567
      %v679 = vpop.f32.mrf.mxu0
      %v680 = vadd.f32 0.0, %v679
      %681 = vmatmul.f32.gmra.mxu0 %v570
      %v682 = vpop.f32.mrf.mxu0
      %v683 = vadd.f32 0.0, %v682
      %684 = vmatmul.f32.gmra.mxu0 %v573
      %v685 = vpop.f32.mrf.mxu0
      %v686 = vadd.f32 0.0, %v685
      %687 = vmatmul.f32.gmra.mxu0 %v576
      %v688 = vpop.f32.mrf.mxu0
      %v689 = vadd.f32 0.0, %v688
      %690 = vmatmul.f32.gmra.mxu0 %v579
      %v691 = vpop.f32.mrf.mxu0
      %v692 = vadd.f32 0.0, %v691
      %693 = vmatmul.f32.gmra.mxu0 %v582
      %v694 = vpop.f32.mrf.mxu0
      %v695 = vadd.f32 0.0, %v694
      %696 = vmatmul.f32.gmra.mxu0 %v585
      %v697 = vpop.f32.mrf.mxu0
      %v698 = vadd.f32 0.0, %v697
      %699 = vmatmul.f32.gmra.mxu0 %v588
      %v700 = vpop.f32.mrf.mxu0
      %v701 = vadd.f32 0.0, %v700
      %702 = vmatmul.f32.gmra.mxu0 %v591
      %v703 = vpop.f32.mrf.mxu0
      %v704 = vadd.f32 0.0, %v703
      %705 = vmatmul.f32.gmra.mxu0 %v594
      %v706 = vpop.f32.mrf.mxu0
      %v707 = vadd.f32 0.0, %v706
      %708 = vmatmul.f32.gmra.mxu0 %v597
      %v709 = vpop.f32.mrf.mxu0
      %v710 = vadd.f32 0.0, %v709
      %711 = vmatmul.f32.gmra.mxu0 %v600
      %v712 = vpop.f32.mrf.mxu0
      %v713 = vadd.f32 0.0, %v712
      %714 = vmatmul.f32.gmra.mxu0 %v603
      %v715 = vpop.f32.mrf.mxu0
      %v716 = vadd.f32 0.0, %v715
      %717 = vdwg.mxu0
      %v718 = vld [vmem:[%s2] sm:$0x1]
      %v720 = vperm.slane %v718, 0
      %v722 = vmul.f32 %v623, %v720
      %v723 = vmul.f32 %v626, %v720
      %v724 = vmul.f32 %v629, %v720
      %v725 = vmul.f32 %v632, %v720
      %v726 = vmul.f32 %v635, %v720
      %v727 = vmul.f32 %v638, %v720
      %v728 = vmul.f32 %v641, %v720
      %v729 = vmul.f32 %v644, %v720
      %v730 = vmul.f32 %v647, %v720
      %v731 = vmul.f32 %v650, %v720
      %v732 = vmul.f32 %v653, %v720
      %v733 = vmul.f32 %v656, %v720
      %v734 = vmul.f32 %v659, %v720
      %v735 = vmul.f32 %v662, %v720
      %v736 = vmul.f32 %v665, %v720
      %v737 = vmul.f32 %v668, %v720
      %v738 = vmul.f32 %v671, %v720
      %v739 = vmul.f32 %v674, %v720
      %v740 = vmul.f32 %v677, %v720
      %v741 = vmul.f32 %v680, %v720
      %v742 = vmul.f32 %v683, %v720
      %v743 = vmul.f32 %v686, %v720
      %v744 = vmul.f32 %v689, %v720
      %v745 = vmul.f32 %v692, %v720
      %v746 = vmul.f32 %v695, %v720
      %v747 = vmul.f32 %v698, %v720
      %v748 = vmul.f32 %v701, %v720
      %v749 = vmul.f32 %v704, %v720
      %v750 = vmul.f32 %v707, %v720
      %v751 = vmul.f32 %v710, %v720
      %v752 = vmul.f32 %v713, %v720
      %v753 = vmul.f32 %v716, %v720
      %v754 = vld [vmem:[%s3] sm:$0x1]
      %v756 = vperm.slane %v754, 0
      %v758 = vadd.f32 %v722, %v756
      %v759 = vadd.f32 %v723, %v756
      %v760 = vadd.f32 %v724, %v756
      %v761 = vadd.f32 %v725, %v756
      %v762 = vadd.f32 %v726, %v756
      %v763 = vadd.f32 %v727, %v756
      %v764 = vadd.f32 %v728, %v756
      %v765 = vadd.f32 %v729, %v756
      %v766 = vadd.f32 %v730, %v756
      %v767 = vadd.f32 %v731, %v756
      %v768 = vadd.f32 %v732, %v756
      %v769 = vadd.f32 %v733, %v756
      %v770 = vadd.f32 %v734, %v756
      %v771 = vadd.f32 %v735, %v756
      %v772 = vadd.f32 %v736, %v756
      %v773 = vadd.f32 %v737, %v756
      %v774 = vadd.f32 %v738, %v756
      %v775 = vadd.f32 %v739, %v756
      %v776 = vadd.f32 %v740, %v756
      %v777 = vadd.f32 %v741, %v756
      %v778 = vadd.f32 %v742, %v756
      %v779 = vadd.f32 %v743, %v756
      %v780 = vadd.f32 %v744, %v756
      %v781 = vadd.f32 %v745, %v756
      %v782 = vadd.f32 %v746, %v756
      %v783 = vadd.f32 %v747, %v756
      %v784 = vadd.f32 %v748, %v756
      %v785 = vadd.f32 %v749, %v756
      %v786 = vadd.f32 %v750, %v756
      %v787 = vadd.f32 %v751, %v756
      %v788 = vadd.f32 %v752, %v756
      %v789 = vadd.f32 %v753, %v756
      %v790 = vmax.f32 %v758, 0.0
      %v791 = vmax.f32 %v759, 0.0
      %v792 = vmax.f32 %v760, 0.0
      %v793 = vmax.f32 %v761, 0.0
      %v794 = vmax.f32 %v762, 0.0
      %v795 = vmax.f32 %v763, 0.0
      %v796 = vmax.f32 %v764, 0.0
      %v797 = vmax.f32 %v765, 0.0
      %v798 = vmax.f32 %v766, 0.0
      %v799 = vmax.f32 %v767, 0.0
      %v800 = vmax.f32 %v768, 0.0
      %v801 = vmax.f32 %v769, 0.0
      %v802 = vmax.f32 %v770, 0.0
      %v803 = vmax.f32 %v771, 0.0
      %v804 = vmax.f32 %v772, 0.0
      %v805 = vmax.f32 %v773, 0.0
      %v806 = vmax.f32 %v774, 0.0
      %v807 = vmax.f32 %v775, 0.0
      %v808 = vmax.f32 %v776, 0.0
      %v809 = vmax.f32 %v777, 0.0
      %v810 = vmax.f32 %v778, 0.0
      %v811 = vmax.f32 %v779, 0.0
      %v812 = vmax.f32 %v780, 0.0
      %v813 = vmax.f32 %v781, 0.0
      %v814 = vmax.f32 %v782, 0.0
      %v815 = vmax.f32 %v783, 0.0
      %v816 = vmax.f32 %v784, 0.0
      %v817 = vmax.f32 %v785, 0.0
      %v818 = vmax.f32 %v786, 0.0
      %v819 = vmax.f32 %v787, 0.0
      %v820 = vmax.f32 %v788, 0.0
      %v821 = vmax.f32 %v789, 0.0
      %822 = vst [vmem:[#allocation2] sm:$0xff] 0.0
      %823 = vst [vmem:[#allocation2 + $0x8] sm:$0xff] 0.0
      %824 = vst [vmem:[#allocation2 + $0x10] sm:$0xf] 0.0
      %825 = vst [vmem:[#allocation2 + $0x18] sm:$0xff] 0.0
      %826 = vst [vmem:[#allocation2 + $0x20] sm:$0xff] 0.0
      %827 = vst [vmem:[#allocation2 + $0x28] sm:$0xf] 0.0
      %s828 = scalar_lea.vmem [#allocation2], 432
      %829 = vst [vmem:[%s828] sm:$0xff] 0.0
      %830 = vst [vmem:[%s828 + $0x8] sm:$0xff] 0.0
      %831 = vst [vmem:[%s828 + $0x10] sm:$0xf] 0.0
      %832 = vst [vmem:[%s828 + $0x18] sm:$0xff] 0.0
      %833 = vst [vmem:[%s828 + $0x20] sm:$0xff] 0.0
      %834 = vst [vmem:[%s828 + $0x28] sm:$0xf] 0.0
      %s835 = scalar_lea.vmem [#allocation2], 48
      %836 = vst [vmem:[%s835] sm:$0x3] 0.0
      %837 = vst [vmem:[%s835 + $0x18] sm:$0x3] 0.0
      %838 = vst [vmem:[%s835 + $0x30] sm:$0x3] 0.0
      %839 = vst [vmem:[%s835 + $0x48] sm:$0x3] 0.0
      %840 = vst [vmem:[%s835 + $0x60] sm:$0x3] 0.0
      %841 = vst [vmem:[%s835 + $0x78] sm:$0x3] 0.0
      %842 = vst [vmem:[%s835 + $0x90] sm:$0x3] 0.0
      %843 = vst [vmem:[%s835 + $0xa8] sm:$0x3] 0.0
      %844 = vst [vmem:[%s835 + $0xc0] sm:$0x3] 0.0
      %845 = vst [vmem:[%s835 + $0xd8] sm:$0x3] 0.0
      %846 = vst [vmem:[%s835 + $0xf0] sm:$0x3] 0.0
      %847 = vst [vmem:[%s835 + $0x108] sm:$0x3] 0.0
      %848 = vst [vmem:[%s835 + $0x120] sm:$0x3] 0.0
      %849 = vst [vmem:[%s835 + $0x138] sm:$0x3] 0.0
      %850 = vst [vmem:[%s835 + $0x150] sm:$0x3] 0.0
      %851 = vst [vmem:[%s835 + $0x168] sm:$0x3] 0.0
      %852 = vst [vmem:[%s835 + $0x12] sm:$0x3] 0.0
      %853 = vst [vmem:[%s835 + $0x2a] sm:$0x3] 0.0
      %854 = vst [vmem:[%s835 + $0x42] sm:$0x3] 0.0
      %855 = vst [vmem:[%s835 + $0x5a] sm:$0x3] 0.0
      %856 = vst [vmem:[%s835 + $0x72] sm:$0x3] 0.0
      %857 = vst [vmem:[%s835 + $0x8a] sm:$0x3] 0.0
      %858 = vst [vmem:[%s835 + $0xa2] sm:$0x3] 0.0
      %859 = vst [vmem:[%s835 + $0xba] sm:$0x3] 0.0
      %860 = vst [vmem:[%s835 + $0xd2] sm:$0x3] 0.0
      %861 = vst [vmem:[%s835 + $0xea] sm:$0x3] 0.0
      %862 = vst [vmem:[%s835 + $0x102] sm:$0x3] 0.0
      %863 = vst [vmem:[%s835 + $0x11a] sm:$0x3] 0.0
      %864 = vst [vmem:[%s835 + $0x132] sm:$0x3] 0.0
      %865 = vst [vmem:[%s835 + $0x14a] sm:$0x3] 0.0
      %866 = vst [vmem:[%s835 + $0x162] sm:$0x3] 0.0
      %867 = vst [vmem:[%s835 + $0x17a] sm:$0x3] 0.0
      %868 = vst [vmem:[%s835 + $0x2] sm:$0xff] %v790
      %869 = vst [vmem:[%s835 + $0xa] sm:$0xff] %v791
      %870 = vst [vmem:[%s835 + $0x1a] sm:$0xff] %v792
      %871 = vst [vmem:[%s835 + $0x22] sm:$0xff] %v793
      %872 = vst [vmem:[%s835 + $0x32] sm:$0xff] %v794
      %873 = vst [vmem:[%s835 + $0x3a] sm:$0xff] %v795
      %874 = vst [vmem:[%s835 + $0x4a] sm:$0xff] %v796
      %875 = vst [vmem:[%s835 + $0x52] sm:$0xff] %v797
      %876 = vst [vmem:[%s835 + $0x62] sm:$0xff] %v798
      %877 = vst [vmem:[%s835 + $0x6a] sm:$0xff] %v799
      %878 = vst [vmem:[%s835 + $0x7a] sm:$0xff] %v800
      %879 = vst [vmem:[%s835 + $0x82] sm:$0xff] %v801
      %880 = vst [vmem:[%s835 + $0x92] sm:$0xff] %v802
      %881 = vst [vmem:[%s835 + $0x9a] sm:$0xff] %v803
      %882 = vst [vmem:[%s835 + $0xaa] sm:$0xff] %v804
      %883 = vst [vmem:[%s835 + $0xb2] sm:$0xff] %v805
      %884 = vst [vmem:[%s835 + $0xc2] sm:$0xff] %v806
      %885 = vst [vmem:[%s835 + $0xca] sm:$0xff] %v807
      %886 = vst [vmem:[%s835 + $0xda] sm:$0xff] %v808
      %887 = vst [vmem:[%s835 + $0xe2] sm:$0xff] %v809
      %888 = vst [vmem:[%s835 + $0xf2] sm:$0xff] %v810
      %889 = vst [vmem:[%s835 + $0xfa] sm:$0xff] %v811
      %890 = vst [vmem:[%s835 + $0x10a] sm:$0xff] %v812
      %891 = vst [vmem:[%s835 + $0x112] sm:$0xff] %v813
      %892 = vst [vmem:[%s835 + $0x122] sm:$0xff] %v814
      %893 = vst [vmem:[%s835 + $0x12a] sm:$0xff] %v815
      %894 = vst [vmem:[%s835 + $0x13a] sm:$0xff] %v816
      %895 = vst [vmem:[%s835 + $0x142] sm:$0xff] %v817
      %896 = vst [vmem:[%s835 + $0x152] sm:$0xff] %v818
      %897 = vst [vmem:[%s835 + $0x15a] sm:$0xff] %v819
      %898 = vst [vmem:[%s835 + $0x16a] sm:$0xff] %v820
      %899 = vst [vmem:[%s835 + $0x172] sm:$0xff] %v821
      %v900 = vld [vmem:[%s4] sm:$0x1]
      %v901 = vld [vmem:[#allocation2] sm:$0xff]
      %v902 = vld [vmem:[#allocation2 + $0x8] sm:$0xff]
      %v903 = vld [vmem:[#allocation2 + $0x18] sm:$0xff]
      %v904 = vld [vmem:[#allocation2 + $0x20] sm:$0xff]
      %v905 = vld [vmem:[#allocation2 + $0x30] sm:$0xff]
      %v906 = vld [vmem:[#allocation2 + $0x38] sm:$0xff]
      %v907 = vld [vmem:[#allocation2 + $0x48] sm:$0xff]
      %v908 = vld [vmem:[#allocation2 + $0x50] sm:$0xff]
      %v909 = vld [vmem:[#allocation2 + $0x60] sm:$0xff]
      %v910 = vld [vmem:[#allocation2 + $0x68] sm:$0xff]
      %v911 = vld [vmem:[#allocation2 + $0x78] sm:$0xff]
      %v912 = vld [vmem:[#allocation2 + $0x80] sm:$0xff]
      %v913 = vld [vmem:[#allocation2 + $0x90] sm:$0xff]
      %v914 = vld [vmem:[#allocation2 + $0x98] sm:$0xff]
      %v915 = vld [vmem:[#allocation2 + $0xa8] sm:$0xff]
      %v916 = vld [vmem:[#allocation2 + $0xb0] sm:$0xff]
      %v917 = vld [vmem:[#allocation2 + $0xc0] sm:$0xff]
      %v918 = vld [vmem:[#allocation2 + $0xc8] sm:$0xff]
      %v919 = vld [vmem:[#allocation2 + $0xd8] sm:$0xff]
      %v920 = vld [vmem:[#allocation2 + $0xe0] sm:$0xff]
      %v921 = vld [vmem:[#allocation2 + $0xf0] sm:$0xff]
      %v922 = vld [vmem:[#allocation2 + $0xf8] sm:$0xff]
      %v923 = vld [vmem:[#allocation2 + $0x108] sm:$0xff]
      %v924 = vld [vmem:[#allocation2 + $0x110] sm:$0xff]
      %v925 = vld [vmem:[#allocation2 + $0x120] sm:$0xff]
      %v926 = vld [vmem:[#allocation2 + $0x128] sm:$0xff]
      %v927 = vld [vmem:[#allocation2 + $0x138] sm:$0xff]
      %v928 = vld [vmem:[#allocation2 + $0x140] sm:$0xff]
      %v929 = vld [vmem:[#allocation2 + $0x150] sm:$0xff]
      %v930 = vld [vmem:[#allocation2 + $0x158] sm:$0xff]
      %v931 = vld [vmem:[#allocation2 + $0x168] sm:$0xff]
      %v932 = vld [vmem:[#allocation2 + $0x170] sm:$0xff]
      %v933 = vperm.slane %v900, 0
      %v934 = vmul.f32 %v901, %v933
      %v935 = vmul.f32 %v902, %v933
      %v936 = vmul.f32 %v903, %v933
      %v937 = vmul.f32 %v904, %v933
      %v938 = vmul.f32 %v905, %v933
      %v939 = vmul.f32 %v906, %v933
      %v940 = vmul.f32 %v907, %v933
      %v941 = vmul.f32 %v908, %v933
      %v942 = vmul.f32 %v909, %v933
      %v943 = vmul.f32 %v910, %v933
      %v944 = vmul.f32 %v911, %v933
      %v945 = vmul.f32 %v912, %v933
      %v946 = vmul.f32 %v913, %v933
      %v947 = vmul.f32 %v914, %v933
      %v948 = vmul.f32 %v915, %v933
      %v949 = vmul.f32 %v916, %v933
      %v950 = vmul.f32 %v917, %v933
      %v951 = vmul.f32 %v918, %v933
      %v952 = vmul.f32 %v919, %v933
      %v953 = vmul.f32 %v920, %v933
      %v954 = vmul.f32 %v921, %v933
      %v955 = vmul.f32 %v922, %v933
      %v956 = vmul.f32 %v923, %v933
      %v957 = vmul.f32 %v924, %v933
      %v958 = vmul.f32 %v925, %v933
      %v959 = vmul.f32 %v926, %v933
      %v960 = vmul.f32 %v927, %v933
      %v961 = vmul.f32 %v928, %v933
      %v962 = vmul.f32 %v929, %v933
      %v963 = vmul.f32 %v930, %v933
      %v964 = vmul.f32 %v931, %v933
      %v965 = vmul.f32 %v932, %v933
      %v966 = vadd.f32 %v934, 0.0
      %v967 = vadd.f32 %v935, 0.0
      %v968 = vadd.f32 %v936, 0.0
      %v969 = vadd.f32 %v937, 0.0
      %v970 = vadd.f32 %v938, 0.0
      %v971 = vadd.f32 %v939, 0.0
      %v972 = vadd.f32 %v940, 0.0
      %v973 = vadd.f32 %v941, 0.0
      %v974 = vadd.f32 %v942, 0.0
      %v975 = vadd.f32 %v943, 0.0
      %v976 = vadd.f32 %v944, 0.0
      %v977 = vadd.f32 %v945, 0.0
      %v978 = vadd.f32 %v946, 0.0
      %v979 = vadd.f32 %v947, 0.0
      %v980 = vadd.f32 %v948, 0.0
      %v981 = vadd.f32 %v949, 0.0
      %v982 = vadd.f32 %v950, 0.0
      %v983 = vadd.f32 %v951, 0.0
      %v984 = vadd.f32 %v952, 0.0
      %v985 = vadd.f32 %v953, 0.0
      %v986 = vadd.f32 %v954, 0.0
      %v987 = vadd.f32 %v955, 0.0
      %v988 = vadd.f32 %v956, 0.0
      %v989 = vadd.f32 %v957, 0.0
      %v990 = vadd.f32 %v958, 0.0
      %v991 = vadd.f32 %v959, 0.0
      %v992 = vadd.f32 %v960, 0.0
      %v993 = vadd.f32 %v961, 0.0
      %v994 = vadd.f32 %v962, 0.0
      %v995 = vadd.f32 %v963, 0.0
      %v996 = vadd.f32 %v964, 0.0
      %v997 = vadd.f32 %v965, 0.0
      %v998 = vld [vmem:[%s4 + $0x1] sm:$0x1]
      %v999 = vld [vmem:[#allocation2 + $0x1] sm:$0xff]
      %v1000 = vld [vmem:[#allocation2 + $0x9] sm:$0xff]
      %v1001 = vld [vmem:[#allocation2 + $0x19] sm:$0xff]
      %v1002 = vld [vmem:[#allocation2 + $0x21] sm:$0xff]
      %v1003 = vld [vmem:[#allocation2 + $0x31] sm:$0xff]
      %v1004 = vld [vmem:[#allocation2 + $0x39] sm:$0xff]
      %v1005 = vld [vmem:[#allocation2 + $0x49] sm:$0xff]
      %v1006 = vld [vmem:[#allocation2 + $0x51] sm:$0xff]
      %v1007 = vld [vmem:[#allocation2 + $0x61] sm:$0xff]
      %v1008 = vld [vmem:[#allocation2 + $0x69] sm:$0xff]
      %v1009 = vld [vmem:[#allocation2 + $0x79] sm:$0xff]
      %v1010 = vld [vmem:[#allocation2 + $0x81] sm:$0xff]
      %v1011 = vld [vmem:[#allocation2 + $0x91] sm:$0xff]
      %v1012 = vld [vmem:[#allocation2 + $0x99] sm:$0xff]
      %v1013 = vld [vmem:[#allocation2 + $0xa9] sm:$0xff]
      %v1014 = vld [vmem:[#allocation2 + $0xb1] sm:$0xff]
      %v1015 = vld [vmem:[#allocation2 + $0xc1] sm:$0xff]
      %v1016 = vld [vmem:[#allocation2 + $0xc9] sm:$0xff]
      %v1017 = vld [vmem:[#allocation2 + $0xd9] sm:$0xff]
      %v1018 = vld [vmem:[#allocation2 + $0xe1] sm:$0xff]
      %v1019 = vld [vmem:[#allocation2 + $0xf1] sm:$0xff]
      %v1020 = vld [vmem:[#allocation2 + $0xf9] sm:$0xff]
      %v1021 = vld [vmem:[#allocation2 + $0x109] sm:$0xff]
      %v1022 = vld [vmem:[#allocation2 + $0x111] sm:$0xff]
      %v1023 = vld [vmem:[#allocation2 + $0x121] sm:$0xff]
      %v1024 = vld [vmem:[#allocation2 + $0x129] sm:$0xff]
      %v1025 = vld [vmem:[#allocation2 + $0x139] sm:$0xff]
      %v1026 = vld [vmem:[#allocation2 + $0x141] sm:$0xff]
      %v1027 = vld [vmem:[#allocation2 + $0x151] sm:$0xff]
      %v1028 = vld [vmem:[#allocation2 + $0x159] sm:$0xff]
      %v1029 = vld [vmem:[#allocation2 + $0x169] sm:$0xff]
      %v1030 = vld [vmem:[#allocation2 + $0x171] sm:$0xff]
      %v1031 = vperm.slane %v998, 0
      %v1032 = vmul.f32 %v999, %v1031
      %v1033 = vmul.f32 %v1000, %v1031
      %v1034 = vmul.f32 %v1001, %v1031
      %v1035 = vmul.f32 %v1002, %v1031
      %v1036 = vmul.f32 %v1003, %v1031
      %v1037 = vmul.f32 %v1004, %v1031
      %v1038 = vmul.f32 %v1005, %v1031
      %v1039 = vmul.f32 %v1006, %v1031
      %v1040 = vmul.f32 %v1007, %v1031
      %v1041 = vmul.f32 %v1008, %v1031
      %v1042 = vmul.f32 %v1009, %v1031
      %v1043 = vmul.f32 %v1010, %v1031
      %v1044 = vmul.f32 %v1011, %v1031
      %v1045 = vmul.f32 %v1012, %v1031
      %v1046 = vmul.f32 %v1013, %v1031
      %v1047 = vmul.f32 %v1014, %v1031
      %v1048 = vmul.f32 %v1015, %v1031
      %v1049 = vmul.f32 %v1016, %v1031
      %v1050 = vmul.f32 %v1017, %v1031
      %v1051 = vmul.f32 %v1018, %v1031
      %v1052 = vmul.f32 %v1019, %v1031
      %v1053 = vmul.f32 %v1020, %v1031
      %v1054 = vmul.f32 %v1021, %v1031
      %v1055 = vmul.f32 %v1022, %v1031
      %v1056 = vmul.f32 %v1023, %v1031
      %v1057 = vmul.f32 %v1024, %v1031
      %v1058 = vmul.f32 %v1025, %v1031
      %v1059 = vmul.f32 %v1026, %v1031
      %v1060 = vmul.f32 %v1027, %v1031
      %v1061 = vmul.f32 %v1028, %v1031
      %v1062 = vmul.f32 %v1029, %v1031
      %v1063 = vmul.f32 %v1030, %v1031
      %v1064 = vadd.f32 %v966, %v1032
      %v1065 = vadd.f32 %v967, %v1033
      %v1066 = vadd.f32 %v968, %v1034
      %v1067 = vadd.f32 %v969, %v1035
      %v1068 = vadd.f32 %v970, %v1036
      %v1069 = vadd.f32 %v971, %v1037
      %v1070 = vadd.f32 %v972, %v1038
      %v1071 = vadd.f32 %v973, %v1039
      %v1072 = vadd.f32 %v974, %v1040
      %v1073 = vadd.f32 %v975, %v1041
      %v1074 = vadd.f32 %v976, %v1042
      %v1075 = vadd.f32 %v977, %v1043
      %v1076 = vadd.f32 %v978, %v1044
      %v1077 = vadd.f32 %v979, %v1045
      %v1078 = vadd.f32 %v980, %v1046
      %v1079 = vadd.f32 %v981, %v1047
      %v1080 = vadd.f32 %v982, %v1048
      %v1081 = vadd.f32 %v983, %v1049
      %v1082 = vadd.f32 %v984, %v1050
      %v1083 = vadd.f32 %v985, %v1051
      %v1084 = vadd.f32 %v986, %v1052
      %v1085 = vadd.f32 %v987, %v1053
      %v1086 = vadd.f32 %v988, %v1054
      %v1087 = vadd.f32 %v989, %v1055
      %v1088 = vadd.f32 %v990, %v1056
      %v1089 = vadd.f32 %v991, %v1057
      %v1090 = vadd.f32 %v992, %v1058
      %v1091 = vadd.f32 %v993, %v1059
      %v1092 = vadd.f32 %v994, %v1060
      %v1093 = vadd.f32 %v995, %v1061
      %v1094 = vadd.f32 %v996, %v1062
      %v1095 = vadd.f32 %v997, %v1063
      %v1096 = vld [vmem:[%s4 + $0x2] sm:$0x1]
      %v1097 = vld [vmem:[#allocation2 + $0x2] sm:$0xff]
      %v1098 = vld [vmem:[#allocation2 + $0xa] sm:$0xff]
      %v1099 = vld [vmem:[#allocation2 + $0x1a] sm:$0xff]
      %v1100 = vld [vmem:[#allocation2 + $0x22] sm:$0xff]
      %v1101 = vld [vmem:[#allocation2 + $0x32] sm:$0xff]
      %v1102 = vld [vmem:[#allocation2 + $0x3a] sm:$0xff]
      %v1103 = vld [vmem:[#allocation2 + $0x4a] sm:$0xff]
      %v1104 = vld [vmem:[#allocation2 + $0x52] sm:$0xff]
      %v1105 = vld [vmem:[#allocation2 + $0x62] sm:$0xff]
      %v1106 = vld [vmem:[#allocation2 + $0x6a] sm:$0xff]
      %v1107 = vld [vmem:[#allocation2 + $0x7a] sm:$0xff]
      %v1108 = vld [vmem:[#allocation2 + $0x82] sm:$0xff]
      %v1109 = vld [vmem:[#allocation2 + $0x92] sm:$0xff]
      %v1110 = vld [vmem:[#allocation2 + $0x9a] sm:$0xff]
      %v1111 = vld [vmem:[#allocation2 + $0xaa] sm:$0xff]
      %v1112 = vld [vmem:[#allocation2 + $0xb2] sm:$0xff]
      %v1113 = vld [vmem:[#allocation2 + $0xc2] sm:$0xff]
      %v1114 = vld [vmem:[#allocation2 + $0xca] sm:$0xff]
      %v1115 = vld [vmem:[#allocation2 + $0xda] sm:$0xff]
      %v1116 = vld [vmem:[#allocation2 + $0xe2] sm:$0xff]
      %v1117 = vld [vmem:[#allocation2 + $0xf2] sm:$0xff]
      %v1118 = vld [vmem:[#allocation2 + $0xfa] sm:$0xff]
      %v1119 = vld [vmem:[#allocation2 + $0x10a] sm:$0xff]
      %v1120 = vld [vmem:[#allocation2 + $0x112] sm:$0xff]
      %v1121 = vld [vmem:[#allocation2 + $0x122] sm:$0xff]
      %v1122 = vld [vmem:[#allocation2 + $0x12a] sm:$0xff]
      %v1123 = vld [vmem:[#allocation2 + $0x13a] sm:$0xff]
      %v1124 = vld [vmem:[#allocation2 + $0x142] sm:$0xff]
      %v1125 = vld [vmem:[#allocation2 + $0x152] sm:$0xff]
      %v1126 = vld [vmem:[#allocation2 + $0x15a] sm:$0xff]
      %v1127 = vld [vmem:[#allocation2 + $0x16a] sm:$0xff]
      %v1128 = vld [vmem:[#allocation2 + $0x172] sm:$0xff]
      %v1129 = vperm.slane %v1096, 0
      %v1130 = vmul.f32 %v1097, %v1129
      %v1131 = vmul.f32 %v1098, %v1129
      %v1132 = vmul.f32 %v1099, %v1129
      %v1133 = vmul.f32 %v1100, %v1129
      %v1134 = vmul.f32 %v1101, %v1129
      %v1135 = vmul.f32 %v1102, %v1129
      %v1136 = vmul.f32 %v1103, %v1129
      %v1137 = vmul.f32 %v1104, %v1129
      %v1138 = vmul.f32 %v1105, %v1129
      %v1139 = vmul.f32 %v1106, %v1129
      %v1140 = vmul.f32 %v1107, %v1129
      %v1141 = vmul.f32 %v1108, %v1129
      %v1142 = vmul.f32 %v1109, %v1129
      %v1143 = vmul.f32 %v1110, %v1129
      %v1144 = vmul.f32 %v1111, %v1129
      %v1145 = vmul.f32 %v1112, %v1129
      %v1146 = vmul.f32 %v1113, %v1129
      %v1147 = vmul.f32 %v1114, %v1129
      %v1148 = vmul.f32 %v1115, %v1129
      %v1149 = vmul.f32 %v1116, %v1129
      %v1150 = vmul.f32 %v1117, %v1129
      %v1151 = vmul.f32 %v1118, %v1129
      %v1152 = vmul.f32 %v1119, %v1129
      %v1153 = vmul.f32 %v1120, %v1129
      %v1154 = vmul.f32 %v1121, %v1129
      %v1155 = vmul.f32 %v1122, %v1129
      %v1156 = vmul.f32 %v1123, %v1129
      %v1157 = vmul.f32 %v1124, %v1129
      %v1158 = vmul.f32 %v1125, %v1129
      %v1159 = vmul.f32 %v1126, %v1129
      %v1160 = vmul.f32 %v1127, %v1129
      %v1161 = vmul.f32 %v1128, %v1129
      %v1162 = vadd.f32 %v1064, %v1130
      %v1163 = vadd.f32 %v1065, %v1131
      %v1164 = vadd.f32 %v1066, %v1132
      %v1165 = vadd.f32 %v1067, %v1133
      %v1166 = vadd.f32 %v1068, %v1134
      %v1167 = vadd.f32 %v1069, %v1135
      %v1168 = vadd.f32 %v1070, %v1136
      %v1169 = vadd.f32 %v1071, %v1137
      %v1170 = vadd.f32 %v1072, %v1138
      %v1171 = vadd.f32 %v1073, %v1139
      %v1172 = vadd.f32 %v1074, %v1140
      %v1173 = vadd.f32 %v1075, %v1141
      %v1174 = vadd.f32 %v1076, %v1142
      %v1175 = vadd.f32 %v1077, %v1143
      %v1176 = vadd.f32 %v1078, %v1144
      %v1177 = vadd.f32 %v1079, %v1145
      %v1178 = vadd.f32 %v1080, %v1146
      %v1179 = vadd.f32 %v1081, %v1147
      %v1180 = vadd.f32 %v1082, %v1148
      %v1181 = vadd.f32 %v1083, %v1149
      %v1182 = vadd.f32 %v1084, %v1150
      %v1183 = vadd.f32 %v1085, %v1151
      %v1184 = vadd.f32 %v1086, %v1152
      %v1185 = vadd.f32 %v1087, %v1153
      %v1186 = vadd.f32 %v1088, %v1154
      %v1187 = vadd.f32 %v1089, %v1155
      %v1188 = vadd.f32 %v1090, %v1156
      %v1189 = vadd.f32 %v1091, %v1157
      %v1190 = vadd.f32 %v1092, %v1158
      %v1191 = vadd.f32 %v1093, %v1159
      %v1192 = vadd.f32 %v1094, %v1160
      %v1193 = vadd.f32 %v1095, %v1161
      %v1194 = vld [vmem:[%s4 + $0x3] sm:$0x1]
      %v1195 = vld [vmem:[#allocation2 + $0x3] sm:$0xff]
      %v1196 = vld [vmem:[#allocation2 + $0xb] sm:$0xff]
      %v1197 = vld [vmem:[#allocation2 + $0x1b] sm:$0xff]
      %v1198 = vld [vmem:[#allocation2 + $0x23] sm:$0xff]
      %v1199 = vld [vmem:[#allocation2 + $0x33] sm:$0xff]
      %v1200 = vld [vmem:[#allocation2 + $0x3b] sm:$0xff]
      %v1201 = vld [vmem:[#allocation2 + $0x4b] sm:$0xff]
      %v1202 = vld [vmem:[#allocation2 + $0x53] sm:$0xff]
      %v1203 = vld [vmem:[#allocation2 + $0x63] sm:$0xff]
      %v1204 = vld [vmem:[#allocation2 + $0x6b] sm:$0xff]
      %v1205 = vld [vmem:[#allocation2 + $0x7b] sm:$0xff]
      %v1206 = vld [vmem:[#allocation2 + $0x83] sm:$0xff]
      %v1207 = vld [vmem:[#allocation2 + $0x93] sm:$0xff]
      %v1208 = vld [vmem:[#allocation2 + $0x9b] sm:$0xff]
      %v1209 = vld [vmem:[#allocation2 + $0xab] sm:$0xff]
      %v1210 = vld [vmem:[#allocation2 + $0xb3] sm:$0xff]
      %v1211 = vld [vmem:[#allocation2 + $0xc3] sm:$0xff]
      %v1212 = vld [vmem:[#allocation2 + $0xcb] sm:$0xff]
      %v1213 = vld [vmem:[#allocation2 + $0xdb] sm:$0xff]
      %v1214 = vld [vmem:[#allocation2 + $0xe3] sm:$0xff]
      %v1215 = vld [vmem:[#allocation2 + $0xf3] sm:$0xff]
      %v1216 = vld [vmem:[#allocation2 + $0xfb] sm:$0xff]
      %v1217 = vld [vmem:[#allocation2 + $0x10b] sm:$0xff]
      %v1218 = vld [vmem:[#allocation2 + $0x113] sm:$0xff]
      %v1219 = vld [vmem:[#allocation2 + $0x123] sm:$0xff]
      %v1220 = vld [vmem:[#allocation2 + $0x12b] sm:$0xff]
      %v1221 = vld [vmem:[#allocation2 + $0x13b] sm:$0xff]
      %v1222 = vld [vmem:[#allocation2 + $0x143] sm:$0xff]
      %v1223 = vld [vmem:[#allocation2 + $0x153] sm:$0xff]
      %v1224 = vld [vmem:[#allocation2 + $0x15b] sm:$0xff]
      %v1225 = vld [vmem:[#allocation2 + $0x16b] sm:$0xff]
      %v1226 = vld [vmem:[#allocation2 + $0x173] sm:$0xff]
      %v1227 = vperm.slane %v1194, 0
      %v1228 = vmul.f32 %v1195, %v1227
      %v1229 = vmul.f32 %v1196, %v1227
      %v1230 = vmul.f32 %v1197, %v1227
      %v1231 = vmul.f32 %v1198, %v1227
      %v1232 = vmul.f32 %v1199, %v1227
      %v1233 = vmul.f32 %v1200, %v1227
      %v1234 = vmul.f32 %v1201, %v1227
      %v1235 = vmul.f32 %v1202, %v1227
      %v1236 = vmul.f32 %v1203, %v1227
      %v1237 = vmul.f32 %v1204, %v1227
      %v1238 = vmul.f32 %v1205, %v1227
      %v1239 = vmul.f32 %v1206, %v1227
      %v1240 = vmul.f32 %v1207, %v1227
      %v1241 = vmul.f32 %v1208, %v1227
      %v1242 = vmul.f32 %v1209, %v1227
      %v1243 = vmul.f32 %v1210, %v1227
      %v1244 = vmul.f32 %v1211, %v1227
      %v1245 = vmul.f32 %v1212, %v1227
      %v1246 = vmul.f32 %v1213, %v1227
      %v1247 = vmul.f32 %v1214, %v1227
      %v1248 = vmul.f32 %v1215, %v1227
      %v1249 = vmul.f32 %v1216, %v1227
      %v1250 = vmul.f32 %v1217, %v1227
      %v1251 = vmul.f32 %v1218, %v1227
      %v1252 = vmul.f32 %v1219, %v1227
      %v1253 = vmul.f32 %v1220, %v1227
      %v1254 = vmul.f32 %v1221, %v1227
      %v1255 = vmul.f32 %v1222, %v1227
      %v1256 = vmul.f32 %v1223, %v1227
      %v1257 = vmul.f32 %v1224, %v1227
      %v1258 = vmul.f32 %v1225, %v1227
      %v1259 = vmul.f32 %v1226, %v1227
      %v1260 = vadd.f32 %v1162, %v1228
      %v1261 = vadd.f32 %v1163, %v1229
      %v1262 = vadd.f32 %v1164, %v1230
      %v1263 = vadd.f32 %v1165, %v1231
      %v1264 = vadd.f32 %v1166, %v1232
      %v1265 = vadd.f32 %v1167, %v1233
      %v1266 = vadd.f32 %v1168, %v1234
      %v1267 = vadd.f32 %v1169, %v1235
      %v1268 = vadd.f32 %v1170, %v1236
      %v1269 = vadd.f32 %v1171, %v1237
      %v1270 = vadd.f32 %v1172, %v1238
      %v1271 = vadd.f32 %v1173, %v1239
      %v1272 = vadd.f32 %v1174, %v1240
      %v1273 = vadd.f32 %v1175, %v1241
      %v1274 = vadd.f32 %v1176, %v1242
      %v1275 = vadd.f32 %v1177, %v1243
      %v1276 = vadd.f32 %v1178, %v1244
      %v1277 = vadd.f32 %v1179, %v1245
      %v1278 = vadd.f32 %v1180, %v1246
      %v1279 = vadd.f32 %v1181, %v1247
      %v1280 = vadd.f32 %v1182, %v1248
      %v1281 = vadd.f32 %v1183, %v1249
      %v1282 = vadd.f32 %v1184, %v1250
      %v1283 = vadd.f32 %v1185, %v1251
      %v1284 = vadd.f32 %v1186, %v1252
      %v1285 = vadd.f32 %v1187, %v1253
      %v1286 = vadd.f32 %v1188, %v1254
      %v1287 = vadd.f32 %v1189, %v1255
      %v1288 = vadd.f32 %v1190, %v1256
      %v1289 = vadd.f32 %v1191, %v1257
      %v1290 = vadd.f32 %v1192, %v1258
      %v1291 = vadd.f32 %v1193, %v1259
      %v1292 = vld [vmem:[%s4 + $0x4] sm:$0x1]
      %v1293 = vld [vmem:[#allocation2 + $0x4] sm:$0xff]
      %v1294 = vld [vmem:[#allocation2 + $0xc] sm:$0xff]
      %v1295 = vld [vmem:[#allocation2 + $0x1c] sm:$0xff]
      %v1296 = vld [vmem:[#allocation2 + $0x24] sm:$0xff]
      %v1297 = vld [vmem:[#allocation2 + $0x34] sm:$0xff]
      %v1298 = vld [vmem:[#allocation2 + $0x3c] sm:$0xff]
      %v1299 = vld [vmem:[#allocation2 + $0x4c] sm:$0xff]
      %v1300 = vld [vmem:[#allocation2 + $0x54] sm:$0xff]
      %v1301 = vld [vmem:[#allocation2 + $0x64] sm:$0xff]
      %v1302 = vld [vmem:[#allocation2 + $0x6c] sm:$0xff]
      %v1303 = vld [vmem:[#allocation2 + $0x7c] sm:$0xff]
      %v1304 = vld [vmem:[#allocation2 + $0x84] sm:$0xff]
      %v1305 = vld [vmem:[#allocation2 + $0x94] sm:$0xff]
      %v1306 = vld [vmem:[#allocation2 + $0x9c] sm:$0xff]
      %v1307 = vld [vmem:[#allocation2 + $0xac] sm:$0xff]
      %v1308 = vld [vmem:[#allocation2 + $0xb4] sm:$0xff]
      %v1309 = vld [vmem:[#allocation2 + $0xc4] sm:$0xff]
      %v1310 = vld [vmem:[#allocation2 + $0xcc] sm:$0xff]
      %v1311 = vld [vmem:[#allocation2 + $0xdc] sm:$0xff]
      %v1312 = vld [vmem:[#allocation2 + $0xe4] sm:$0xff]
      %v1313 = vld [vmem:[#allocation2 + $0xf4] sm:$0xff]
      %v1314 = vld [vmem:[#allocation2 + $0xfc] sm:$0xff]
      %v1315 = vld [vmem:[#allocation2 + $0x10c] sm:$0xff]
      %v1316 = vld [vmem:[#allocation2 + $0x114] sm:$0xff]
      %v1317 = vld [vmem:[#allocation2 + $0x124] sm:$0xff]
      %v1318 = vld [vmem:[#allocation2 + $0x12c] sm:$0xff]
      %v1319 = vld [vmem:[#allocation2 + $0x13c] sm:$0xff]
      %v1320 = vld [vmem:[#allocation2 + $0x144] sm:$0xff]
      %v1321 = vld [vmem:[#allocation2 + $0x154] sm:$0xff]
      %v1322 = vld [vmem:[#allocation2 + $0x15c] sm:$0xff]
      %v1323 = vld [vmem:[#allocation2 + $0x16c] sm:$0xff]
      %v1324 = vld [vmem:[#allocation2 + $0x174] sm:$0xff]
      %v1325 = vperm.slane %v1292, 0
      %v1326 = vmul.f32 %v1293, %v1325
      %v1327 = vmul.f32 %v1294, %v1325
      %v1328 = vmul.f32 %v1295, %v1325
      %v1329 = vmul.f32 %v1296, %v1325
      %v1330 = vmul.f32 %v1297, %v1325
      %v1331 = vmul.f32 %v1298, %v1325
      %v1332 = vmul.f32 %v1299, %v1325
      %v1333 = vmul.f32 %v1300, %v1325
      %v1334 = vmul.f32 %v1301, %v1325
      %v1335 = vmul.f32 %v1302, %v1325
      %v1336 = vmul.f32 %v1303, %v1325
      %v1337 = vmul.f32 %v1304, %v1325
      %v1338 = vmul.f32 %v1305, %v1325
      %v1339 = vmul.f32 %v1306, %v1325
      %v1340 = vmul.f32 %v1307, %v1325
      %v1341 = vmul.f32 %v1308, %v1325
      %v1342 = vmul.f32 %v1309, %v1325
      %v1343 = vmul.f32 %v1310, %v1325
      %v1344 = vmul.f32 %v1311, %v1325
      %v1345 = vmul.f32 %v1312, %v1325
      %v1346 = vmul.f32 %v1313, %v1325
      %v1347 = vmul.f32 %v1314, %v1325
      %v1348 = vmul.f32 %v1315, %v1325
      %v1349 = vmul.f32 %v1316, %v1325
      %v1350 = vmul.f32 %v1317, %v1325
      %v1351 = vmul.f32 %v1318, %v1325
      %v1352 = vmul.f32 %v1319, %v1325
      %v1353 = vmul.f32 %v1320, %v1325
      %v1354 = vmul.f32 %v1321, %v1325
      %v1355 = vmul.f32 %v1322, %v1325
      %v1356 = vmul.f32 %v1323, %v1325
      %v1357 = vmul.f32 %v1324, %v1325
      %v1358 = vadd.f32 %v1260, %v1326
      %v1359 = vadd.f32 %v1261, %v1327
      %v1360 = vadd.f32 %v1262, %v1328
      %v1361 = vadd.f32 %v1263, %v1329
      %v1362 = vadd.f32 %v1264, %v1330
      %v1363 = vadd.f32 %v1265, %v1331
      %v1364 = vadd.f32 %v1266, %v1332
      %v1365 = vadd.f32 %v1267, %v1333
      %v1366 = vadd.f32 %v1268, %v1334
      %v1367 = vadd.f32 %v1269, %v1335
      %v1368 = vadd.f32 %v1270, %v1336
      %v1369 = vadd.f32 %v1271, %v1337
      %v1370 = vadd.f32 %v1272, %v1338
      %v1371 = vadd.f32 %v1273, %v1339
      %v1372 = vadd.f32 %v1274, %v1340
      %v1373 = vadd.f32 %v1275, %v1341
      %v1374 = vadd.f32 %v1276, %v1342
      %v1375 = vadd.f32 %v1277, %v1343
      %v1376 = vadd.f32 %v1278, %v1344
      %v1377 = vadd.f32 %v1279, %v1345
      %v1378 = vadd.f32 %v1280, %v1346
      %v1379 = vadd.f32 %v1281, %v1347
      %v1380 = vadd.f32 %v1282, %v1348
      %v1381 = vadd.f32 %v1283, %v1349
      %v1382 = vadd.f32 %v1284, %v1350
      %v1383 = vadd.f32 %v1285, %v1351
      %v1384 = vadd.f32 %v1286, %v1352
      %v1385 = vadd.f32 %v1287, %v1353
      %v1386 = vadd.f32 %v1288, %v1354
      %v1387 = vadd.f32 %v1289, %v1355
      %v1388 = vadd.f32 %v1290, %v1356
      %v1389 = vadd.f32 %v1291, %v1357
      %v1390 = vld [vmem:[%s4 + $0x5] sm:$0x1]
      %s1391 = scalar_lea.vmem [#allocation2], 24
      %v1392 = vld [vmem:[%s1391] sm:$0xff]
      %v1393 = vld [vmem:[%s1391 + $0x8] sm:$0xff]
      %v1394 = vld [vmem:[%s1391 + $0x18] sm:$0xff]
      %v1395 = vld [vmem:[%s1391 + $0x20] sm:$0xff]
      %v1396 = vld [vmem:[%s1391 + $0x30] sm:$0xff]
      %v1397 = vld [vmem:[%s1391 + $0x38] sm:$0xff]
      %v1398 = vld [vmem:[%s1391 + $0x48] sm:$0xff]
      %v1399 = vld [vmem:[%s1391 + $0x50] sm:$0xff]
      %v1400 = vld [vmem:[%s1391 + $0x60] sm:$0xff]
      %v1401 = vld [vmem:[%s1391 + $0x68] sm:$0xff]
      %v1402 = vld [vmem:[%s1391 + $0x78] sm:$0xff]
      %v1403 = vld [vmem:[%s1391 + $0x80] sm:$0xff]
      %v1404 = vld [vmem:[%s1391 + $0x90] sm:$0xff]
      %v1405 = vld [vmem:[%s1391 + $0x98] sm:$0xff]
      %v1406 = vld [vmem:[%s1391 + $0xa8] sm:$0xff]
      %v1407 = vld [vmem:[%s1391 + $0xb0] sm:$0xff]
      %v1408 = vld [vmem:[%s1391 + $0xc0] sm:$0xff]
      %v1409 = vld [vmem:[%s1391 + $0xc8] sm:$0xff]
      %v1410 = vld [vmem:[%s1391 + $0xd8] sm:$0xff]
      %v1411 = vld [vmem:[%s1391 + $0xe0] sm:$0xff]
      %v1412 = vld [vmem:[%s1391 + $0xf0] sm:$0xff]
      %v1413 = vld [vmem:[%s1391 + $0xf8] sm:$0xff]
      %v1414 = vld [vmem:[%s1391 + $0x108] sm:$0xff]
      %v1415 = vld [vmem:[%s1391 + $0x110] sm:$0xff]
      %v1416 = vld [vmem:[%s1391 + $0x120] sm:$0xff]
      %v1417 = vld [vmem:[%s1391 + $0x128] sm:$0xff]
      %v1418 = vld [vmem:[%s1391 + $0x138] sm:$0xff]
      %v1419 = vld [vmem:[%s1391 + $0x140] sm:$0xff]
      %v1420 = vld [vmem:[%s1391 + $0x150] sm:$0xff]
      %v1421 = vld [vmem:[%s1391 + $0x158] sm:$0xff]
      %v1422 = vld [vmem:[%s1391 + $0x168] sm:$0xff]
      %v1423 = vld [vmem:[%s1391 + $0x170] sm:$0xff]
      %v1424 = vperm.slane %v1390, 0
      %v1425 = vmul.f32 %v1392, %v1424
      %v1426 = vmul.f32 %v1393, %v1424
      %v1427 = vmul.f32 %v1394, %v1424
      %v1428 = vmul.f32 %v1395, %v1424
      %v1429 = vmul.f32 %v1396, %v1424
      %v1430 = vmul.f32 %v1397, %v1424
      %v1431 = vmul.f32 %v1398, %v1424
      %v1432 = vmul.f32 %v1399, %v1424
      %v1433 = vmul.f32 %v1400, %v1424
      %v1434 = vmul.f32 %v1401, %v1424
      %v1435 = vmul.f32 %v1402, %v1424
      %v1436 = vmul.f32 %v1403, %v1424
      %v1437 = vmul.f32 %v1404, %v1424
      %v1438 = vmul.f32 %v1405, %v1424
      %v1439 = vmul.f32 %v1406, %v1424
      %v1440 = vmul.f32 %v1407, %v1424
      %v1441 = vmul.f32 %v1408, %v1424
      %v1442 = vmul.f32 %v1409, %v1424
      %v1443 = vmul.f32 %v1410, %v1424
      %v1444 = vmul.f32 %v1411, %v1424
      %v1445 = vmul.f32 %v1412, %v1424
      %v1446 = vmul.f32 %v1413, %v1424
      %v1447 = vmul.f32 %v1414, %v1424
      %v1448 = vmul.f32 %v1415, %v1424
      %v1449 = vmul.f32 %v1416, %v1424
      %v1450 = vmul.f32 %v1417, %v1424
      %v1451 = vmul.f32 %v1418, %v1424
      %v1452 = vmul.f32 %v1419, %v1424
      %v1453 = vmul.f32 %v1420, %v1424
      %v1454 = vmul.f32 %v1421, %v1424
      %v1455 = vmul.f32 %v1422, %v1424
      %v1456 = vmul.f32 %v1423, %v1424
      %v1457 = vadd.f32 %v1358, %v1425
      %v1458 = vadd.f32 %v1359, %v1426
      %v1459 = vadd.f32 %v1360, %v1427
      %v1460 = vadd.f32 %v1361, %v1428
      %v1461 = vadd.f32 %v1362, %v1429
      %v1462 = vadd.f32 %v1363, %v1430
      %v1463 = vadd.f32 %v1364, %v1431
      %v1464 = vadd.f32 %v1365, %v1432
      %v1465 = vadd.f32 %v1366, %v1433
      %v1466 = vadd.f32 %v1367, %v1434
      %v1467 = vadd.f32 %v1368, %v1435
      %v1468 = vadd.f32 %v1369, %v1436
      %v1469 = vadd.f32 %v1370, %v1437
      %v1470 = vadd.f32 %v1371, %v1438
      %v1471 = vadd.f32 %v1372, %v1439
      %v1472 = vadd.f32 %v1373, %v1440
      %v1473 = vadd.f32 %v1374, %v1441
      %v1474 = vadd.f32 %v1375, %v1442
      %v1475 = vadd.f32 %v1376, %v1443
      %v1476 = vadd.f32 %v1377, %v1444
      %v1477 = vadd.f32 %v1378, %v1445
      %v1478 = vadd.f32 %v1379, %v1446
      %v1479 = vadd.f32 %v1380, %v1447
      %v1480 = vadd.f32 %v1381, %v1448
      %v1481 = vadd.f32 %v1382, %v1449
      %v1482 = vadd.f32 %v1383, %v1450
      %v1483 = vadd.f32 %v1384, %v1451
      %v1484 = vadd.f32 %v1385, %v1452
      %v1485 = vadd.f32 %v1386, %v1453
      %v1486 = vadd.f32 %v1387, %v1454
      %v1487 = vadd.f32 %v1388, %v1455
      %v1488 = vadd.f32 %v1389, %v1456
      %v1489 = vld [vmem:[%s4 + $0x6] sm:$0x1]
      %v1490 = vld [vmem:[%s1391 + $0x1] sm:$0xff]
      %v1491 = vld [vmem:[%s1391 + $0x9] sm:$0xff]
      %v1492 = vld [vmem:[%s1391 + $0x19] sm:$0xff]
      %v1493 = vld [vmem:[%s1391 + $0x21] sm:$0xff]
      %v1494 = vld [vmem:[%s1391 + $0x31] sm:$0xff]
      %v1495 = vld [vmem:[%s1391 + $0x39] sm:$0xff]
      %v1496 = vld [vmem:[%s1391 + $0x49] sm:$0xff]
      %v1497 = vld [vmem:[%s1391 + $0x51] sm:$0xff]
      %v1498 = vld [vmem:[%s1391 + $0x61] sm:$0xff]
      %v1499 = vld [vmem:[%s1391 + $0x69] sm:$0xff]
      %v1500 = vld [vmem:[%s1391 + $0x79] sm:$0xff]
      %v1501 = vld [vmem:[%s1391 + $0x81] sm:$0xff]
      %v1502 = vld [vmem:[%s1391 + $0x91] sm:$0xff]
      %v1503 = vld [vmem:[%s1391 + $0x99] sm:$0xff]
      %v1504 = vld [vmem:[%s1391 + $0xa9] sm:$0xff]
      %v1505 = vld [vmem:[%s1391 + $0xb1] sm:$0xff]
      %v1506 = vld [vmem:[%s1391 + $0xc1] sm:$0xff]
      %v1507 = vld [vmem:[%s1391 + $0xc9] sm:$0xff]
      %v1508 = vld [vmem:[%s1391 + $0xd9] sm:$0xff]
      %v1509 = vld [vmem:[%s1391 + $0xe1] sm:$0xff]
      %v1510 = vld [vmem:[%s1391 + $0xf1] sm:$0xff]
      %v1511 = vld [vmem:[%s1391 + $0xf9] sm:$0xff]
      %v1512 = vld [vmem:[%s1391 + $0x109] sm:$0xff]
      %v1513 = vld [vmem:[%s1391 + $0x111] sm:$0xff]
      %v1514 = vld [vmem:[%s1391 + $0x121] sm:$0xff]
      %v1515 = vld [vmem:[%s1391 + $0x129] sm:$0xff]
      %v1516 = vld [vmem:[%s1391 + $0x139] sm:$0xff]
      %v1517 = vld [vmem:[%s1391 + $0x141] sm:$0xff]
      %v1518 = vld [vmem:[%s1391 + $0x151] sm:$0xff]
      %v1519 = vld [vmem:[%s1391 + $0x159] sm:$0xff]
      %v1520 = vld [vmem:[%s1391 + $0x169] sm:$0xff]
      %v1521 = vld [vmem:[%s1391 + $0x171] sm:$0xff]
      %v1522 = vperm.slane %v1489, 0
      %v1523 = vmul.f32 %v1490, %v1522
      %v1524 = vmul.f32 %v1491, %v1522
      %v1525 = vmul.f32 %v1492, %v1522
      %v1526 = vmul.f32 %v1493, %v1522
      %v1527 = vmul.f32 %v1494, %v1522
      %v1528 = vmul.f32 %v1495, %v1522
      %v1529 = vmul.f32 %v1496, %v1522
      %v1530 = vmul.f32 %v1497, %v1522
      %v1531 = vmul.f32 %v1498, %v1522
      %v1532 = vmul.f32 %v1499, %v1522
      %v1533 = vmul.f32 %v1500, %v1522
      %v1534 = vmul.f32 %v1501, %v1522
      %v1535 = vmul.f32 %v1502, %v1522
      %v1536 = vmul.f32 %v1503, %v1522
      %v1537 = vmul.f32 %v1504, %v1522
      %v1538 = vmul.f32 %v1505, %v1522
      %v1539 = vmul.f32 %v1506, %v1522
      %v1540 = vmul.f32 %v1507, %v1522
      %v1541 = vmul.f32 %v1508, %v1522
      %v1542 = vmul.f32 %v1509, %v1522
      %v1543 = vmul.f32 %v1510, %v1522
      %v1544 = vmul.f32 %v1511, %v1522
      %v1545 = vmul.f32 %v1512, %v1522
      %v1546 = vmul.f32 %v1513, %v1522
      %v1547 = vmul.f32 %v1514, %v1522
      %v1548 = vmul.f32 %v1515, %v1522
      %v1549 = vmul.f32 %v1516, %v1522
      %v1550 = vmul.f32 %v1517, %v1522
      %v1551 = vmul.f32 %v1518, %v1522
      %v1552 = vmul.f32 %v1519, %v1522
      %v1553 = vmul.f32 %v1520, %v1522
      %v1554 = vmul.f32 %v1521, %v1522
      %v1555 = vadd.f32 %v1457, %v1523
      %v1556 = vadd.f32 %v1458, %v1524
      %v1557 = vadd.f32 %v1459, %v1525
      %v1558 = vadd.f32 %v1460, %v1526
      %v1559 = vadd.f32 %v1461, %v1527
      %v1560 = vadd.f32 %v1462, %v1528
      %v1561 = vadd.f32 %v1463, %v1529
      %v1562 = vadd.f32 %v1464, %v1530
      %v1563 = vadd.f32 %v1465, %v1531
      %v1564 = vadd.f32 %v1466, %v1532
      %v1565 = vadd.f32 %v1467, %v1533
      %v1566 = vadd.f32 %v1468, %v1534
      %v1567 = vadd.f32 %v1469, %v1535
      %v1568 = vadd.f32 %v1470, %v1536
      %v1569 = vadd.f32 %v1471, %v1537
      %v1570 = vadd.f32 %v1472, %v1538
      %v1571 = vadd.f32 %v1473, %v1539
      %v1572 = vadd.f32 %v1474, %v1540
      %v1573 = vadd.f32 %v1475, %v1541
      %v1574 = vadd.f32 %v1476, %v1542
      %v1575 = vadd.f32 %v1477, %v1543
      %v1576 = vadd.f32 %v1478, %v1544
      %v1577 = vadd.f32 %v1479, %v1545
      %v1578 = vadd.f32 %v1480, %v1546
      %v1579 = vadd.f32 %v1481, %v1547
      %v1580 = vadd.f32 %v1482, %v1548
      %v1581 = vadd.f32 %v1483, %v1549
      %v1582 = vadd.f32 %v1484, %v1550
      %v1583 = vadd.f32 %v1485, %v1551
      %v1584 = vadd.f32 %v1486, %v1552
      %v1585 = vadd.f32 %v1487, %v1553
      %v1586 = vadd.f32 %v1488, %v1554
      %v1587 = vld [vmem:[%s4 + $0x7] sm:$0x1]
      %v1588 = vld [vmem:[%s1391 + $0x2] sm:$0xff]
      %v1589 = vld [vmem:[%s1391 + $0xa] sm:$0xff]
      %v1590 = vld [vmem:[%s1391 + $0x1a] sm:$0xff]
      %v1591 = vld [vmem:[%s1391 + $0x22] sm:$0xff]
      %v1592 = vld [vmem:[%s1391 + $0x32] sm:$0xff]
      %v1593 = vld [vmem:[%s1391 + $0x3a] sm:$0xff]
      %v1594 = vld [vmem:[%s1391 + $0x4a] sm:$0xff]
      %v1595 = vld [vmem:[%s1391 + $0x52] sm:$0xff]
      %v1596 = vld [vmem:[%s1391 + $0x62] sm:$0xff]
      %v1597 = vld [vmem:[%s1391 + $0x6a] sm:$0xff]
      %v1598 = vld [vmem:[%s1391 + $0x7a] sm:$0xff]
      %v1599 = vld [vmem:[%s1391 + $0x82] sm:$0xff]
      %v1600 = vld [vmem:[%s1391 + $0x92] sm:$0xff]
      %v1601 = vld [vmem:[%s1391 + $0x9a] sm:$0xff]
      %v1602 = vld [vmem:[%s1391 + $0xaa] sm:$0xff]
      %v1603 = vld [vmem:[%s1391 + $0xb2] sm:$0xff]
      %v1604 = vld [vmem:[%s1391 + $0xc2] sm:$0xff]
      %v1605 = vld [vmem:[%s1391 + $0xca] sm:$0xff]
      %v1606 = vld [vmem:[%s1391 + $0xda] sm:$0xff]
      %v1607 = vld [vmem:[%s1391 + $0xe2] sm:$0xff]
      %v1608 = vld [vmem:[%s1391 + $0xf2] sm:$0xff]
      %v1609 = vld [vmem:[%s1391 + $0xfa] sm:$0xff]
      %v1610 = vld [vmem:[%s1391 + $0x10a] sm:$0xff]
      %v1611 = vld [vmem:[%s1391 + $0x112] sm:$0xff]
      %v1612 = vld [vmem:[%s1391 + $0x122] sm:$0xff]
      %v1613 = vld [vmem:[%s1391 + $0x12a] sm:$0xff]
      %v1614 = vld [vmem:[%s1391 + $0x13a] sm:$0xff]
      %v1615 = vld [vmem:[%s1391 + $0x142] sm:$0xff]
      %v1616 = vld [vmem:[%s1391 + $0x152] sm:$0xff]
      %v1617 = vld [vmem:[%s1391 + $0x15a] sm:$0xff]
      %v1618 = vld [vmem:[%s1391 + $0x16a] sm:$0xff]
      %v1619 = vld [vmem:[%s1391 + $0x172] sm:$0xff]
      %v1620 = vperm.slane %v1587, 0
      %v1621 = vmul.f32 %v1588, %v1620
      %v1622 = vmul.f32 %v1589, %v1620
      %v1623 = vmul.f32 %v1590, %v1620
      %v1624 = vmul.f32 %v1591, %v1620
      %v1625 = vmul.f32 %v1592, %v1620
      %v1626 = vmul.f32 %v1593, %v1620
      %v1627 = vmul.f32 %v1594, %v1620
      %v1628 = vmul.f32 %v1595, %v1620
      %v1629 = vmul.f32 %v1596, %v1620
      %v1630 = vmul.f32 %v1597, %v1620
      %v1631 = vmul.f32 %v1598, %v1620
      %v1632 = vmul.f32 %v1599, %v1620
      %v1633 = vmul.f32 %v1600, %v1620
      %v1634 = vmul.f32 %v1601, %v1620
      %v1635 = vmul.f32 %v1602, %v1620
      %v1636 = vmul.f32 %v1603, %v1620
      %v1637 = vmul.f32 %v1604, %v1620
      %v1638 = vmul.f32 %v1605, %v1620
      %v1639 = vmul.f32 %v1606, %v1620
      %v1640 = vmul.f32 %v1607, %v1620
      %v1641 = vmul.f32 %v1608, %v1620
      %v1642 = vmul.f32 %v1609, %v1620
      %v1643 = vmul.f32 %v1610, %v1620
      %v1644 = vmul.f32 %v1611, %v1620
      %v1645 = vmul.f32 %v1612, %v1620
      %v1646 = vmul.f32 %v1613, %v1620
      %v1647 = vmul.f32 %v1614, %v1620
      %v1648 = vmul.f32 %v1615, %v1620
      %v1649 = vmul.f32 %v1616, %v1620
      %v1650 = vmul.f32 %v1617, %v1620
      %v1651 = vmul.f32 %v1618, %v1620
      %v1652 = vmul.f32 %v1619, %v1620
      %v1653 = vadd.f32 %v1555, %v1621
      %v1654 = vadd.f32 %v1556, %v1622
      %v1655 = vadd.f32 %v1557, %v1623
      %v1656 = vadd.f32 %v1558, %v1624
      %v1657 = vadd.f32 %v1559, %v1625
      %v1658 = vadd.f32 %v1560, %v1626
      %v1659 = vadd.f32 %v1561, %v1627
      %v1660 = vadd.f32 %v1562, %v1628
      %v1661 = vadd.f32 %v1563, %v1629
      %v1662 = vadd.f32 %v1564, %v1630
      %v1663 = vadd.f32 %v1565, %v1631
      %v1664 = vadd.f32 %v1566, %v1632
      %v1665 = vadd.f32 %v1567, %v1633
      %v1666 = vadd.f32 %v1568, %v1634
      %v1667 = vadd.f32 %v1569, %v1635
      %v1668 = vadd.f32 %v1570, %v1636
      %v1669 = vadd.f32 %v1571, %v1637
      %v1670 = vadd.f32 %v1572, %v1638
      %v1671 = vadd.f32 %v1573, %v1639
      %v1672 = vadd.f32 %v1574, %v1640
      %v1673 = vadd.f32 %v1575, %v1641
      %v1674 = vadd.f32 %v1576, %v1642
      %v1675 = vadd.f32 %v1577, %v1643
      %v1676 = vadd.f32 %v1578, %v1644
      %v1677 = vadd.f32 %v1579, %v1645
      %v1678 = vadd.f32 %v1580, %v1646
      %v1679 = vadd.f32 %v1581, %v1647
      %v1680 = vadd.f32 %v1582, %v1648
      %v1681 = vadd.f32 %v1583, %v1649
      %v1682 = vadd.f32 %v1584, %v1650
      %v1683 = vadd.f32 %v1585, %v1651
      %v1684 = vadd.f32 %v1586, %v1652
      %v1685 = vld [vmem:[%s4 + $0x8] sm:$0x1]
      %v1686 = vld [vmem:[%s1391 + $0x3] sm:$0xff]
      %v1687 = vld [vmem:[%s1391 + $0xb] sm:$0xff]
      %v1688 = vld [vmem:[%s1391 + $0x1b] sm:$0xff]
      %v1689 = vld [vmem:[%s1391 + $0x23] sm:$0xff]
      %v1690 = vld [vmem:[%s1391 + $0x33] sm:$0xff]
      %v1691 = vld [vmem:[%s1391 + $0x3b] sm:$0xff]
      %v1692 = vld [vmem:[%s1391 + $0x4b] sm:$0xff]
      %v1693 = vld [vmem:[%s1391 + $0x53] sm:$0xff]
      %v1694 = vld [vmem:[%s1391 + $0x63] sm:$0xff]
      %v1695 = vld [vmem:[%s1391 + $0x6b] sm:$0xff]
      %v1696 = vld [vmem:[%s1391 + $0x7b] sm:$0xff]
      %v1697 = vld [vmem:[%s1391 + $0x83] sm:$0xff]
      %v1698 = vld [vmem:[%s1391 + $0x93] sm:$0xff]
      %v1699 = vld [vmem:[%s1391 + $0x9b] sm:$0xff]
      %v1700 = vld [vmem:[%s1391 + $0xab] sm:$0xff]
      %v1701 = vld [vmem:[%s1391 + $0xb3] sm:$0xff]
      %v1702 = vld [vmem:[%s1391 + $0xc3] sm:$0xff]
      %v1703 = vld [vmem:[%s1391 + $0xcb] sm:$0xff]
      %v1704 = vld [vmem:[%s1391 + $0xdb] sm:$0xff]
      %v1705 = vld [vmem:[%s1391 + $0xe3] sm:$0xff]
      %v1706 = vld [vmem:[%s1391 + $0xf3] sm:$0xff]
      %v1707 = vld [vmem:[%s1391 + $0xfb] sm:$0xff]
      %v1708 = vld [vmem:[%s1391 + $0x10b] sm:$0xff]
      %v1709 = vld [vmem:[%s1391 + $0x113] sm:$0xff]
      %v1710 = vld [vmem:[%s1391 + $0x123] sm:$0xff]
      %v1711 = vld [vmem:[%s1391 + $0x12b] sm:$0xff]
      %v1712 = vld [vmem:[%s1391 + $0x13b] sm:$0xff]
      %v1713 = vld [vmem:[%s1391 + $0x143] sm:$0xff]
      %v1714 = vld [vmem:[%s1391 + $0x153] sm:$0xff]
      %v1715 = vld [vmem:[%s1391 + $0x15b] sm:$0xff]
      %v1716 = vld [vmem:[%s1391 + $0x16b] sm:$0xff]
      %v1717 = vld [vmem:[%s1391 + $0x173] sm:$0xff]
      %v1718 = vperm.slane %v1685, 0
      %v1719 = vmul.f32 %v1686, %v1718
      %v1720 = vmul.f32 %v1687, %v1718
      %v1721 = vmul.f32 %v1688, %v1718
      %v1722 = vmul.f32 %v1689, %v1718
      %v1723 = vmul.f32 %v1690, %v1718
      %v1724 = vmul.f32 %v1691, %v1718
      %v1725 = vmul.f32 %v1692, %v1718
      %v1726 = vmul.f32 %v1693, %v1718
      %v1727 = vmul.f32 %v1694, %v1718
      %v1728 = vmul.f32 %v1695, %v1718
      %v1729 = vmul.f32 %v1696, %v1718
      %v1730 = vmul.f32 %v1697, %v1718
      %v1731 = vmul.f32 %v1698, %v1718
      %v1732 = vmul.f32 %v1699, %v1718
      %v1733 = vmul.f32 %v1700, %v1718
      %v1734 = vmul.f32 %v1701, %v1718
      %v1735 = vmul.f32 %v1702, %v1718
      %v1736 = vmul.f32 %v1703, %v1718
      %v1737 = vmul.f32 %v1704, %v1718
      %v1738 = vmul.f32 %v1705, %v1718
      %v1739 = vmul.f32 %v1706, %v1718
      %v1740 = vmul.f32 %v1707, %v1718
      %v1741 = vmul.f32 %v1708, %v1718
      %v1742 = vmul.f32 %v1709, %v1718
      %v1743 = vmul.f32 %v1710, %v1718
      %v1744 = vmul.f32 %v1711, %v1718
      %v1745 = vmul.f32 %v1712, %v1718
      %v1746 = vmul.f32 %v1713, %v1718
      %v1747 = vmul.f32 %v1714, %v1718
      %v1748 = vmul.f32 %v1715, %v1718
      %v1749 = vmul.f32 %v1716, %v1718
      %v1750 = vmul.f32 %v1717, %v1718
      %v1751 = vadd.f32 %v1653, %v1719
      %v1752 = vadd.f32 %v1654, %v1720
      %v1753 = vadd.f32 %v1655, %v1721
      %v1754 = vadd.f32 %v1656, %v1722
      %v1755 = vadd.f32 %v1657, %v1723
      %v1756 = vadd.f32 %v1658, %v1724
      %v1757 = vadd.f32 %v1659, %v1725
      %v1758 = vadd.f32 %v1660, %v1726
      %v1759 = vadd.f32 %v1661, %v1727
      %v1760 = vadd.f32 %v1662, %v1728
      %v1761 = vadd.f32 %v1663, %v1729
      %v1762 = vadd.f32 %v1664, %v1730
      %v1763 = vadd.f32 %v1665, %v1731
      %v1764 = vadd.f32 %v1666, %v1732
      %v1765 = vadd.f32 %v1667, %v1733
      %v1766 = vadd.f32 %v1668, %v1734
      %v1767 = vadd.f32 %v1669, %v1735
      %v1768 = vadd.f32 %v1670, %v1736
      %v1769 = vadd.f32 %v1671, %v1737
      %v1770 = vadd.f32 %v1672, %v1738
      %v1771 = vadd.f32 %v1673, %v1739
      %v1772 = vadd.f32 %v1674, %v1740
      %v1773 = vadd.f32 %v1675, %v1741
      %v1774 = vadd.f32 %v1676, %v1742
      %v1775 = vadd.f32 %v1677, %v1743
      %v1776 = vadd.f32 %v1678, %v1744
      %v1777 = vadd.f32 %v1679, %v1745
      %v1778 = vadd.f32 %v1680, %v1746
      %v1779 = vadd.f32 %v1681, %v1747
      %v1780 = vadd.f32 %v1682, %v1748
      %v1781 = vadd.f32 %v1683, %v1749
      %v1782 = vadd.f32 %v1684, %v1750
      %v1783 = vld [vmem:[%s4 + $0x9] sm:$0x1]
      %v1784 = vld [vmem:[%s1391 + $0x4] sm:$0xff]
      %v1785 = vld [vmem:[%s1391 + $0xc] sm:$0xff]
      %v1786 = vld [vmem:[%s1391 + $0x1c] sm:$0xff]
      %v1787 = vld [vmem:[%s1391 + $0x24] sm:$0xff]
      %v1788 = vld [vmem:[%s1391 + $0x34] sm:$0xff]
      %v1789 = vld [vmem:[%s1391 + $0x3c] sm:$0xff]
      %v1790 = vld [vmem:[%s1391 + $0x4c] sm:$0xff]
      %v1791 = vld [vmem:[%s1391 + $0x54] sm:$0xff]
      %v1792 = vld [vmem:[%s1391 + $0x64] sm:$0xff]
      %v1793 = vld [vmem:[%s1391 + $0x6c] sm:$0xff]
      %v1794 = vld [vmem:[%s1391 + $0x7c] sm:$0xff]
      %v1795 = vld [vmem:[%s1391 + $0x84] sm:$0xff]
      %v1796 = vld [vmem:[%s1391 + $0x94] sm:$0xff]
      %v1797 = vld [vmem:[%s1391 + $0x9c] sm:$0xff]
      %v1798 = vld [vmem:[%s1391 + $0xac] sm:$0xff]
      %v1799 = vld [vmem:[%s1391 + $0xb4] sm:$0xff]
      %v1800 = vld [vmem:[%s1391 + $0xc4] sm:$0xff]
      %v1801 = vld [vmem:[%s1391 + $0xcc] sm:$0xff]
      %v1802 = vld [vmem:[%s1391 + $0xdc] sm:$0xff]
      %v1803 = vld [vmem:[%s1391 + $0xe4] sm:$0xff]
      %v1804 = vld [vmem:[%s1391 + $0xf4] sm:$0xff]
      %v1805 = vld [vmem:[%s1391 + $0xfc] sm:$0xff]
      %v1806 = vld [vmem:[%s1391 + $0x10c] sm:$0xff]
      %v1807 = vld [vmem:[%s1391 + $0x114] sm:$0xff]
      %v1808 = vld [vmem:[%s1391 + $0x124] sm:$0xff]
      %v1809 = vld [vmem:[%s1391 + $0x12c] sm:$0xff]
      %v1810 = vld [vmem:[%s1391 + $0x13c] sm:$0xff]
      %v1811 = vld [vmem:[%s1391 + $0x144] sm:$0xff]
      %v1812 = vld [vmem:[%s1391 + $0x154] sm:$0xff]
      %v1813 = vld [vmem:[%s1391 + $0x15c] sm:$0xff]
      %v1814 = vld [vmem:[%s1391 + $0x16c] sm:$0xff]
      %v1815 = vld [vmem:[%s1391 + $0x174] sm:$0xff]
      %v1816 = vperm.slane %v1783, 0
      %v1817 = vmul.f32 %v1784, %v1816
      %v1818 = vmul.f32 %v1785, %v1816
      %v1819 = vmul.f32 %v1786, %v1816
      %v1820 = vmul.f32 %v1787, %v1816
      %v1821 = vmul.f32 %v1788, %v1816
      %v1822 = vmul.f32 %v1789, %v1816
      %v1823 = vmul.f32 %v1790, %v1816
      %v1824 = vmul.f32 %v1791, %v1816
      %v1825 = vmul.f32 %v1792, %v1816
      %v1826 = vmul.f32 %v1793, %v1816
      %v1827 = vmul.f32 %v1794, %v1816
      %v1828 = vmul.f32 %v1795, %v1816
      %v1829 = vmul.f32 %v1796, %v1816
      %v1830 = vmul.f32 %v1797, %v1816
      %v1831 = vmul.f32 %v1798, %v1816
      %v1832 = vmul.f32 %v1799, %v1816
      %v1833 = vmul.f32 %v1800, %v1816
      %v1834 = vmul.f32 %v1801, %v1816
      %v1835 = vmul.f32 %v1802, %v1816
      %v1836 = vmul.f32 %v1803, %v1816
      %v1837 = vmul.f32 %v1804, %v1816
      %v1838 = vmul.f32 %v1805, %v1816
      %v1839 = vmul.f32 %v1806, %v1816
      %v1840 = vmul.f32 %v1807, %v1816
      %v1841 = vmul.f32 %v1808, %v1816
      %v1842 = vmul.f32 %v1809, %v1816
      %v1843 = vmul.f32 %v1810, %v1816
      %v1844 = vmul.f32 %v1811, %v1816
      %v1845 = vmul.f32 %v1812, %v1816
      %v1846 = vmul.f32 %v1813, %v1816
      %v1847 = vmul.f32 %v1814, %v1816
      %v1848 = vmul.f32 %v1815, %v1816
      %v1849 = vadd.f32 %v1751, %v1817
      %v1850 = vadd.f32 %v1752, %v1818
      %v1851 = vadd.f32 %v1753, %v1819
      %v1852 = vadd.f32 %v1754, %v1820
      %v1853 = vadd.f32 %v1755, %v1821
      %v1854 = vadd.f32 %v1756, %v1822
      %v1855 = vadd.f32 %v1757, %v1823
      %v1856 = vadd.f32 %v1758, %v1824
      %v1857 = vadd.f32 %v1759, %v1825
      %v1858 = vadd.f32 %v1760, %v1826
      %v1859 = vadd.f32 %v1761, %v1827
      %v1860 = vadd.f32 %v1762, %v1828
      %v1861 = vadd.f32 %v1763, %v1829
      %v1862 = vadd.f32 %v1764, %v1830
      %v1863 = vadd.f32 %v1765, %v1831
      %v1864 = vadd.f32 %v1766, %v1832
      %v1865 = vadd.f32 %v1767, %v1833
      %v1866 = vadd.f32 %v1768, %v1834
      %v1867 = vadd.f32 %v1769, %v1835
      %v1868 = vadd.f32 %v1770, %v1836
      %v1869 = vadd.f32 %v1771, %v1837
      %v1870 = vadd.f32 %v1772, %v1838
      %v1871 = vadd.f32 %v1773, %v1839
      %v1872 = vadd.f32 %v1774, %v1840
      %v1873 = vadd.f32 %v1775, %v1841
      %v1874 = vadd.f32 %v1776, %v1842
      %v1875 = vadd.f32 %v1777, %v1843
      %v1876 = vadd.f32 %v1778, %v1844
      %v1877 = vadd.f32 %v1779, %v1845
      %v1878 = vadd.f32 %v1780, %v1846
      %v1879 = vadd.f32 %v1781, %v1847
      %v1880 = vadd.f32 %v1782, %v1848
      %v1881 = vld [vmem:[%s4 + $0xa] sm:$0x1]
      %v1882 = vld [vmem:[%s835] sm:$0xff]
      %v1883 = vld [vmem:[%s835 + $0x8] sm:$0xff]
      %v1884 = vld [vmem:[%s835 + $0x18] sm:$0xff]
      %v1885 = vld [vmem:[%s835 + $0x20] sm:$0xff]
      %v1886 = vld [vmem:[%s835 + $0x30] sm:$0xff]
      %v1887 = vld [vmem:[%s835 + $0x38] sm:$0xff]
      %v1888 = vld [vmem:[%s835 + $0x48] sm:$0xff]
      %v1889 = vld [vmem:[%s835 + $0x50] sm:$0xff]
      %v1890 = vld [vmem:[%s835 + $0x60] sm:$0xff]
      %v1891 = vld [vmem:[%s835 + $0x68] sm:$0xff]
      %v1892 = vld [vmem:[%s835 + $0x78] sm:$0xff]
      %v1893 = vld [vmem:[%s835 + $0x80] sm:$0xff]
      %v1894 = vld [vmem:[%s835 + $0x90] sm:$0xff]
      %v1895 = vld [vmem:[%s835 + $0x98] sm:$0xff]
      %v1896 = vld [vmem:[%s835 + $0xa8] sm:$0xff]
      %v1897 = vld [vmem:[%s835 + $0xb0] sm:$0xff]
      %v1898 = vld [vmem:[%s835 + $0xc0] sm:$0xff]
      %v1899 = vld [vmem:[%s835 + $0xc8] sm:$0xff]
      %v1900 = vld [vmem:[%s835 + $0xd8] sm:$0xff]
      %v1901 = vld [vmem:[%s835 + $0xe0] sm:$0xff]
      %v1902 = vld [vmem:[%s835 + $0xf0] sm:$0xff]
      %v1903 = vld [vmem:[%s835 + $0xf8] sm:$0xff]
      %v1904 = vld [vmem:[%s835 + $0x108] sm:$0xff]
      %v1905 = vld [vmem:[%s835 + $0x110] sm:$0xff]
      %v1906 = vld [vmem:[%s835 + $0x120] sm:$0xff]
      %v1907 = vld [vmem:[%s835 + $0x128] sm:$0xff]
      %v1908 = vld [vmem:[%s835 + $0x138] sm:$0xff]
      %v1909 = vld [vmem:[%s835 + $0x140] sm:$0xff]
      %v1910 = vld [vmem:[%s835 + $0x150] sm:$0xff]
      %v1911 = vld [vmem:[%s835 + $0x158] sm:$0xff]
      %v1912 = vld [vmem:[%s835 + $0x168] sm:$0xff]
      %v1913 = vld [vmem:[%s835 + $0x170] sm:$0xff]
      %v1914 = vperm.slane %v1881, 0
      %v1915 = vmul.f32 %v1882, %v1914
      %v1916 = vmul.f32 %v1883, %v1914
      %v1917 = vmul.f32 %v1884, %v1914
      %v1918 = vmul.f32 %v1885, %v1914
      %v1919 = vmul.f32 %v1886, %v1914
      %v1920 = vmul.f32 %v1887, %v1914
      %v1921 = vmul.f32 %v1888, %v1914
      %v1922 = vmul.f32 %v1889, %v1914
      %v1923 = vmul.f32 %v1890, %v1914
      %v1924 = vmul.f32 %v1891, %v1914
      %v1925 = vmul.f32 %v1892, %v1914
      %v1926 = vmul.f32 %v1893, %v1914
      %v1927 = vmul.f32 %v1894, %v1914
      %v1928 = vmul.f32 %v1895, %v1914
      %v1929 = vmul.f32 %v1896, %v1914
      %v1930 = vmul.f32 %v1897, %v1914
      %v1931 = vmul.f32 %v1898, %v1914
      %v1932 = vmul.f32 %v1899, %v1914
      %v1933 = vmul.f32 %v1900, %v1914
      %v1934 = vmul.f32 %v1901, %v1914
      %v1935 = vmul.f32 %v1902, %v1914
      %v1936 = vmul.f32 %v1903, %v1914
      %v1937 = vmul.f32 %v1904, %v1914
      %v1938 = vmul.f32 %v1905, %v1914
      %v1939 = vmul.f32 %v1906, %v1914
      %v1940 = vmul.f32 %v1907, %v1914
      %v1941 = vmul.f32 %v1908, %v1914
      %v1942 = vmul.f32 %v1909, %v1914
      %v1943 = vmul.f32 %v1910, %v1914
      %v1944 = vmul.f32 %v1911, %v1914
      %v1945 = vmul.f32 %v1912, %v1914
      %v1946 = vmul.f32 %v1913, %v1914
      %v1947 = vadd.f32 %v1849, %v1915
      %v1948 = vadd.f32 %v1850, %v1916
      %v1949 = vadd.f32 %v1851, %v1917
      %v1950 = vadd.f32 %v1852, %v1918
      %v1951 = vadd.f32 %v1853, %v1919
      %v1952 = vadd.f32 %v1854, %v1920
      %v1953 = vadd.f32 %v1855, %v1921
      %v1954 = vadd.f32 %v1856, %v1922
      %v1955 = vadd.f32 %v1857, %v1923
      %v1956 = vadd.f32 %v1858, %v1924
      %v1957 = vadd.f32 %v1859, %v1925
      %v1958 = vadd.f32 %v1860, %v1926
      %v1959 = vadd.f32 %v1861, %v1927
      %v1960 = vadd.f32 %v1862, %v1928
      %v1961 = vadd.f32 %v1863, %v1929
      %v1962 = vadd.f32 %v1864, %v1930
      %v1963 = vadd.f32 %v1865, %v1931
      %v1964 = vadd.f32 %v1866, %v1932
      %v1965 = vadd.f32 %v1867, %v1933
      %v1966 = vadd.f32 %v1868, %v1934
      %v1967 = vadd.f32 %v1869, %v1935
      %v1968 = vadd.f32 %v1870, %v1936
      %v1969 = vadd.f32 %v1871, %v1937
      %v1970 = vadd.f32 %v1872, %v1938
      %v1971 = vadd.f32 %v1873, %v1939
      %v1972 = vadd.f32 %v1874, %v1940
      %v1973 = vadd.f32 %v1875, %v1941
      %v1974 = vadd.f32 %v1876, %v1942
      %v1975 = vadd.f32 %v1877, %v1943
      %v1976 = vadd.f32 %v1878, %v1944
      %v1977 = vadd.f32 %v1879, %v1945
      %v1978 = vadd.f32 %v1880, %v1946
      %v1979 = vld [vmem:[%s4 + $0xb] sm:$0x1]
      %v1980 = vld [vmem:[%s835 + $0x1] sm:$0xff]
      %v1981 = vld [vmem:[%s835 + $0x9] sm:$0xff]
      %v1982 = vld [vmem:[%s835 + $0x19] sm:$0xff]
      %v1983 = vld [vmem:[%s835 + $0x21] sm:$0xff]
      %v1984 = vld [vmem:[%s835 + $0x31] sm:$0xff]
      %v1985 = vld [vmem:[%s835 + $0x39] sm:$0xff]
      %v1986 = vld [vmem:[%s835 + $0x49] sm:$0xff]
      %v1987 = vld [vmem:[%s835 + $0x51] sm:$0xff]
      %v1988 = vld [vmem:[%s835 + $0x61] sm:$0xff]
      %v1989 = vld [vmem:[%s835 + $0x69] sm:$0xff]
      %v1990 = vld [vmem:[%s835 + $0x79] sm:$0xff]
      %v1991 = vld [vmem:[%s835 + $0x81] sm:$0xff]
      %v1992 = vld [vmem:[%s835 + $0x91] sm:$0xff]
      %v1993 = vld [vmem:[%s835 + $0x99] sm:$0xff]
      %v1994 = vld [vmem:[%s835 + $0xa9] sm:$0xff]
      %v1995 = vld [vmem:[%s835 + $0xb1] sm:$0xff]
      %v1996 = vld [vmem:[%s835 + $0xc1] sm:$0xff]
      %v1997 = vld [vmem:[%s835 + $0xc9] sm:$0xff]
      %v1998 = vld [vmem:[%s835 + $0xd9] sm:$0xff]
      %v1999 = vld [vmem:[%s835 + $0xe1] sm:$0xff]
      %v2000 = vld [vmem:[%s835 + $0xf1] sm:$0xff]
      %v2001 = vld [vmem:[%s835 + $0xf9] sm:$0xff]
      %v2002 = vld [vmem:[%s835 + $0x109] sm:$0xff]
      %v2003 = vld [vmem:[%s835 + $0x111] sm:$0xff]
      %v2004 = vld [vmem:[%s835 + $0x121] sm:$0xff]
      %v2005 = vld [vmem:[%s835 + $0x129] sm:$0xff]
      %v2006 = vld [vmem:[%s835 + $0x139] sm:$0xff]
      %v2007 = vld [vmem:[%s835 + $0x141] sm:$0xff]
      %v2008 = vld [vmem:[%s835 + $0x151] sm:$0xff]
      %v2009 = vld [vmem:[%s835 + $0x159] sm:$0xff]
      %v2010 = vld [vmem:[%s835 + $0x169] sm:$0xff]
      %v2011 = vld [vmem:[%s835 + $0x171] sm:$0xff]
      %v2012 = vperm.slane %v1979, 0
      %v2013 = vmul.f32 %v1980, %v2012
      %v2014 = vmul.f32 %v1981, %v2012
      %v2015 = vmul.f32 %v1982, %v2012
      %v2016 = vmul.f32 %v1983, %v2012
      %v2017 = vmul.f32 %v1984, %v2012
      %v2018 = vmul.f32 %v1985, %v2012
      %v2019 = vmul.f32 %v1986, %v2012
      %v2020 = vmul.f32 %v1987, %v2012
      %v2021 = vmul.f32 %v1988, %v2012
      %v2022 = vmul.f32 %v1989, %v2012
      %v2023 = vmul.f32 %v1990, %v2012
      %v2024 = vmul.f32 %v1991, %v2012
      %v2025 = vmul.f32 %v1992, %v2012
      %v2026 = vmul.f32 %v1993, %v2012
      %v2027 = vmul.f32 %v1994, %v2012
      %v2028 = vmul.f32 %v1995, %v2012
      %v2029 = vmul.f32 %v1996, %v2012
      %v2030 = vmul.f32 %v1997, %v2012
      %v2031 = vmul.f32 %v1998, %v2012
      %v2032 = vmul.f32 %v1999, %v2012
      %v2033 = vmul.f32 %v2000, %v2012
      %v2034 = vmul.f32 %v2001, %v2012
      %v2035 = vmul.f32 %v2002, %v2012
      %v2036 = vmul.f32 %v2003, %v2012
      %v2037 = vmul.f32 %v2004, %v2012
      %v2038 = vmul.f32 %v2005, %v2012
      %v2039 = vmul.f32 %v2006, %v2012
      %v2040 = vmul.f32 %v2007, %v2012
      %v2041 = vmul.f32 %v2008, %v2012
      %v2042 = vmul.f32 %v2009, %v2012
      %v2043 = vmul.f32 %v2010, %v2012
      %v2044 = vmul.f32 %v2011, %v2012
      %v2045 = vadd.f32 %v1947, %v2013
      %v2046 = vadd.f32 %v1948, %v2014
      %v2047 = vadd.f32 %v1949, %v2015
      %v2048 = vadd.f32 %v1950, %v2016
      %v2049 = vadd.f32 %v1951, %v2017
      %v2050 = vadd.f32 %v1952, %v2018
      %v2051 = vadd.f32 %v1953, %v2019
      %v2052 = vadd.f32 %v1954, %v2020
      %v2053 = vadd.f32 %v1955, %v2021
      %v2054 = vadd.f32 %v1956, %v2022
      %v2055 = vadd.f32 %v1957, %v2023
      %v2056 = vadd.f32 %v1958, %v2024
      %v2057 = vadd.f32 %v1959, %v2025
      %v2058 = vadd.f32 %v1960, %v2026
      %v2059 = vadd.f32 %v1961, %v2027
      %v2060 = vadd.f32 %v1962, %v2028
      %v2061 = vadd.f32 %v1963, %v2029
      %v2062 = vadd.f32 %v1964, %v2030
      %v2063 = vadd.f32 %v1965, %v2031
      %v2064 = vadd.f32 %v1966, %v2032
      %v2065 = vadd.f32 %v1967, %v2033
      %v2066 = vadd.f32 %v1968, %v2034
      %v2067 = vadd.f32 %v1969, %v2035
      %v2068 = vadd.f32 %v1970, %v2036
      %v2069 = vadd.f32 %v1971, %v2037
      %v2070 = vadd.f32 %v1972, %v2038
      %v2071 = vadd.f32 %v1973, %v2039
      %v2072 = vadd.f32 %v1974, %v2040
      %v2073 = vadd.f32 %v1975, %v2041
      %v2074 = vadd.f32 %v1976, %v2042
      %v2075 = vadd.f32 %v1977, %v2043
      %v2076 = vadd.f32 %v1978, %v2044
      %v2077 = vld [vmem:[%s4 + $0xc] sm:$0x1]
      %v2078 = vld [vmem:[%s835 + $0x2] sm:$0xff]
      %v2079 = vld [vmem:[%s835 + $0xa] sm:$0xff]
      %v2080 = vld [vmem:[%s835 + $0x1a] sm:$0xff]
      %v2081 = vld [vmem:[%s835 + $0x22] sm:$0xff]
      %v2082 = vld [vmem:[%s835 + $0x32] sm:$0xff]
      %v2083 = vld [vmem:[%s835 + $0x3a] sm:$0xff]
      %v2084 = vld [vmem:[%s835 + $0x4a] sm:$0xff]
      %v2085 = vld [vmem:[%s835 + $0x52] sm:$0xff]
      %v2086 = vld [vmem:[%s835 + $0x62] sm:$0xff]
      %v2087 = vld [vmem:[%s835 + $0x6a] sm:$0xff]
      %v2088 = vld [vmem:[%s835 + $0x7a] sm:$0xff]
      %v2089 = vld [vmem:[%s835 + $0x82] sm:$0xff]
      %v2090 = vld [vmem:[%s835 + $0x92] sm:$0xff]
      %v2091 = vld [vmem:[%s835 + $0x9a] sm:$0xff]
      %v2092 = vld [vmem:[%s835 + $0xaa] sm:$0xff]
      %v2093 = vld [vmem:[%s835 + $0xb2] sm:$0xff]
      %v2094 = vld [vmem:[%s835 + $0xc2] sm:$0xff]
      %v2095 = vld [vmem:[%s835 + $0xca] sm:$0xff]
      %v2096 = vld [vmem:[%s835 + $0xda] sm:$0xff]
      %v2097 = vld [vmem:[%s835 + $0xe2] sm:$0xff]
      %v2098 = vld [vmem:[%s835 + $0xf2] sm:$0xff]
      %v2099 = vld [vmem:[%s835 + $0xfa] sm:$0xff]
      %v2100 = vld [vmem:[%s835 + $0x10a] sm:$0xff]
      %v2101 = vld [vmem:[%s835 + $0x112] sm:$0xff]
      %v2102 = vld [vmem:[%s835 + $0x122] sm:$0xff]
      %v2103 = vld [vmem:[%s835 + $0x12a] sm:$0xff]
      %v2104 = vld [vmem:[%s835 + $0x13a] sm:$0xff]
      %v2105 = vld [vmem:[%s835 + $0x142] sm:$0xff]
      %v2106 = vld [vmem:[%s835 + $0x152] sm:$0xff]
      %v2107 = vld [vmem:[%s835 + $0x15a] sm:$0xff]
      %v2108 = vld [vmem:[%s835 + $0x16a] sm:$0xff]
      %v2109 = vld [vmem:[%s835 + $0x172] sm:$0xff]
      %v2110 = vperm.slane %v2077, 0
      %v2111 = vmul.f32 %v2078, %v2110
      %v2112 = vmul.f32 %v2079, %v2110
      %v2113 = vmul.f32 %v2080, %v2110
      %v2114 = vmul.f32 %v2081, %v2110
      %v2115 = vmul.f32 %v2082, %v2110
      %v2116 = vmul.f32 %v2083, %v2110
      %v2117 = vmul.f32 %v2084, %v2110
      %v2118 = vmul.f32 %v2085, %v2110
      %v2119 = vmul.f32 %v2086, %v2110
      %v2120 = vmul.f32 %v2087, %v2110
      %v2121 = vmul.f32 %v2088, %v2110
      %v2122 = vmul.f32 %v2089, %v2110
      %v2123 = vmul.f32 %v2090, %v2110
      %v2124 = vmul.f32 %v2091, %v2110
      %v2125 = vmul.f32 %v2092, %v2110
      %v2126 = vmul.f32 %v2093, %v2110
      %v2127 = vmul.f32 %v2094, %v2110
      %v2128 = vmul.f32 %v2095, %v2110
      %v2129 = vmul.f32 %v2096, %v2110
      %v2130 = vmul.f32 %v2097, %v2110
      %v2131 = vmul.f32 %v2098, %v2110
      %v2132 = vmul.f32 %v2099, %v2110
      %v2133 = vmul.f32 %v2100, %v2110
      %v2134 = vmul.f32 %v2101, %v2110
      %v2135 = vmul.f32 %v2102, %v2110
      %v2136 = vmul.f32 %v2103, %v2110
      %v2137 = vmul.f32 %v2104, %v2110
      %v2138 = vmul.f32 %v2105, %v2110
      %v2139 = vmul.f32 %v2106, %v2110
      %v2140 = vmul.f32 %v2107, %v2110
      %v2141 = vmul.f32 %v2108, %v2110
      %v2142 = vmul.f32 %v2109, %v2110
      %v2143 = vadd.f32 %v2045, %v2111
      %v2144 = vadd.f32 %v2046, %v2112
      %v2145 = vadd.f32 %v2047, %v2113
      %v2146 = vadd.f32 %v2048, %v2114
      %v2147 = vadd.f32 %v2049, %v2115
      %v2148 = vadd.f32 %v2050, %v2116
      %v2149 = vadd.f32 %v2051, %v2117
      %v2150 = vadd.f32 %v2052, %v2118
      %v2151 = vadd.f32 %v2053, %v2119
      %v2152 = vadd.f32 %v2054, %v2120
      %v2153 = vadd.f32 %v2055, %v2121
      %v2154 = vadd.f32 %v2056, %v2122
      %v2155 = vadd.f32 %v2057, %v2123
      %v2156 = vadd.f32 %v2058, %v2124
      %v2157 = vadd.f32 %v2059, %v2125
      %v2158 = vadd.f32 %v2060, %v2126
      %v2159 = vadd.f32 %v2061, %v2127
      %v2160 = vadd.f32 %v2062, %v2128
      %v2161 = vadd.f32 %v2063, %v2129
      %v2162 = vadd.f32 %v2064, %v2130
      %v2163 = vadd.f32 %v2065, %v2131
      %v2164 = vadd.f32 %v2066, %v2132
      %v2165 = vadd.f32 %v2067, %v2133
      %v2166 = vadd.f32 %v2068, %v2134
      %v2167 = vadd.f32 %v2069, %v2135
      %v2168 = vadd.f32 %v2070, %v2136
      %v2169 = vadd.f32 %v2071, %v2137
      %v2170 = vadd.f32 %v2072, %v2138
      %v2171 = vadd.f32 %v2073, %v2139
      %v2172 = vadd.f32 %v2074, %v2140
      %v2173 = vadd.f32 %v2075, %v2141
      %v2174 = vadd.f32 %v2076, %v2142
      %v2175 = vld [vmem:[%s4 + $0xd] sm:$0x1]
      %v2176 = vld [vmem:[%s835 + $0x3] sm:$0xff]
      %v2177 = vld [vmem:[%s835 + $0xb] sm:$0xff]
      %v2178 = vld [vmem:[%s835 + $0x1b] sm:$0xff]
      %v2179 = vld [vmem:[%s835 + $0x23] sm:$0xff]
      %v2180 = vld [vmem:[%s835 + $0x33] sm:$0xff]
      %v2181 = vld [vmem:[%s835 + $0x3b] sm:$0xff]
      %v2182 = vld [vmem:[%s835 + $0x4b] sm:$0xff]
      %v2183 = vld [vmem:[%s835 + $0x53] sm:$0xff]
      %v2184 = vld [vmem:[%s835 + $0x63] sm:$0xff]
      %v2185 = vld [vmem:[%s835 + $0x6b] sm:$0xff]
      %v2186 = vld [vmem:[%s835 + $0x7b] sm:$0xff]
      %v2187 = vld [vmem:[%s835 + $0x83] sm:$0xff]
      %v2188 = vld [vmem:[%s835 + $0x93] sm:$0xff]
      %v2189 = vld [vmem:[%s835 + $0x9b] sm:$0xff]
      %v2190 = vld [vmem:[%s835 + $0xab] sm:$0xff]
      %v2191 = vld [vmem:[%s835 + $0xb3] sm:$0xff]
      %v2192 = vld [vmem:[%s835 + $0xc3] sm:$0xff]
      %v2193 = vld [vmem:[%s835 + $0xcb] sm:$0xff]
      %v2194 = vld [vmem:[%s835 + $0xdb] sm:$0xff]
      %v2195 = vld [vmem:[%s835 + $0xe3] sm:$0xff]
      %v2196 = vld [vmem:[%s835 + $0xf3] sm:$0xff]
      %v2197 = vld [vmem:[%s835 + $0xfb] sm:$0xff]
      %v2198 = vld [vmem:[%s835 + $0x10b] sm:$0xff]
      %v2199 = vld [vmem:[%s835 + $0x113] sm:$0xff]
      %v2200 = vld [vmem:[%s835 + $0x123] sm:$0xff]
      %v2201 = vld [vmem:[%s835 + $0x12b] sm:$0xff]
      %v2202 = vld [vmem:[%s835 + $0x13b] sm:$0xff]
      %v2203 = vld [vmem:[%s835 + $0x143] sm:$0xff]
      %v2204 = vld [vmem:[%s835 + $0x153] sm:$0xff]
      %v2205 = vld [vmem:[%s835 + $0x15b] sm:$0xff]
      %v2206 = vld [vmem:[%s835 + $0x16b] sm:$0xff]
      %v2207 = vld [vmem:[%s835 + $0x173] sm:$0xff]
      %v2208 = vperm.slane %v2175, 0
      %v2209 = vmul.f32 %v2176, %v2208
      %v2210 = vmul.f32 %v2177, %v2208
      %v2211 = vmul.f32 %v2178, %v2208
      %v2212 = vmul.f32 %v2179, %v2208
      %v2213 = vmul.f32 %v2180, %v2208
      %v2214 = vmul.f32 %v2181, %v2208
      %v2215 = vmul.f32 %v2182, %v2208
      %v2216 = vmul.f32 %v2183, %v2208
      %v2217 = vmul.f32 %v2184, %v2208
      %v2218 = vmul.f32 %v2185, %v2208
      %v2219 = vmul.f32 %v2186, %v2208
      %v2220 = vmul.f32 %v2187, %v2208
      %v2221 = vmul.f32 %v2188, %v2208
      %v2222 = vmul.f32 %v2189, %v2208
      %v2223 = vmul.f32 %v2190, %v2208
      %v2224 = vmul.f32 %v2191, %v2208
      %v2225 = vmul.f32 %v2192, %v2208
      %v2226 = vmul.f32 %v2193, %v2208
      %v2227 = vmul.f32 %v2194, %v2208
      %v2228 = vmul.f32 %v2195, %v2208
      %v2229 = vmul.f32 %v2196, %v2208
      %v2230 = vmul.f32 %v2197, %v2208
      %v2231 = vmul.f32 %v2198, %v2208
      %v2232 = vmul.f32 %v2199, %v2208
      %v2233 = vmul.f32 %v2200, %v2208
      %v2234 = vmul.f32 %v2201, %v2208
      %v2235 = vmul.f32 %v2202, %v2208
      %v2236 = vmul.f32 %v2203, %v2208
      %v2237 = vmul.f32 %v2204, %v2208
      %v2238 = vmul.f32 %v2205, %v2208
      %v2239 = vmul.f32 %v2206, %v2208
      %v2240 = vmul.f32 %v2207, %v2208
      %v2241 = vadd.f32 %v2143, %v2209
      %v2242 = vadd.f32 %v2144, %v2210
      %v2243 = vadd.f32 %v2145, %v2211
      %v2244 = vadd.f32 %v2146, %v2212
      %v2245 = vadd.f32 %v2147, %v2213
      %v2246 = vadd.f32 %v2148, %v2214
      %v2247 = vadd.f32 %v2149, %v2215
      %v2248 = vadd.f32 %v2150, %v2216
      %v2249 = vadd.f32 %v2151, %v2217
      %v2250 = vadd.f32 %v2152, %v2218
      %v2251 = vadd.f32 %v2153, %v2219
      %v2252 = vadd.f32 %v2154, %v2220
      %v2253 = vadd.f32 %v2155, %v2221
      %v2254 = vadd.f32 %v2156, %v2222
      %v2255 = vadd.f32 %v2157, %v2223
      %v2256 = vadd.f32 %v2158, %v2224
      %v2257 = vadd.f32 %v2159, %v2225
      %v2258 = vadd.f32 %v2160, %v2226
      %v2259 = vadd.f32 %v2161, %v2227
      %v2260 = vadd.f32 %v2162, %v2228
      %v2261 = vadd.f32 %v2163, %v2229
      %v2262 = vadd.f32 %v2164, %v2230
      %v2263 = vadd.f32 %v2165, %v2231
      %v2264 = vadd.f32 %v2166, %v2232
      %v2265 = vadd.f32 %v2167, %v2233
      %v2266 = vadd.f32 %v2168, %v2234
      %v2267 = vadd.f32 %v2169, %v2235
      %v2268 = vadd.f32 %v2170, %v2236
      %v2269 = vadd.f32 %v2171, %v2237
      %v2270 = vadd.f32 %v2172, %v2238
      %v2271 = vadd.f32 %v2173, %v2239
      %v2272 = vadd.f32 %v2174, %v2240
      %v2273 = vld [vmem:[%s4 + $0xe] sm:$0x1]
      %v2274 = vld [vmem:[%s835 + $0x4] sm:$0xff]
      %v2275 = vld [vmem:[%s835 + $0xc] sm:$0xff]
      %v2276 = vld [vmem:[%s835 + $0x1c] sm:$0xff]
      %v2277 = vld [vmem:[%s835 + $0x24] sm:$0xff]
      %v2278 = vld [vmem:[%s835 + $0x34] sm:$0xff]
      %v2279 = vld [vmem:[%s835 + $0x3c] sm:$0xff]
      %v2280 = vld [vmem:[%s835 + $0x4c] sm:$0xff]
      %v2281 = vld [vmem:[%s835 + $0x54] sm:$0xff]
      %v2282 = vld [vmem:[%s835 + $0x64] sm:$0xff]
      %v2283 = vld [vmem:[%s835 + $0x6c] sm:$0xff]
      %v2284 = vld [vmem:[%s835 + $0x7c] sm:$0xff]
      %v2285 = vld [vmem:[%s835 + $0x84] sm:$0xff]
      %v2286 = vld [vmem:[%s835 + $0x94] sm:$0xff]
      %v2287 = vld [vmem:[%s835 + $0x9c] sm:$0xff]
      %v2288 = vld [vmem:[%s835 + $0xac] sm:$0xff]
      %v2289 = vld [vmem:[%s835 + $0xb4] sm:$0xff]
      %v2290 = vld [vmem:[%s835 + $0xc4] sm:$0xff]
      %v2291 = vld [vmem:[%s835 + $0xcc] sm:$0xff]
      %v2292 = vld [vmem:[%s835 + $0xdc] sm:$0xff]
      %v2293 = vld [vmem:[%s835 + $0xe4] sm:$0xff]
      %v2294 = vld [vmem:[%s835 + $0xf4] sm:$0xff]
      %v2295 = vld [vmem:[%s835 + $0xfc] sm:$0xff]
      %v2296 = vld [vmem:[%s835 + $0x10c] sm:$0xff]
      %v2297 = vld [vmem:[%s835 + $0x114] sm:$0xff]
      %v2298 = vld [vmem:[%s835 + $0x124] sm:$0xff]
      %v2299 = vld [vmem:[%s835 + $0x12c] sm:$0xff]
      %v2300 = vld [vmem:[%s835 + $0x13c] sm:$0xff]
      %v2301 = vld [vmem:[%s835 + $0x144] sm:$0xff]
      %v2302 = vld [vmem:[%s835 + $0x154] sm:$0xff]
      %v2303 = vld [vmem:[%s835 + $0x15c] sm:$0xff]
      %v2304 = vld [vmem:[%s835 + $0x16c] sm:$0xff]
      %v2305 = vld [vmem:[%s835 + $0x174] sm:$0xff]
      %v2306 = vperm.slane %v2273, 0
      %v2307 = vmul.f32 %v2274, %v2306
      %v2308 = vmul.f32 %v2275, %v2306
      %v2309 = vmul.f32 %v2276, %v2306
      %v2310 = vmul.f32 %v2277, %v2306
      %v2311 = vmul.f32 %v2278, %v2306
      %v2312 = vmul.f32 %v2279, %v2306
      %v2313 = vmul.f32 %v2280, %v2306
      %v2314 = vmul.f32 %v2281, %v2306
      %v2315 = vmul.f32 %v2282, %v2306
      %v2316 = vmul.f32 %v2283, %v2306
      %v2317 = vmul.f32 %v2284, %v2306
      %v2318 = vmul.f32 %v2285, %v2306
      %v2319 = vmul.f32 %v2286, %v2306
      %v2320 = vmul.f32 %v2287, %v2306
      %v2321 = vmul.f32 %v2288, %v2306
      %v2322 = vmul.f32 %v2289, %v2306
      %v2323 = vmul.f32 %v2290, %v2306
      %v2324 = vmul.f32 %v2291, %v2306
      %v2325 = vmul.f32 %v2292, %v2306
      %v2326 = vmul.f32 %v2293, %v2306
      %v2327 = vmul.f32 %v2294, %v2306
      %v2328 = vmul.f32 %v2295, %v2306
      %v2329 = vmul.f32 %v2296, %v2306
      %v2330 = vmul.f32 %v2297, %v2306
      %v2331 = vmul.f32 %v2298, %v2306
      %v2332 = vmul.f32 %v2299, %v2306
      %v2333 = vmul.f32 %v2300, %v2306
      %v2334 = vmul.f32 %v2301, %v2306
      %v2335 = vmul.f32 %v2302, %v2306
      %v2336 = vmul.f32 %v2303, %v2306
      %v2337 = vmul.f32 %v2304, %v2306
      %v2338 = vmul.f32 %v2305, %v2306
      %v2339 = vadd.f32 %v2241, %v2307
      %v2340 = vadd.f32 %v2242, %v2308
      %v2341 = vadd.f32 %v2243, %v2309
      %v2342 = vadd.f32 %v2244, %v2310
      %v2343 = vadd.f32 %v2245, %v2311
      %v2344 = vadd.f32 %v2246, %v2312
      %v2345 = vadd.f32 %v2247, %v2313
      %v2346 = vadd.f32 %v2248, %v2314
      %v2347 = vadd.f32 %v2249, %v2315
      %v2348 = vadd.f32 %v2250, %v2316
      %v2349 = vadd.f32 %v2251, %v2317
      %v2350 = vadd.f32 %v2252, %v2318
      %v2351 = vadd.f32 %v2253, %v2319
      %v2352 = vadd.f32 %v2254, %v2320
      %v2353 = vadd.f32 %v2255, %v2321
      %v2354 = vadd.f32 %v2256, %v2322
      %v2355 = vadd.f32 %v2257, %v2323
      %v2356 = vadd.f32 %v2258, %v2324
      %v2357 = vadd.f32 %v2259, %v2325
      %v2358 = vadd.f32 %v2260, %v2326
      %v2359 = vadd.f32 %v2261, %v2327
      %v2360 = vadd.f32 %v2262, %v2328
      %v2361 = vadd.f32 %v2263, %v2329
      %v2362 = vadd.f32 %v2264, %v2330
      %v2363 = vadd.f32 %v2265, %v2331
      %v2364 = vadd.f32 %v2266, %v2332
      %v2365 = vadd.f32 %v2267, %v2333
      %v2366 = vadd.f32 %v2268, %v2334
      %v2367 = vadd.f32 %v2269, %v2335
      %v2368 = vadd.f32 %v2270, %v2336
      %v2369 = vadd.f32 %v2271, %v2337
      %v2370 = vadd.f32 %v2272, %v2338
      %v2371 = vld [vmem:[%s4 + $0xf] sm:$0x1]
      %s2372 = scalar_lea.vmem [#allocation2], 72
      %v2373 = vld [vmem:[%s2372] sm:$0xff]
      %v2374 = vld [vmem:[%s2372 + $0x8] sm:$0xff]
      %v2375 = vld [vmem:[%s2372 + $0x18] sm:$0xff]
      %v2376 = vld [vmem:[%s2372 + $0x20] sm:$0xff]
      %v2377 = vld [vmem:[%s2372 + $0x30] sm:$0xff]
      %v2378 = vld [vmem:[%s2372 + $0x38] sm:$0xff]
      %v2379 = vld [vmem:[%s2372 + $0x48] sm:$0xff]
      %v2380 = vld [vmem:[%s2372 + $0x50] sm:$0xff]
      %v2381 = vld [vmem:[%s2372 + $0x60] sm:$0xff]
      %v2382 = vld [vmem:[%s2372 + $0x68] sm:$0xff]
      %v2383 = vld [vmem:[%s2372 + $0x78] sm:$0xff]
      %v2384 = vld [vmem:[%s2372 + $0x80] sm:$0xff]
      %v2385 = vld [vmem:[%s2372 + $0x90] sm:$0xff]
      %v2386 = vld [vmem:[%s2372 + $0x98] sm:$0xff]
      %v2387 = vld [vmem:[%s2372 + $0xa8] sm:$0xff]
      %v2388 = vld [vmem:[%s2372 + $0xb0] sm:$0xff]
      %v2389 = vld [vmem:[%s2372 + $0xc0] sm:$0xff]
      %v2390 = vld [vmem:[%s2372 + $0xc8] sm:$0xff]
      %v2391 = vld [vmem:[%s2372 + $0xd8] sm:$0xff]
      %v2392 = vld [vmem:[%s2372 + $0xe0] sm:$0xff]
      %v2393 = vld [vmem:[%s2372 + $0xf0] sm:$0xff]
      %v2394 = vld [vmem:[%s2372 + $0xf8] sm:$0xff]
      %v2395 = vld [vmem:[%s2372 + $0x108] sm:$0xff]
      %v2396 = vld [vmem:[%s2372 + $0x110] sm:$0xff]
      %v2397 = vld [vmem:[%s2372 + $0x120] sm:$0xff]
      %v2398 = vld [vmem:[%s2372 + $0x128] sm:$0xff]
      %v2399 = vld [vmem:[%s2372 + $0x138] sm:$0xff]
      %v2400 = vld [vmem:[%s2372 + $0x140] sm:$0xff]
      %v2401 = vld [vmem:[%s2372 + $0x150] sm:$0xff]
      %v2402 = vld [vmem:[%s2372 + $0x158] sm:$0xff]
      %v2403 = vld [vmem:[%s2372 + $0x168] sm:$0xff]
      %v2404 = vld [vmem:[%s2372 + $0x170] sm:$0xff]
      %v2405 = vperm.slane %v2371, 0
      %v2406 = vmul.f32 %v2373, %v2405
      %v2407 = vmul.f32 %v2374, %v2405
      %v2408 = vmul.f32 %v2375, %v2405
      %v2409 = vmul.f32 %v2376, %v2405
      %v2410 = vmul.f32 %v2377, %v2405
      %v2411 = vmul.f32 %v2378, %v2405
      %v2412 = vmul.f32 %v2379, %v2405
      %v2413 = vmul.f32 %v2380, %v2405
      %v2414 = vmul.f32 %v2381, %v2405
      %v2415 = vmul.f32 %v2382, %v2405
      %v2416 = vmul.f32 %v2383, %v2405
      %v2417 = vmul.f32 %v2384, %v2405
      %v2418 = vmul.f32 %v2385, %v2405
      %v2419 = vmul.f32 %v2386, %v2405
      %v2420 = vmul.f32 %v2387, %v2405
      %v2421 = vmul.f32 %v2388, %v2405
      %v2422 = vmul.f32 %v2389, %v2405
      %v2423 = vmul.f32 %v2390, %v2405
      %v2424 = vmul.f32 %v2391, %v2405
      %v2425 = vmul.f32 %v2392, %v2405
      %v2426 = vmul.f32 %v2393, %v2405
      %v2427 = vmul.f32 %v2394, %v2405
      %v2428 = vmul.f32 %v2395, %v2405
      %v2429 = vmul.f32 %v2396, %v2405
      %v2430 = vmul.f32 %v2397, %v2405
      %v2431 = vmul.f32 %v2398, %v2405
      %v2432 = vmul.f32 %v2399, %v2405
      %v2433 = vmul.f32 %v2400, %v2405
      %v2434 = vmul.f32 %v2401, %v2405
      %v2435 = vmul.f32 %v2402, %v2405
      %v2436 = vmul.f32 %v2403, %v2405
      %v2437 = vmul.f32 %v2404, %v2405
      %v2438 = vadd.f32 %v2339, %v2406
      %v2439 = vadd.f32 %v2340, %v2407
      %v2440 = vadd.f32 %v2341, %v2408
      %v2441 = vadd.f32 %v2342, %v2409
      %v2442 = vadd.f32 %v2343, %v2410
      %v2443 = vadd.f32 %v2344, %v2411
      %v2444 = vadd.f32 %v2345, %v2412
      %v2445 = vadd.f32 %v2346, %v2413
      %v2446 = vadd.f32 %v2347, %v2414
      %v2447 = vadd.f32 %v2348, %v2415
      %v2448 = vadd.f32 %v2349, %v2416
      %v2449 = vadd.f32 %v2350, %v2417
      %v2450 = vadd.f32 %v2351, %v2418
      %v2451 = vadd.f32 %v2352, %v2419
      %v2452 = vadd.f32 %v2353, %v2420
      %v2453 = vadd.f32 %v2354, %v2421
      %v2454 = vadd.f32 %v2355, %v2422
      %v2455 = vadd.f32 %v2356, %v2423
      %v2456 = vadd.f32 %v2357, %v2424
      %v2457 = vadd.f32 %v2358, %v2425
      %v2458 = vadd.f32 %v2359, %v2426
      %v2459 = vadd.f32 %v2360, %v2427
      %v2460 = vadd.f32 %v2361, %v2428
      %v2461 = vadd.f32 %v2362, %v2429
      %v2462 = vadd.f32 %v2363, %v2430
      %v2463 = vadd.f32 %v2364, %v2431
      %v2464 = vadd.f32 %v2365, %v2432
      %v2465 = vadd.f32 %v2366, %v2433
      %v2466 = vadd.f32 %v2367, %v2434
      %v2467 = vadd.f32 %v2368, %v2435
      %v2468 = vadd.f32 %v2369, %v2436
      %v2469 = vadd.f32 %v2370, %v2437
      %v2470 = vld [vmem:[%s4 + $0x10] sm:$0x1]
      %v2471 = vld [vmem:[%s2372 + $0x1] sm:$0xff]
      %v2472 = vld [vmem:[%s2372 + $0x9] sm:$0xff]
      %v2473 = vld [vmem:[%s2372 + $0x19] sm:$0xff]
      %v2474 = vld [vmem:[%s2372 + $0x21] sm:$0xff]
      %v2475 = vld [vmem:[%s2372 + $0x31] sm:$0xff]
      %v2476 = vld [vmem:[%s2372 + $0x39] sm:$0xff]
      %v2477 = vld [vmem:[%s2372 + $0x49] sm:$0xff]
      %v2478 = vld [vmem:[%s2372 + $0x51] sm:$0xff]
      %v2479 = vld [vmem:[%s2372 + $0x61] sm:$0xff]
      %v2480 = vld [vmem:[%s2372 + $0x69] sm:$0xff]
      %v2481 = vld [vmem:[%s2372 + $0x79] sm:$0xff]
      %v2482 = vld [vmem:[%s2372 + $0x81] sm:$0xff]
      %v2483 = vld [vmem:[%s2372 + $0x91] sm:$0xff]
      %v2484 = vld [vmem:[%s2372 + $0x99] sm:$0xff]
      %v2485 = vld [vmem:[%s2372 + $0xa9] sm:$0xff]
      %v2486 = vld [vmem:[%s2372 + $0xb1] sm:$0xff]
      %v2487 = vld [vmem:[%s2372 + $0xc1] sm:$0xff]
      %v2488 = vld [vmem:[%s2372 + $0xc9] sm:$0xff]
      %v2489 = vld [vmem:[%s2372 + $0xd9] sm:$0xff]
      %v2490 = vld [vmem:[%s2372 + $0xe1] sm:$0xff]
      %v2491 = vld [vmem:[%s2372 + $0xf1] sm:$0xff]
      %v2492 = vld [vmem:[%s2372 + $0xf9] sm:$0xff]
      %v2493 = vld [vmem:[%s2372 + $0x109] sm:$0xff]
      %v2494 = vld [vmem:[%s2372 + $0x111] sm:$0xff]
      %v2495 = vld [vmem:[%s2372 + $0x121] sm:$0xff]
      %v2496 = vld [vmem:[%s2372 + $0x129] sm:$0xff]
      %v2497 = vld [vmem:[%s2372 + $0x139] sm:$0xff]
      %v2498 = vld [vmem:[%s2372 + $0x141] sm:$0xff]
      %v2499 = vld [vmem:[%s2372 + $0x151] sm:$0xff]
      %v2500 = vld [vmem:[%s2372 + $0x159] sm:$0xff]
      %v2501 = vld [vmem:[%s2372 + $0x169] sm:$0xff]
      %v2502 = vld [vmem:[%s2372 + $0x171] sm:$0xff]
      %v2503 = vperm.slane %v2470, 0
      %v2504 = vmul.f32 %v2471, %v2503
      %v2505 = vmul.f32 %v2472, %v2503
      %v2506 = vmul.f32 %v2473, %v2503
      %v2507 = vmul.f32 %v2474, %v2503
      %v2508 = vmul.f32 %v2475, %v2503
      %v2509 = vmul.f32 %v2476, %v2503
      %v2510 = vmul.f32 %v2477, %v2503
      %v2511 = vmul.f32 %v2478, %v2503
      %v2512 = vmul.f32 %v2479, %v2503
      %v2513 = vmul.f32 %v2480, %v2503
      %v2514 = vmul.f32 %v2481, %v2503
      %v2515 = vmul.f32 %v2482, %v2503
      %v2516 = vmul.f32 %v2483, %v2503
      %v2517 = vmul.f32 %v2484, %v2503
      %v2518 = vmul.f32 %v2485, %v2503
      %v2519 = vmul.f32 %v2486, %v2503
      %v2520 = vmul.f32 %v2487, %v2503
      %v2521 = vmul.f32 %v2488, %v2503
      %v2522 = vmul.f32 %v2489, %v2503
      %v2523 = vmul.f32 %v2490, %v2503
      %v2524 = vmul.f32 %v2491, %v2503
      %v2525 = vmul.f32 %v2492, %v2503
      %v2526 = vmul.f32 %v2493, %v2503
      %v2527 = vmul.f32 %v2494, %v2503
      %v2528 = vmul.f32 %v2495, %v2503
      %v2529 = vmul.f32 %v2496, %v2503
      %v2530 = vmul.f32 %v2497, %v2503
      %v2531 = vmul.f32 %v2498, %v2503
      %v2532 = vmul.f32 %v2499, %v2503
      %v2533 = vmul.f32 %v2500, %v2503
      %v2534 = vmul.f32 %v2501, %v2503
      %v2535 = vmul.f32 %v2502, %v2503
      %v2536 = vadd.f32 %v2438, %v2504
      %v2537 = vadd.f32 %v2439, %v2505
      %v2538 = vadd.f32 %v2440, %v2506
      %v2539 = vadd.f32 %v2441, %v2507
      %v2540 = vadd.f32 %v2442, %v2508
      %v2541 = vadd.f32 %v2443, %v2509
      %v2542 = vadd.f32 %v2444, %v2510
      %v2543 = vadd.f32 %v2445, %v2511
      %v2544 = vadd.f32 %v2446, %v2512
      %v2545 = vadd.f32 %v2447, %v2513
      %v2546 = vadd.f32 %v2448, %v2514
      %v2547 = vadd.f32 %v2449, %v2515
      %v2548 = vadd.f32 %v2450, %v2516
      %v2549 = vadd.f32 %v2451, %v2517
      %v2550 = vadd.f32 %v2452, %v2518
      %v2551 = vadd.f32 %v2453, %v2519
      %v2552 = vadd.f32 %v2454, %v2520
      %v2553 = vadd.f32 %v2455, %v2521
      %v2554 = vadd.f32 %v2456, %v2522
      %v2555 = vadd.f32 %v2457, %v2523
      %v2556 = vadd.f32 %v2458, %v2524
      %v2557 = vadd.f32 %v2459, %v2525
      %v2558 = vadd.f32 %v2460, %v2526
      %v2559 = vadd.f32 %v2461, %v2527
      %v2560 = vadd.f32 %v2462, %v2528
      %v2561 = vadd.f32 %v2463, %v2529
      %v2562 = vadd.f32 %v2464, %v2530
      %v2563 = vadd.f32 %v2465, %v2531
      %v2564 = vadd.f32 %v2466, %v2532
      %v2565 = vadd.f32 %v2467, %v2533
      %v2566 = vadd.f32 %v2468, %v2534
      %v2567 = vadd.f32 %v2469, %v2535
      %v2568 = vld [vmem:[%s4 + $0x11] sm:$0x1]
      %v2569 = vld [vmem:[%s2372 + $0x2] sm:$0xff]
      %v2570 = vld [vmem:[%s2372 + $0xa] sm:$0xff]
      %v2571 = vld [vmem:[%s2372 + $0x1a] sm:$0xff]
      %v2572 = vld [vmem:[%s2372 + $0x22] sm:$0xff]
      %v2573 = vld [vmem:[%s2372 + $0x32] sm:$0xff]
      %v2574 = vld [vmem:[%s2372 + $0x3a] sm:$0xff]
      %v2575 = vld [vmem:[%s2372 + $0x4a] sm:$0xff]
      %v2576 = vld [vmem:[%s2372 + $0x52] sm:$0xff]
      %v2577 = vld [vmem:[%s2372 + $0x62] sm:$0xff]
      %v2578 = vld [vmem:[%s2372 + $0x6a] sm:$0xff]
      %v2579 = vld [vmem:[%s2372 + $0x7a] sm:$0xff]
      %v2580 = vld [vmem:[%s2372 + $0x82] sm:$0xff]
      %v2581 = vld [vmem:[%s2372 + $0x92] sm:$0xff]
      %v2582 = vld [vmem:[%s2372 + $0x9a] sm:$0xff]
      %v2583 = vld [vmem:[%s2372 + $0xaa] sm:$0xff]
      %v2584 = vld [vmem:[%s2372 + $0xb2] sm:$0xff]
      %v2585 = vld [vmem:[%s2372 + $0xc2] sm:$0xff]
      %v2586 = vld [vmem:[%s2372 + $0xca] sm:$0xff]
      %v2587 = vld [vmem:[%s2372 + $0xda] sm:$0xff]
      %v2588 = vld [vmem:[%s2372 + $0xe2] sm:$0xff]
      %v2589 = vld [vmem:[%s2372 + $0xf2] sm:$0xff]
      %v2590 = vld [vmem:[%s2372 + $0xfa] sm:$0xff]
      %v2591 = vld [vmem:[%s2372 + $0x10a] sm:$0xff]
      %v2592 = vld [vmem:[%s2372 + $0x112] sm:$0xff]
      %v2593 = vld [vmem:[%s2372 + $0x122] sm:$0xff]
      %v2594 = vld [vmem:[%s2372 + $0x12a] sm:$0xff]
      %v2595 = vld [vmem:[%s2372 + $0x13a] sm:$0xff]
      %v2596 = vld [vmem:[%s2372 + $0x142] sm:$0xff]
      %v2597 = vld [vmem:[%s2372 + $0x152] sm:$0xff]
      %v2598 = vld [vmem:[%s2372 + $0x15a] sm:$0xff]
      %v2599 = vld [vmem:[%s2372 + $0x16a] sm:$0xff]
      %v2600 = vld [vmem:[%s2372 + $0x172] sm:$0xff]
      %v2601 = vperm.slane %v2568, 0
      %v2602 = vmul.f32 %v2569, %v2601
      %v2603 = vmul.f32 %v2570, %v2601
      %v2604 = vmul.f32 %v2571, %v2601
      %v2605 = vmul.f32 %v2572, %v2601
      %v2606 = vmul.f32 %v2573, %v2601
      %v2607 = vmul.f32 %v2574, %v2601
      %v2608 = vmul.f32 %v2575, %v2601
      %v2609 = vmul.f32 %v2576, %v2601
      %v2610 = vmul.f32 %v2577, %v2601
      %v2611 = vmul.f32 %v2578, %v2601
      %v2612 = vmul.f32 %v2579, %v2601
      %v2613 = vmul.f32 %v2580, %v2601
      %v2614 = vmul.f32 %v2581, %v2601
      %v2615 = vmul.f32 %v2582, %v2601
      %v2616 = vmul.f32 %v2583, %v2601
      %v2617 = vmul.f32 %v2584, %v2601
      %v2618 = vmul.f32 %v2585, %v2601
      %v2619 = vmul.f32 %v2586, %v2601
      %v2620 = vmul.f32 %v2587, %v2601
      %v2621 = vmul.f32 %v2588, %v2601
      %v2622 = vmul.f32 %v2589, %v2601
      %v2623 = vmul.f32 %v2590, %v2601
      %v2624 = vmul.f32 %v2591, %v2601
      %v2625 = vmul.f32 %v2592, %v2601
      %v2626 = vmul.f32 %v2593, %v2601
      %v2627 = vmul.f32 %v2594, %v2601
      %v2628 = vmul.f32 %v2595, %v2601
      %v2629 = vmul.f32 %v2596, %v2601
      %v2630 = vmul.f32 %v2597, %v2601
      %v2631 = vmul.f32 %v2598, %v2601
      %v2632 = vmul.f32 %v2599, %v2601
      %v2633 = vmul.f32 %v2600, %v2601
      %v2634 = vadd.f32 %v2536, %v2602
      %v2635 = vadd.f32 %v2537, %v2603
      %v2636 = vadd.f32 %v2538, %v2604
      %v2637 = vadd.f32 %v2539, %v2605
      %v2638 = vadd.f32 %v2540, %v2606
      %v2639 = vadd.f32 %v2541, %v2607
      %v2640 = vadd.f32 %v2542, %v2608
      %v2641 = vadd.f32 %v2543, %v2609
      %v2642 = vadd.f32 %v2544, %v2610
      %v2643 = vadd.f32 %v2545, %v2611
      %v2644 = vadd.f32 %v2546, %v2612
      %v2645 = vadd.f32 %v2547, %v2613
      %v2646 = vadd.f32 %v2548, %v2614
      %v2647 = vadd.f32 %v2549, %v2615
      %v2648 = vadd.f32 %v2550, %v2616
      %v2649 = vadd.f32 %v2551, %v2617
      %v2650 = vadd.f32 %v2552, %v2618
      %v2651 = vadd.f32 %v2553, %v2619
      %v2652 = vadd.f32 %v2554, %v2620
      %v2653 = vadd.f32 %v2555, %v2621
      %v2654 = vadd.f32 %v2556, %v2622
      %v2655 = vadd.f32 %v2557, %v2623
      %v2656 = vadd.f32 %v2558, %v2624
      %v2657 = vadd.f32 %v2559, %v2625
      %v2658 = vadd.f32 %v2560, %v2626
      %v2659 = vadd.f32 %v2561, %v2627
      %v2660 = vadd.f32 %v2562, %v2628
      %v2661 = vadd.f32 %v2563, %v2629
      %v2662 = vadd.f32 %v2564, %v2630
      %v2663 = vadd.f32 %v2565, %v2631
      %v2664 = vadd.f32 %v2566, %v2632
      %v2665 = vadd.f32 %v2567, %v2633
      %v2666 = vld [vmem:[%s4 + $0x12] sm:$0x1]
      %v2667 = vld [vmem:[%s2372 + $0x3] sm:$0xff]
      %v2668 = vld [vmem:[%s2372 + $0xb] sm:$0xff]
      %v2669 = vld [vmem:[%s2372 + $0x1b] sm:$0xff]
      %v2670 = vld [vmem:[%s2372 + $0x23] sm:$0xff]
      %v2671 = vld [vmem:[%s2372 + $0x33] sm:$0xff]
      %v2672 = vld [vmem:[%s2372 + $0x3b] sm:$0xff]
      %v2673 = vld [vmem:[%s2372 + $0x4b] sm:$0xff]
      %v2674 = vld [vmem:[%s2372 + $0x53] sm:$0xff]
      %v2675 = vld [vmem:[%s2372 + $0x63] sm:$0xff]
      %v2676 = vld [vmem:[%s2372 + $0x6b] sm:$0xff]
      %v2677 = vld [vmem:[%s2372 + $0x7b] sm:$0xff]
      %v2678 = vld [vmem:[%s2372 + $0x83] sm:$0xff]
      %v2679 = vld [vmem:[%s2372 + $0x93] sm:$0xff]
      %v2680 = vld [vmem:[%s2372 + $0x9b] sm:$0xff]
      %v2681 = vld [vmem:[%s2372 + $0xab] sm:$0xff]
      %v2682 = vld [vmem:[%s2372 + $0xb3] sm:$0xff]
      %v2683 = vld [vmem:[%s2372 + $0xc3] sm:$0xff]
      %v2684 = vld [vmem:[%s2372 + $0xcb] sm:$0xff]
      %v2685 = vld [vmem:[%s2372 + $0xdb] sm:$0xff]
      %v2686 = vld [vmem:[%s2372 + $0xe3] sm:$0xff]
      %v2687 = vld [vmem:[%s2372 + $0xf3] sm:$0xff]
      %v2688 = vld [vmem:[%s2372 + $0xfb] sm:$0xff]
      %v2689 = vld [vmem:[%s2372 + $0x10b] sm:$0xff]
      %v2690 = vld [vmem:[%s2372 + $0x113] sm:$0xff]
      %v2691 = vld [vmem:[%s2372 + $0x123] sm:$0xff]
      %v2692 = vld [vmem:[%s2372 + $0x12b] sm:$0xff]
      %v2693 = vld [vmem:[%s2372 + $0x13b] sm:$0xff]
      %v2694 = vld [vmem:[%s2372 + $0x143] sm:$0xff]
      %v2695 = vld [vmem:[%s2372 + $0x153] sm:$0xff]
      %v2696 = vld [vmem:[%s2372 + $0x15b] sm:$0xff]
      %v2697 = vld [vmem:[%s2372 + $0x16b] sm:$0xff]
      %v2698 = vld [vmem:[%s2372 + $0x173] sm:$0xff]
      %v2699 = vperm.slane %v2666, 0
      %v2700 = vmul.f32 %v2667, %v2699
      %v2701 = vmul.f32 %v2668, %v2699
      %v2702 = vmul.f32 %v2669, %v2699
      %v2703 = vmul.f32 %v2670, %v2699
      %v2704 = vmul.f32 %v2671, %v2699
      %v2705 = vmul.f32 %v2672, %v2699
      %v2706 = vmul.f32 %v2673, %v2699
      %v2707 = vmul.f32 %v2674, %v2699
      %v2708 = vmul.f32 %v2675, %v2699
      %v2709 = vmul.f32 %v2676, %v2699
      %v2710 = vmul.f32 %v2677, %v2699
      %v2711 = vmul.f32 %v2678, %v2699
      %v2712 = vmul.f32 %v2679, %v2699
      %v2713 = vmul.f32 %v2680, %v2699
      %v2714 = vmul.f32 %v2681, %v2699
      %v2715 = vmul.f32 %v2682, %v2699
      %v2716 = vmul.f32 %v2683, %v2699
      %v2717 = vmul.f32 %v2684, %v2699
      %v2718 = vmul.f32 %v2685, %v2699
      %v2719 = vmul.f32 %v2686, %v2699
      %v2720 = vmul.f32 %v2687, %v2699
      %v2721 = vmul.f32 %v2688, %v2699
      %v2722 = vmul.f32 %v2689, %v2699
      %v2723 = vmul.f32 %v2690, %v2699
      %v2724 = vmul.f32 %v2691, %v2699
      %v2725 = vmul.f32 %v2692, %v2699
      %v2726 = vmul.f32 %v2693, %v2699
      %v2727 = vmul.f32 %v2694, %v2699
      %v2728 = vmul.f32 %v2695, %v2699
      %v2729 = vmul.f32 %v2696, %v2699
      %v2730 = vmul.f32 %v2697, %v2699
      %v2731 = vmul.f32 %v2698, %v2699
      %v2732 = vadd.f32 %v2634, %v2700
      %v2733 = vadd.f32 %v2635, %v2701
      %v2734 = vadd.f32 %v2636, %v2702
      %v2735 = vadd.f32 %v2637, %v2703
      %v2736 = vadd.f32 %v2638, %v2704
      %v2737 = vadd.f32 %v2639, %v2705
      %v2738 = vadd.f32 %v2640, %v2706
      %v2739 = vadd.f32 %v2641, %v2707
      %v2740 = vadd.f32 %v2642, %v2708
      %v2741 = vadd.f32 %v2643, %v2709
      %v2742 = vadd.f32 %v2644, %v2710
      %v2743 = vadd.f32 %v2645, %v2711
      %v2744 = vadd.f32 %v2646, %v2712
      %v2745 = vadd.f32 %v2647, %v2713
      %v2746 = vadd.f32 %v2648, %v2714
      %v2747 = vadd.f32 %v2649, %v2715
      %v2748 = vadd.f32 %v2650, %v2716
      %v2749 = vadd.f32 %v2651, %v2717
      %v2750 = vadd.f32 %v2652, %v2718
      %v2751 = vadd.f32 %v2653, %v2719
      %v2752 = vadd.f32 %v2654, %v2720
      %v2753 = vadd.f32 %v2655, %v2721
      %v2754 = vadd.f32 %v2656, %v2722
      %v2755 = vadd.f32 %v2657, %v2723
      %v2756 = vadd.f32 %v2658, %v2724
      %v2757 = vadd.f32 %v2659, %v2725
      %v2758 = vadd.f32 %v2660, %v2726
      %v2759 = vadd.f32 %v2661, %v2727
      %v2760 = vadd.f32 %v2662, %v2728
      %v2761 = vadd.f32 %v2663, %v2729
      %v2762 = vadd.f32 %v2664, %v2730
      %v2763 = vadd.f32 %v2665, %v2731
      %v2764 = vld [vmem:[%s4 + $0x13] sm:$0x1]
      %v2765 = vld [vmem:[%s2372 + $0x4] sm:$0xff]
      %v2766 = vld [vmem:[%s2372 + $0xc] sm:$0xff]
      %v2767 = vld [vmem:[%s2372 + $0x1c] sm:$0xff]
      %v2768 = vld [vmem:[%s2372 + $0x24] sm:$0xff]
      %v2769 = vld [vmem:[%s2372 + $0x34] sm:$0xff]
      %v2770 = vld [vmem:[%s2372 + $0x3c] sm:$0xff]
      %v2771 = vld [vmem:[%s2372 + $0x4c] sm:$0xff]
      %v2772 = vld [vmem:[%s2372 + $0x54] sm:$0xff]
      %v2773 = vld [vmem:[%s2372 + $0x64] sm:$0xff]
      %v2774 = vld [vmem:[%s2372 + $0x6c] sm:$0xff]
      %v2775 = vld [vmem:[%s2372 + $0x7c] sm:$0xff]
      %v2776 = vld [vmem:[%s2372 + $0x84] sm:$0xff]
      %v2777 = vld [vmem:[%s2372 + $0x94] sm:$0xff]
      %v2778 = vld [vmem:[%s2372 + $0x9c] sm:$0xff]
      %v2779 = vld [vmem:[%s2372 + $0xac] sm:$0xff]
      %v2780 = vld [vmem:[%s2372 + $0xb4] sm:$0xff]
      %v2781 = vld [vmem:[%s2372 + $0xc4] sm:$0xff]
      %v2782 = vld [vmem:[%s2372 + $0xcc] sm:$0xff]
      %v2783 = vld [vmem:[%s2372 + $0xdc] sm:$0xff]
      %v2784 = vld [vmem:[%s2372 + $0xe4] sm:$0xff]
      %v2785 = vld [vmem:[%s2372 + $0xf4] sm:$0xff]
      %v2786 = vld [vmem:[%s2372 + $0xfc] sm:$0xff]
      %v2787 = vld [vmem:[%s2372 + $0x10c] sm:$0xff]
      %v2788 = vld [vmem:[%s2372 + $0x114] sm:$0xff]
      %v2789 = vld [vmem:[%s2372 + $0x124] sm:$0xff]
      %v2790 = vld [vmem:[%s2372 + $0x12c] sm:$0xff]
      %v2791 = vld [vmem:[%s2372 + $0x13c] sm:$0xff]
      %v2792 = vld [vmem:[%s2372 + $0x144] sm:$0xff]
      %v2793 = vld [vmem:[%s2372 + $0x154] sm:$0xff]
      %v2794 = vld [vmem:[%s2372 + $0x15c] sm:$0xff]
      %v2795 = vld [vmem:[%s2372 + $0x16c] sm:$0xff]
      %v2796 = vld [vmem:[%s2372 + $0x174] sm:$0xff]
      %v2797 = vperm.slane %v2764, 0
      %v2798 = vmul.f32 %v2765, %v2797
      %v2799 = vmul.f32 %v2766, %v2797
      %v2800 = vmul.f32 %v2767, %v2797
      %v2801 = vmul.f32 %v2768, %v2797
      %v2802 = vmul.f32 %v2769, %v2797
      %v2803 = vmul.f32 %v2770, %v2797
      %v2804 = vmul.f32 %v2771, %v2797
      %v2805 = vmul.f32 %v2772, %v2797
      %v2806 = vmul.f32 %v2773, %v2797
      %v2807 = vmul.f32 %v2774, %v2797
      %v2808 = vmul.f32 %v2775, %v2797
      %v2809 = vmul.f32 %v2776, %v2797
      %v2810 = vmul.f32 %v2777, %v2797
      %v2811 = vmul.f32 %v2778, %v2797
      %v2812 = vmul.f32 %v2779, %v2797
      %v2813 = vmul.f32 %v2780, %v2797
      %v2814 = vmul.f32 %v2781, %v2797
      %v2815 = vmul.f32 %v2782, %v2797
      %v2816 = vmul.f32 %v2783, %v2797
      %v2817 = vmul.f32 %v2784, %v2797
      %v2818 = vmul.f32 %v2785, %v2797
      %v2819 = vmul.f32 %v2786, %v2797
      %v2820 = vmul.f32 %v2787, %v2797
      %v2821 = vmul.f32 %v2788, %v2797
      %v2822 = vmul.f32 %v2789, %v2797
      %v2823 = vmul.f32 %v2790, %v2797
      %v2824 = vmul.f32 %v2791, %v2797
      %v2825 = vmul.f32 %v2792, %v2797
      %v2826 = vmul.f32 %v2793, %v2797
      %v2827 = vmul.f32 %v2794, %v2797
      %v2828 = vmul.f32 %v2795, %v2797
      %v2829 = vmul.f32 %v2796, %v2797
      %v2830 = vadd.f32 %v2732, %v2798
      %v2831 = vadd.f32 %v2733, %v2799
      %v2832 = vadd.f32 %v2734, %v2800
      %v2833 = vadd.f32 %v2735, %v2801
      %v2834 = vadd.f32 %v2736, %v2802
      %v2835 = vadd.f32 %v2737, %v2803
      %v2836 = vadd.f32 %v2738, %v2804
      %v2837 = vadd.f32 %v2739, %v2805
      %v2838 = vadd.f32 %v2740, %v2806
      %v2839 = vadd.f32 %v2741, %v2807
      %v2840 = vadd.f32 %v2742, %v2808
      %v2841 = vadd.f32 %v2743, %v2809
      %v2842 = vadd.f32 %v2744, %v2810
      %v2843 = vadd.f32 %v2745, %v2811
      %v2844 = vadd.f32 %v2746, %v2812
      %v2845 = vadd.f32 %v2747, %v2813
      %v2846 = vadd.f32 %v2748, %v2814
      %v2847 = vadd.f32 %v2749, %v2815
      %v2848 = vadd.f32 %v2750, %v2816
      %v2849 = vadd.f32 %v2751, %v2817
      %v2850 = vadd.f32 %v2752, %v2818
      %v2851 = vadd.f32 %v2753, %v2819
      %v2852 = vadd.f32 %v2754, %v2820
      %v2853 = vadd.f32 %v2755, %v2821
      %v2854 = vadd.f32 %v2756, %v2822
      %v2855 = vadd.f32 %v2757, %v2823
      %v2856 = vadd.f32 %v2758, %v2824
      %v2857 = vadd.f32 %v2759, %v2825
      %v2858 = vadd.f32 %v2760, %v2826
      %v2859 = vadd.f32 %v2761, %v2827
      %v2860 = vadd.f32 %v2762, %v2828
      %v2861 = vadd.f32 %v2763, %v2829
      %v2862 = vld [vmem:[%s4 + $0x14] sm:$0x1]
      %s2863 = scalar_lea.vmem [#allocation2], 96
      %v2864 = vld [vmem:[%s2863] sm:$0xff]
      %v2865 = vld [vmem:[%s2863 + $0x8] sm:$0xff]
      %v2866 = vld [vmem:[%s2863 + $0x18] sm:$0xff]
      %v2867 = vld [vmem:[%s2863 + $0x20] sm:$0xff]
      %v2868 = vld [vmem:[%s2863 + $0x30] sm:$0xff]
      %v2869 = vld [vmem:[%s2863 + $0x38] sm:$0xff]
      %v2870 = vld [vmem:[%s2863 + $0x48] sm:$0xff]
      %v2871 = vld [vmem:[%s2863 + $0x50] sm:$0xff]
      %v2872 = vld [vmem:[%s2863 + $0x60] sm:$0xff]
      %v2873 = vld [vmem:[%s2863 + $0x68] sm:$0xff]
      %v2874 = vld [vmem:[%s2863 + $0x78] sm:$0xff]
      %v2875 = vld [vmem:[%s2863 + $0x80] sm:$0xff]
      %v2876 = vld [vmem:[%s2863 + $0x90] sm:$0xff]
      %v2877 = vld [vmem:[%s2863 + $0x98] sm:$0xff]
      %v2878 = vld [vmem:[%s2863 + $0xa8] sm:$0xff]
      %v2879 = vld [vmem:[%s2863 + $0xb0] sm:$0xff]
      %v2880 = vld [vmem:[%s2863 + $0xc0] sm:$0xff]
      %v2881 = vld [vmem:[%s2863 + $0xc8] sm:$0xff]
      %v2882 = vld [vmem:[%s2863 + $0xd8] sm:$0xff]
      %v2883 = vld [vmem:[%s2863 + $0xe0] sm:$0xff]
      %v2884 = vld [vmem:[%s2863 + $0xf0] sm:$0xff]
      %v2885 = vld [vmem:[%s2863 + $0xf8] sm:$0xff]
      %v2886 = vld [vmem:[%s2863 + $0x108] sm:$0xff]
      %v2887 = vld [vmem:[%s2863 + $0x110] sm:$0xff]
      %v2888 = vld [vmem:[%s2863 + $0x120] sm:$0xff]
      %v2889 = vld [vmem:[%s2863 + $0x128] sm:$0xff]
      %v2890 = vld [vmem:[%s2863 + $0x138] sm:$0xff]
      %v2891 = vld [vmem:[%s2863 + $0x140] sm:$0xff]
      %v2892 = vld [vmem:[%s2863 + $0x150] sm:$0xff]
      %v2893 = vld [vmem:[%s2863 + $0x158] sm:$0xff]
      %v2894 = vld [vmem:[%s2863 + $0x168] sm:$0xff]
      %v2895 = vld [vmem:[%s2863 + $0x170] sm:$0xff]
      %v2896 = vperm.slane %v2862, 0
      %v2897 = vmul.f32 %v2864, %v2896
      %v2898 = vmul.f32 %v2865, %v2896
      %v2899 = vmul.f32 %v2866, %v2896
      %v2900 = vmul.f32 %v2867, %v2896
      %v2901 = vmul.f32 %v2868, %v2896
      %v2902 = vmul.f32 %v2869, %v2896
      %v2903 = vmul.f32 %v2870, %v2896
      %v2904 = vmul.f32 %v2871, %v2896
      %v2905 = vmul.f32 %v2872, %v2896
      %v2906 = vmul.f32 %v2873, %v2896
      %v2907 = vmul.f32 %v2874, %v2896
      %v2908 = vmul.f32 %v2875, %v2896
      %v2909 = vmul.f32 %v2876, %v2896
      %v2910 = vmul.f32 %v2877, %v2896
      %v2911 = vmul.f32 %v2878, %v2896
      %v2912 = vmul.f32 %v2879, %v2896
      %v2913 = vmul.f32 %v2880, %v2896
      %v2914 = vmul.f32 %v2881, %v2896
      %v2915 = vmul.f32 %v2882, %v2896
      %v2916 = vmul.f32 %v2883, %v2896
      %v2917 = vmul.f32 %v2884, %v2896
      %v2918 = vmul.f32 %v2885, %v2896
      %v2919 = vmul.f32 %v2886, %v2896
      %v2920 = vmul.f32 %v2887, %v2896
      %v2921 = vmul.f32 %v2888, %v2896
      %v2922 = vmul.f32 %v2889, %v2896
      %v2923 = vmul.f32 %v2890, %v2896
      %v2924 = vmul.f32 %v2891, %v2896
      %v2925 = vmul.f32 %v2892, %v2896
      %v2926 = vmul.f32 %v2893, %v2896
      %v2927 = vmul.f32 %v2894, %v2896
      %v2928 = vmul.f32 %v2895, %v2896
      %v2929 = vadd.f32 %v2830, %v2897
      %v2930 = vadd.f32 %v2831, %v2898
      %v2931 = vadd.f32 %v2832, %v2899
      %v2932 = vadd.f32 %v2833, %v2900
      %v2933 = vadd.f32 %v2834, %v2901
      %v2934 = vadd.f32 %v2835, %v2902
      %v2935 = vadd.f32 %v2836, %v2903
      %v2936 = vadd.f32 %v2837, %v2904
      %v2937 = vadd.f32 %v2838, %v2905
      %v2938 = vadd.f32 %v2839, %v2906
      %v2939 = vadd.f32 %v2840, %v2907
      %v2940 = vadd.f32 %v2841, %v2908
      %v2941 = vadd.f32 %v2842, %v2909
      %v2942 = vadd.f32 %v2843, %v2910
      %v2943 = vadd.f32 %v2844, %v2911
      %v2944 = vadd.f32 %v2845, %v2912
      %v2945 = vadd.f32 %v2846, %v2913
      %v2946 = vadd.f32 %v2847, %v2914
      %v2947 = vadd.f32 %v2848, %v2915
      %v2948 = vadd.f32 %v2849, %v2916
      %v2949 = vadd.f32 %v2850, %v2917
      %v2950 = vadd.f32 %v2851, %v2918
      %v2951 = vadd.f32 %v2852, %v2919
      %v2952 = vadd.f32 %v2853, %v2920
      %v2953 = vadd.f32 %v2854, %v2921
      %v2954 = vadd.f32 %v2855, %v2922
      %v2955 = vadd.f32 %v2856, %v2923
      %v2956 = vadd.f32 %v2857, %v2924
      %v2957 = vadd.f32 %v2858, %v2925
      %v2958 = vadd.f32 %v2859, %v2926
      %v2959 = vadd.f32 %v2860, %v2927
      %v2960 = vadd.f32 %v2861, %v2928
      %v2961 = vld [vmem:[%s4 + $0x15] sm:$0x1]
      %v2962 = vld [vmem:[%s2863 + $0x1] sm:$0xff]
      %v2963 = vld [vmem:[%s2863 + $0x9] sm:$0xff]
      %v2964 = vld [vmem:[%s2863 + $0x19] sm:$0xff]
      %v2965 = vld [vmem:[%s2863 + $0x21] sm:$0xff]
      %v2966 = vld [vmem:[%s2863 + $0x31] sm:$0xff]
      %v2967 = vld [vmem:[%s2863 + $0x39] sm:$0xff]
      %v2968 = vld [vmem:[%s2863 + $0x49] sm:$0xff]
      %v2969 = vld [vmem:[%s2863 + $0x51] sm:$0xff]
      %v2970 = vld [vmem:[%s2863 + $0x61] sm:$0xff]
      %v2971 = vld [vmem:[%s2863 + $0x69] sm:$0xff]
      %v2972 = vld [vmem:[%s2863 + $0x79] sm:$0xff]
      %v2973 = vld [vmem:[%s2863 + $0x81] sm:$0xff]
      %v2974 = vld [vmem:[%s2863 + $0x91] sm:$0xff]
      %v2975 = vld [vmem:[%s2863 + $0x99] sm:$0xff]
      %v2976 = vld [vmem:[%s2863 + $0xa9] sm:$0xff]
      %v2977 = vld [vmem:[%s2863 + $0xb1] sm:$0xff]
      %v2978 = vld [vmem:[%s2863 + $0xc1] sm:$0xff]
      %v2979 = vld [vmem:[%s2863 + $0xc9] sm:$0xff]
      %v2980 = vld [vmem:[%s2863 + $0xd9] sm:$0xff]
      %v2981 = vld [vmem:[%s2863 + $0xe1] sm:$0xff]
      %v2982 = vld [vmem:[%s2863 + $0xf1] sm:$0xff]
      %v2983 = vld [vmem:[%s2863 + $0xf9] sm:$0xff]
      %v2984 = vld [vmem:[%s2863 + $0x109] sm:$0xff]
      %v2985 = vld [vmem:[%s2863 + $0x111] sm:$0xff]
      %v2986 = vld [vmem:[%s2863 + $0x121] sm:$0xff]
      %v2987 = vld [vmem:[%s2863 + $0x129] sm:$0xff]
      %v2988 = vld [vmem:[%s2863 + $0x139] sm:$0xff]
      %v2989 = vld [vmem:[%s2863 + $0x141] sm:$0xff]
      %v2990 = vld [vmem:[%s2863 + $0x151] sm:$0xff]
      %v2991 = vld [vmem:[%s2863 + $0x159] sm:$0xff]
      %v2992 = vld [vmem:[%s2863 + $0x169] sm:$0xff]
      %v2993 = vld [vmem:[%s2863 + $0x171] sm:$0xff]
      %v2994 = vperm.slane %v2961, 0
      %v2995 = vmul.f32 %v2962, %v2994
      %v2996 = vmul.f32 %v2963, %v2994
      %v2997 = vmul.f32 %v2964, %v2994
      %v2998 = vmul.f32 %v2965, %v2994
      %v2999 = vmul.f32 %v2966, %v2994
      %v3000 = vmul.f32 %v2967, %v2994
      %v3001 = vmul.f32 %v2968, %v2994
      %v3002 = vmul.f32 %v2969, %v2994
      %v3003 = vmul.f32 %v2970, %v2994
      %v3004 = vmul.f32 %v2971, %v2994
      %v3005 = vmul.f32 %v2972, %v2994
      %v3006 = vmul.f32 %v2973, %v2994
      %v3007 = vmul.f32 %v2974, %v2994
      %v3008 = vmul.f32 %v2975, %v2994
      %v3009 = vmul.f32 %v2976, %v2994
      %v3010 = vmul.f32 %v2977, %v2994
      %v3011 = vmul.f32 %v2978, %v2994
      %v3012 = vmul.f32 %v2979, %v2994
      %v3013 = vmul.f32 %v2980, %v2994
      %v3014 = vmul.f32 %v2981, %v2994
      %v3015 = vmul.f32 %v2982, %v2994
      %v3016 = vmul.f32 %v2983, %v2994
      %v3017 = vmul.f32 %v2984, %v2994
      %v3018 = vmul.f32 %v2985, %v2994
      %v3019 = vmul.f32 %v2986, %v2994
      %v3020 = vmul.f32 %v2987, %v2994
      %v3021 = vmul.f32 %v2988, %v2994
      %v3022 = vmul.f32 %v2989, %v2994
      %v3023 = vmul.f32 %v2990, %v2994
      %v3024 = vmul.f32 %v2991, %v2994
      %v3025 = vmul.f32 %v2992, %v2994
      %v3026 = vmul.f32 %v2993, %v2994
      %v3027 = vadd.f32 %v2929, %v2995
      %v3028 = vadd.f32 %v2930, %v2996
      %v3029 = vadd.f32 %v2931, %v2997
      %v3030 = vadd.f32 %v2932, %v2998
      %v3031 = vadd.f32 %v2933, %v2999
      %v3032 = vadd.f32 %v2934, %v3000
      %v3033 = vadd.f32 %v2935, %v3001
      %v3034 = vadd.f32 %v2936, %v3002
      %v3035 = vadd.f32 %v2937, %v3003
      %v3036 = vadd.f32 %v2938, %v3004
      %v3037 = vadd.f32 %v2939, %v3005
      %v3038 = vadd.f32 %v2940, %v3006
      %v3039 = vadd.f32 %v2941, %v3007
      %v3040 = vadd.f32 %v2942, %v3008
      %v3041 = vadd.f32 %v2943, %v3009
      %v3042 = vadd.f32 %v2944, %v3010
      %v3043 = vadd.f32 %v2945, %v3011
      %v3044 = vadd.f32 %v2946, %v3012
      %v3045 = vadd.f32 %v2947, %v3013
      %v3046 = vadd.f32 %v2948, %v3014
      %v3047 = vadd.f32 %v2949, %v3015
      %v3048 = vadd.f32 %v2950, %v3016
      %v3049 = vadd.f32 %v2951, %v3017
      %v3050 = vadd.f32 %v2952, %v3018
      %v3051 = vadd.f32 %v2953, %v3019
      %v3052 = vadd.f32 %v2954, %v3020
      %v3053 = vadd.f32 %v2955, %v3021
      %v3054 = vadd.f32 %v2956, %v3022
      %v3055 = vadd.f32 %v2957, %v3023
      %v3056 = vadd.f32 %v2958, %v3024
      %v3057 = vadd.f32 %v2959, %v3025
      %v3058 = vadd.f32 %v2960, %v3026
      %v3059 = vld [vmem:[%s4 + $0x16] sm:$0x1]
      %v3060 = vld [vmem:[%s2863 + $0x2] sm:$0xff]
      %v3061 = vld [vmem:[%s2863 + $0xa] sm:$0xff]
      %v3062 = vld [vmem:[%s2863 + $0x1a] sm:$0xff]
      %v3063 = vld [vmem:[%s2863 + $0x22] sm:$0xff]
      %v3064 = vld [vmem:[%s2863 + $0x32] sm:$0xff]
      %v3065 = vld [vmem:[%s2863 + $0x3a] sm:$0xff]
      %v3066 = vld [vmem:[%s2863 + $0x4a] sm:$0xff]
      %v3067 = vld [vmem:[%s2863 + $0x52] sm:$0xff]
      %v3068 = vld [vmem:[%s2863 + $0x62] sm:$0xff]
      %v3069 = vld [vmem:[%s2863 + $0x6a] sm:$0xff]
      %v3070 = vld [vmem:[%s2863 + $0x7a] sm:$0xff]
      %v3071 = vld [vmem:[%s2863 + $0x82] sm:$0xff]
      %v3072 = vld [vmem:[%s2863 + $0x92] sm:$0xff]
      %v3073 = vld [vmem:[%s2863 + $0x9a] sm:$0xff]
      %v3074 = vld [vmem:[%s2863 + $0xaa] sm:$0xff]
      %v3075 = vld [vmem:[%s2863 + $0xb2] sm:$0xff]
      %v3076 = vld [vmem:[%s2863 + $0xc2] sm:$0xff]
      %v3077 = vld [vmem:[%s2863 + $0xca] sm:$0xff]
      %v3078 = vld [vmem:[%s2863 + $0xda] sm:$0xff]
      %v3079 = vld [vmem:[%s2863 + $0xe2] sm:$0xff]
      %v3080 = vld [vmem:[%s2863 + $0xf2] sm:$0xff]
      %v3081 = vld [vmem:[%s2863 + $0xfa] sm:$0xff]
      %v3082 = vld [vmem:[%s2863 + $0x10a] sm:$0xff]
      %v3083 = vld [vmem:[%s2863 + $0x112] sm:$0xff]
      %v3084 = vld [vmem:[%s2863 + $0x122] sm:$0xff]
      %v3085 = vld [vmem:[%s2863 + $0x12a] sm:$0xff]
      %v3086 = vld [vmem:[%s2863 + $0x13a] sm:$0xff]
      %v3087 = vld [vmem:[%s2863 + $0x142] sm:$0xff]
      %v3088 = vld [vmem:[%s2863 + $0x152] sm:$0xff]
      %v3089 = vld [vmem:[%s2863 + $0x15a] sm:$0xff]
      %v3090 = vld [vmem:[%s2863 + $0x16a] sm:$0xff]
      %v3091 = vld [vmem:[%s2863 + $0x172] sm:$0xff]
      %v3092 = vperm.slane %v3059, 0
      %v3093 = vmul.f32 %v3060, %v3092
      %v3094 = vmul.f32 %v3061, %v3092
      %v3095 = vmul.f32 %v3062, %v3092
      %v3096 = vmul.f32 %v3063, %v3092
      %v3097 = vmul.f32 %v3064, %v3092
      %v3098 = vmul.f32 %v3065, %v3092
      %v3099 = vmul.f32 %v3066, %v3092
      %v3100 = vmul.f32 %v3067, %v3092
      %v3101 = vmul.f32 %v3068, %v3092
      %v3102 = vmul.f32 %v3069, %v3092
      %v3103 = vmul.f32 %v3070, %v3092
      %v3104 = vmul.f32 %v3071, %v3092
      %v3105 = vmul.f32 %v3072, %v3092
      %v3106 = vmul.f32 %v3073, %v3092
      %v3107 = vmul.f32 %v3074, %v3092
      %v3108 = vmul.f32 %v3075, %v3092
      %v3109 = vmul.f32 %v3076, %v3092
      %v3110 = vmul.f32 %v3077, %v3092
      %v3111 = vmul.f32 %v3078, %v3092
      %v3112 = vmul.f32 %v3079, %v3092
      %v3113 = vmul.f32 %v3080, %v3092
      %v3114 = vmul.f32 %v3081, %v3092
      %v3115 = vmul.f32 %v3082, %v3092
      %v3116 = vmul.f32 %v3083, %v3092
      %v3117 = vmul.f32 %v3084, %v3092
      %v3118 = vmul.f32 %v3085, %v3092
      %v3119 = vmul.f32 %v3086, %v3092
      %v3120 = vmul.f32 %v3087, %v3092
      %v3121 = vmul.f32 %v3088, %v3092
      %v3122 = vmul.f32 %v3089, %v3092
      %v3123 = vmul.f32 %v3090, %v3092
      %v3124 = vmul.f32 %v3091, %v3092
      %v3125 = vadd.f32 %v3027, %v3093
      %v3126 = vadd.f32 %v3028, %v3094
      %v3127 = vadd.f32 %v3029, %v3095
      %v3128 = vadd.f32 %v3030, %v3096
      %v3129 = vadd.f32 %v3031, %v3097
      %v3130 = vadd.f32 %v3032, %v3098
      %v3131 = vadd.f32 %v3033, %v3099
      %v3132 = vadd.f32 %v3034, %v3100
      %v3133 = vadd.f32 %v3035, %v3101
      %v3134 = vadd.f32 %v3036, %v3102
      %v3135 = vadd.f32 %v3037, %v3103
      %v3136 = vadd.f32 %v3038, %v3104
      %v3137 = vadd.f32 %v3039, %v3105
      %v3138 = vadd.f32 %v3040, %v3106
      %v3139 = vadd.f32 %v3041, %v3107
      %v3140 = vadd.f32 %v3042, %v3108
      %v3141 = vadd.f32 %v3043, %v3109
      %v3142 = vadd.f32 %v3044, %v3110
      %v3143 = vadd.f32 %v3045, %v3111
      %v3144 = vadd.f32 %v3046, %v3112
      %v3145 = vadd.f32 %v3047, %v3113
      %v3146 = vadd.f32 %v3048, %v3114
      %v3147 = vadd.f32 %v3049, %v3115
      %v3148 = vadd.f32 %v3050, %v3116
      %v3149 = vadd.f32 %v3051, %v3117
      %v3150 = vadd.f32 %v3052, %v3118
      %v3151 = vadd.f32 %v3053, %v3119
      %v3152 = vadd.f32 %v3054, %v3120
      %v3153 = vadd.f32 %v3055, %v3121
      %v3154 = vadd.f32 %v3056, %v3122
      %v3155 = vadd.f32 %v3057, %v3123
      %v3156 = vadd.f32 %v3058, %v3124
      %v3157 = vld [vmem:[%s4 + $0x17] sm:$0x1]
      %v3158 = vld [vmem:[%s2863 + $0x3] sm:$0xff]
      %v3159 = vld [vmem:[%s2863 + $0xb] sm:$0xff]
      %v3160 = vld [vmem:[%s2863 + $0x1b] sm:$0xff]
      %v3161 = vld [vmem:[%s2863 + $0x23] sm:$0xff]
      %v3162 = vld [vmem:[%s2863 + $0x33] sm:$0xff]
      %v3163 = vld [vmem:[%s2863 + $0x3b] sm:$0xff]
      %v3164 = vld [vmem:[%s2863 + $0x4b] sm:$0xff]
      %v3165 = vld [vmem:[%s2863 + $0x53] sm:$0xff]
      %v3166 = vld [vmem:[%s2863 + $0x63] sm:$0xff]
      %v3167 = vld [vmem:[%s2863 + $0x6b] sm:$0xff]
      %v3168 = vld [vmem:[%s2863 + $0x7b] sm:$0xff]
      %v3169 = vld [vmem:[%s2863 + $0x83] sm:$0xff]
      %v3170 = vld [vmem:[%s2863 + $0x93] sm:$0xff]
      %v3171 = vld [vmem:[%s2863 + $0x9b] sm:$0xff]
      %v3172 = vld [vmem:[%s2863 + $0xab] sm:$0xff]
      %v3173 = vld [vmem:[%s2863 + $0xb3] sm:$0xff]
      %v3174 = vld [vmem:[%s2863 + $0xc3] sm:$0xff]
      %v3175 = vld [vmem:[%s2863 + $0xcb] sm:$0xff]
      %v3176 = vld [vmem:[%s2863 + $0xdb] sm:$0xff]
      %v3177 = vld [vmem:[%s2863 + $0xe3] sm:$0xff]
      %v3178 = vld [vmem:[%s2863 + $0xf3] sm:$0xff]
      %v3179 = vld [vmem:[%s2863 + $0xfb] sm:$0xff]
      %v3180 = vld [vmem:[%s2863 + $0x10b] sm:$0xff]
      %v3181 = vld [vmem:[%s2863 + $0x113] sm:$0xff]
      %v3182 = vld [vmem:[%s2863 + $0x123] sm:$0xff]
      %v3183 = vld [vmem:[%s2863 + $0x12b] sm:$0xff]
      %v3184 = vld [vmem:[%s2863 + $0x13b] sm:$0xff]
      %v3185 = vld [vmem:[%s2863 + $0x143] sm:$0xff]
      %v3186 = vld [vmem:[%s2863 + $0x153] sm:$0xff]
      %v3187 = vld [vmem:[%s2863 + $0x15b] sm:$0xff]
      %v3188 = vld [vmem:[%s2863 + $0x16b] sm:$0xff]
      %v3189 = vld [vmem:[%s2863 + $0x173] sm:$0xff]
      %v3190 = vperm.slane %v3157, 0
      %v3191 = vmul.f32 %v3158, %v3190
      %v3192 = vmul.f32 %v3159, %v3190
      %v3193 = vmul.f32 %v3160, %v3190
      %v3194 = vmul.f32 %v3161, %v3190
      %v3195 = vmul.f32 %v3162, %v3190
      %v3196 = vmul.f32 %v3163, %v3190
      %v3197 = vmul.f32 %v3164, %v3190
      %v3198 = vmul.f32 %v3165, %v3190
      %v3199 = vmul.f32 %v3166, %v3190
      %v3200 = vmul.f32 %v3167, %v3190
      %v3201 = vmul.f32 %v3168, %v3190
      %v3202 = vmul.f32 %v3169, %v3190
      %v3203 = vmul.f32 %v3170, %v3190
      %v3204 = vmul.f32 %v3171, %v3190
      %v3205 = vmul.f32 %v3172, %v3190
      %v3206 = vmul.f32 %v3173, %v3190
      %v3207 = vmul.f32 %v3174, %v3190
      %v3208 = vmul.f32 %v3175, %v3190
      %v3209 = vmul.f32 %v3176, %v3190
      %v3210 = vmul.f32 %v3177, %v3190
      %v3211 = vmul.f32 %v3178, %v3190
      %v3212 = vmul.f32 %v3179, %v3190
      %v3213 = vmul.f32 %v3180, %v3190
      %v3214 = vmul.f32 %v3181, %v3190
      %v3215 = vmul.f32 %v3182, %v3190
      %v3216 = vmul.f32 %v3183, %v3190
      %v3217 = vmul.f32 %v3184, %v3190
      %v3218 = vmul.f32 %v3185, %v3190
      %v3219 = vmul.f32 %v3186, %v3190
      %v3220 = vmul.f32 %v3187, %v3190
      %v3221 = vmul.f32 %v3188, %v3190
      %v3222 = vmul.f32 %v3189, %v3190
      %v3223 = vadd.f32 %v3125, %v3191
      %v3224 = vadd.f32 %v3126, %v3192
      %v3225 = vadd.f32 %v3127, %v3193
      %v3226 = vadd.f32 %v3128, %v3194
      %v3227 = vadd.f32 %v3129, %v3195
      %v3228 = vadd.f32 %v3130, %v3196
      %v3229 = vadd.f32 %v3131, %v3197
      %v3230 = vadd.f32 %v3132, %v3198
      %v3231 = vadd.f32 %v3133, %v3199
      %v3232 = vadd.f32 %v3134, %v3200
      %v3233 = vadd.f32 %v3135, %v3201
      %v3234 = vadd.f32 %v3136, %v3202
      %v3235 = vadd.f32 %v3137, %v3203
      %v3236 = vadd.f32 %v3138, %v3204
      %v3237 = vadd.f32 %v3139, %v3205
      %v3238 = vadd.f32 %v3140, %v3206
      %v3239 = vadd.f32 %v3141, %v3207
      %v3240 = vadd.f32 %v3142, %v3208
      %v3241 = vadd.f32 %v3143, %v3209
      %v3242 = vadd.f32 %v3144, %v3210
      %v3243 = vadd.f32 %v3145, %v3211
      %v3244 = vadd.f32 %v3146, %v3212
      %v3245 = vadd.f32 %v3147, %v3213
      %v3246 = vadd.f32 %v3148, %v3214
      %v3247 = vadd.f32 %v3149, %v3215
      %v3248 = vadd.f32 %v3150, %v3216
      %v3249 = vadd.f32 %v3151, %v3217
      %v3250 = vadd.f32 %v3152, %v3218
      %v3251 = vadd.f32 %v3153, %v3219
      %v3252 = vadd.f32 %v3154, %v3220
      %v3253 = vadd.f32 %v3155, %v3221
      %v3254 = vadd.f32 %v3156, %v3222
      %v3255 = vld [vmem:[%s4 + $0x18] sm:$0x1]
      %v3256 = vld [vmem:[%s2863 + $0x4] sm:$0xff]
      %v3257 = vld [vmem:[%s2863 + $0xc] sm:$0xff]
      %v3258 = vld [vmem:[%s2863 + $0x1c] sm:$0xff]
      %v3259 = vld [vmem:[%s2863 + $0x24] sm:$0xff]
      %v3260 = vld [vmem:[%s2863 + $0x34] sm:$0xff]
      %v3261 = vld [vmem:[%s2863 + $0x3c] sm:$0xff]
      %v3262 = vld [vmem:[%s2863 + $0x4c] sm:$0xff]
      %v3263 = vld [vmem:[%s2863 + $0x54] sm:$0xff]
      %v3264 = vld [vmem:[%s2863 + $0x64] sm:$0xff]
      %v3265 = vld [vmem:[%s2863 + $0x6c] sm:$0xff]
      %v3266 = vld [vmem:[%s2863 + $0x7c] sm:$0xff]
      %v3267 = vld [vmem:[%s2863 + $0x84] sm:$0xff]
      %v3268 = vld [vmem:[%s2863 + $0x94] sm:$0xff]
      %v3269 = vld [vmem:[%s2863 + $0x9c] sm:$0xff]
      %v3270 = vld [vmem:[%s2863 + $0xac] sm:$0xff]
      %v3271 = vld [vmem:[%s2863 + $0xb4] sm:$0xff]
      %v3272 = vld [vmem:[%s2863 + $0xc4] sm:$0xff]
      %v3273 = vld [vmem:[%s2863 + $0xcc] sm:$0xff]
      %v3274 = vld [vmem:[%s2863 + $0xdc] sm:$0xff]
      %v3275 = vld [vmem:[%s2863 + $0xe4] sm:$0xff]
      %v3276 = vld [vmem:[%s2863 + $0xf4] sm:$0xff]
      %v3277 = vld [vmem:[%s2863 + $0xfc] sm:$0xff]
      %v3278 = vld [vmem:[%s2863 + $0x10c] sm:$0xff]
      %v3279 = vld [vmem:[%s2863 + $0x114] sm:$0xff]
      %v3280 = vld [vmem:[%s2863 + $0x124] sm:$0xff]
      %v3281 = vld [vmem:[%s2863 + $0x12c] sm:$0xff]
      %v3282 = vld [vmem:[%s2863 + $0x13c] sm:$0xff]
      %v3283 = vld [vmem:[%s2863 + $0x144] sm:$0xff]
      %v3284 = vld [vmem:[%s2863 + $0x154] sm:$0xff]
      %v3285 = vld [vmem:[%s2863 + $0x15c] sm:$0xff]
      %v3286 = vld [vmem:[%s2863 + $0x16c] sm:$0xff]
      %v3287 = vld [vmem:[%s2863 + $0x174] sm:$0xff]
      %v3288 = vperm.slane %v3255, 0
      %v3289 = vmul.f32 %v3256, %v3288
      %v3290 = vmul.f32 %v3257, %v3288
      %v3291 = vmul.f32 %v3258, %v3288
      %v3292 = vmul.f32 %v3259, %v3288
      %v3293 = vmul.f32 %v3260, %v3288
      %v3294 = vmul.f32 %v3261, %v3288
      %v3295 = vmul.f32 %v3262, %v3288
      %v3296 = vmul.f32 %v3263, %v3288
      %v3297 = vmul.f32 %v3264, %v3288
      %v3298 = vmul.f32 %v3265, %v3288
      %v3299 = vmul.f32 %v3266, %v3288
      %v3300 = vmul.f32 %v3267, %v3288
      %v3301 = vmul.f32 %v3268, %v3288
      %v3302 = vmul.f32 %v3269, %v3288
      %v3303 = vmul.f32 %v3270, %v3288
      %v3304 = vmul.f32 %v3271, %v3288
      %v3305 = vmul.f32 %v3272, %v3288
      %v3306 = vmul.f32 %v3273, %v3288
      %v3307 = vmul.f32 %v3274, %v3288
      %v3308 = vmul.f32 %v3275, %v3288
      %v3309 = vmul.f32 %v3276, %v3288
      %v3310 = vmul.f32 %v3277, %v3288
      %v3311 = vmul.f32 %v3278, %v3288
      %v3312 = vmul.f32 %v3279, %v3288
      %v3313 = vmul.f32 %v3280, %v3288
      %v3314 = vmul.f32 %v3281, %v3288
      %v3315 = vmul.f32 %v3282, %v3288
      %v3316 = vmul.f32 %v3283, %v3288
      %v3317 = vmul.f32 %v3284, %v3288
      %v3318 = vmul.f32 %v3285, %v3288
      %v3319 = vmul.f32 %v3286, %v3288
      %v3320 = vmul.f32 %v3287, %v3288
      %v3321 = vadd.f32 %v3223, %v3289
      %v3322 = vadd.f32 %v3224, %v3290
      %v3323 = vadd.f32 %v3225, %v3291
      %v3324 = vadd.f32 %v3226, %v3292
      %v3325 = vadd.f32 %v3227, %v3293
      %v3326 = vadd.f32 %v3228, %v3294
      %v3327 = vadd.f32 %v3229, %v3295
      %v3328 = vadd.f32 %v3230, %v3296
      %v3329 = vadd.f32 %v3231, %v3297
      %v3330 = vadd.f32 %v3232, %v3298
      %v3331 = vadd.f32 %v3233, %v3299
      %v3332 = vadd.f32 %v3234, %v3300
      %v3333 = vadd.f32 %v3235, %v3301
      %v3334 = vadd.f32 %v3236, %v3302
      %v3335 = vadd.f32 %v3237, %v3303
      %v3336 = vadd.f32 %v3238, %v3304
      %v3337 = vadd.f32 %v3239, %v3305
      %v3338 = vadd.f32 %v3240, %v3306
      %v3339 = vadd.f32 %v3241, %v3307
      %v3340 = vadd.f32 %v3242, %v3308
      %v3341 = vadd.f32 %v3243, %v3309
      %v3342 = vadd.f32 %v3244, %v3310
      %v3343 = vadd.f32 %v3245, %v3311
      %v3344 = vadd.f32 %v3246, %v3312
      %v3345 = vadd.f32 %v3247, %v3313
      %v3346 = vadd.f32 %v3248, %v3314
      %v3347 = vadd.f32 %v3249, %v3315
      %v3348 = vadd.f32 %v3250, %v3316
      %v3349 = vadd.f32 %v3251, %v3317
      %v3350 = vadd.f32 %v3252, %v3318
      %v3351 = vadd.f32 %v3253, %v3319
      %v3352 = vadd.f32 %v3254, %v3320
      %v3353 = vld [vmem:[%s5] sm:$0x1]
      %v3355 = vperm.slane %v3353, 0
      %v3357 = vmul.f32 %v3321, %v3355
      %v3358 = vmul.f32 %v3322, %v3355
      %v3359 = vmul.f32 %v3323, %v3355
      %v3360 = vmul.f32 %v3324, %v3355
      %v3361 = vmul.f32 %v3325, %v3355
      %v3362 = vmul.f32 %v3326, %v3355
      %v3363 = vmul.f32 %v3327, %v3355
      %v3364 = vmul.f32 %v3328, %v3355
      %v3365 = vmul.f32 %v3329, %v3355
      %v3366 = vmul.f32 %v3330, %v3355
      %v3367 = vmul.f32 %v3331, %v3355
      %v3368 = vmul.f32 %v3332, %v3355
      %v3369 = vmul.f32 %v3333, %v3355
      %v3370 = vmul.f32 %v3334, %v3355
      %v3371 = vmul.f32 %v3335, %v3355
      %v3372 = vmul.f32 %v3336, %v3355
      %v3373 = vmul.f32 %v3337, %v3355
      %v3374 = vmul.f32 %v3338, %v3355
      %v3375 = vmul.f32 %v3339, %v3355
      %v3376 = vmul.f32 %v3340, %v3355
      %v3377 = vmul.f32 %v3341, %v3355
      %v3378 = vmul.f32 %v3342, %v3355
      %v3379 = vmul.f32 %v3343, %v3355
      %v3380 = vmul.f32 %v3344, %v3355
      %v3381 = vmul.f32 %v3345, %v3355
      %v3382 = vmul.f32 %v3346, %v3355
      %v3383 = vmul.f32 %v3347, %v3355
      %v3384 = vmul.f32 %v3348, %v3355
      %v3385 = vmul.f32 %v3349, %v3355
      %v3386 = vmul.f32 %v3350, %v3355
      %v3387 = vmul.f32 %v3351, %v3355
      %v3388 = vmul.f32 %v3352, %v3355
      %v3389 = vld [vmem:[%s6] sm:$0x1]
      %v3391 = vperm.slane %v3389, 0
      %v3393 = vadd.f32 %v3357, %v3391
      %v3394 = vadd.f32 %v3358, %v3391
      %v3395 = vadd.f32 %v3359, %v3391
      %v3396 = vadd.f32 %v3360, %v3391
      %v3397 = vadd.f32 %v3361, %v3391
      %v3398 = vadd.f32 %v3362, %v3391
      %v3399 = vadd.f32 %v3363, %v3391
      %v3400 = vadd.f32 %v3364, %v3391
      %v3401 = vadd.f32 %v3365, %v3391
      %v3402 = vadd.f32 %v3366, %v3391
      %v3403 = vadd.f32 %v3367, %v3391
      %v3404 = vadd.f32 %v3368, %v3391
      %v3405 = vadd.f32 %v3369, %v3391
      %v3406 = vadd.f32 %v3370, %v3391
      %v3407 = vadd.f32 %v3371, %v3391
      %v3408 = vadd.f32 %v3372, %v3391
      %v3409 = vadd.f32 %v3373, %v3391
      %v3410 = vadd.f32 %v3374, %v3391
      %v3411 = vadd.f32 %v3375, %v3391
      %v3412 = vadd.f32 %v3376, %v3391
      %v3413 = vadd.f32 %v3377, %v3391
      %v3414 = vadd.f32 %v3378, %v3391
      %v3415 = vadd.f32 %v3379, %v3391
      %v3416 = vadd.f32 %v3380, %v3391
      %v3417 = vadd.f32 %v3381, %v3391
      %v3418 = vadd.f32 %v3382, %v3391
      %v3419 = vadd.f32 %v3383, %v3391
      %v3420 = vadd.f32 %v3384, %v3391
      %v3421 = vadd.f32 %v3385, %v3391
      %v3422 = vadd.f32 %v3386, %v3391
      %v3423 = vadd.f32 %v3387, %v3391
      %v3424 = vadd.f32 %v3388, %v3391
      %v3425 = vmax.f32 %v3393, 0.0
      %v3426 = vmax.f32 %v3394, 0.0
      %v3427 = vmax.f32 %v3395, 0.0
      %v3428 = vmax.f32 %v3396, 0.0
      %v3429 = vmax.f32 %v3397, 0.0
      %v3430 = vmax.f32 %v3398, 0.0
      %v3431 = vmax.f32 %v3399, 0.0
      %v3432 = vmax.f32 %v3400, 0.0
      %v3433 = vmax.f32 %v3401, 0.0
      %v3434 = vmax.f32 %v3402, 0.0
      %v3435 = vmax.f32 %v3403, 0.0
      %v3436 = vmax.f32 %v3404, 0.0
      %v3437 = vmax.f32 %v3405, 0.0
      %v3438 = vmax.f32 %v3406, 0.0
      %v3439 = vmax.f32 %v3407, 0.0
      %v3440 = vmax.f32 %v3408, 0.0
      %v3441 = vmax.f32 %v3409, 0.0
      %v3442 = vmax.f32 %v3410, 0.0
      %v3443 = vmax.f32 %v3411, 0.0
      %v3444 = vmax.f32 %v3412, 0.0
      %v3445 = vmax.f32 %v3413, 0.0
      %v3446 = vmax.f32 %v3414, 0.0
      %v3447 = vmax.f32 %v3415, 0.0
      %v3448 = vmax.f32 %v3416, 0.0
      %v3449 = vmax.f32 %v3417, 0.0
      %v3450 = vmax.f32 %v3418, 0.0
      %v3451 = vmax.f32 %v3419, 0.0
      %v3452 = vmax.f32 %v3420, 0.0
      %v3453 = vmax.f32 %v3421, 0.0
      %v3454 = vmax.f32 %v3422, 0.0
      %v3455 = vmax.f32 %v3423, 0.0
      %v3456 = vmax.f32 %v3424, 0.0
      %v3457 = vadd.f32 %v3425, %v3426
      %v3458 = vadd.f32 %v3457, %v3427
      %v3459 = vadd.f32 %v3458, %v3428
      %v3460 = vadd.f32 %v3459, %v3429
      %v3461 = vadd.f32 %v3460, %v3430
      %v3462 = vadd.f32 %v3461, %v3431
      %v3463 = vadd.f32 %v3462, %v3432
      %v3464 = vadd.f32 %v3463, %v3433
      %v3465 = vadd.f32 %v3464, %v3434
      %v3466 = vadd.f32 %v3465, %v3435
      %v3467 = vadd.f32 %v3466, %v3436
      %v3468 = vadd.f32 %v3467, %v3437
      %v3469 = vadd.f32 %v3468, %v3438
      %v3470 = vadd.f32 %v3469, %v3439
      %v3471 = vadd.f32 %v3470, %v3440
      %v3472 = vadd.f32 %v3471, %v3441
      %v3473 = vadd.f32 %v3472, %v3442
      %v3474 = vadd.f32 %v3473, %v3443
      %v3475 = vadd.f32 %v3474, %v3444
      %v3476 = vadd.f32 %v3475, %v3445
      %v3477 = vadd.f32 %v3476, %v3446
      %v3478 = vadd.f32 %v3477, %v3447
      %v3479 = vadd.f32 %v3478, %v3448
      %v3480 = vadd.f32 %v3479, %v3449
      %v3481 = vadd.f32 %v3480, %v3450
      %v3482 = vadd.f32 %v3481, %v3451
      %v3483 = vadd.f32 %v3482, %v3452
      %v3484 = vadd.f32 %v3483, %v3453
      %v3485 = vadd.f32 %v3484, %v3454
      %v3486 = vadd.f32 %v3485, %v3455
      %v3487 = vadd.f32 %v3486, %v3456
      %v3488 = vrot.slane %v3487, 4
      %v3489 = vadd.f32 %v3487, %v3488
      %v3490 = vrot.slane %v3489, 2
      %v3491 = vadd.f32 %v3489, %v3490
      %v3492 = vrot.slane %v3491, 1
      %v3493 = vadd.f32 %v3491, %v3492
      %v3494 = vmul.f32 %v3493, 0.00390625
      %v3495 = vld [vmem:[%s7] sm:$0xff]
      %v3496 = vld [vmem:[%s7 + $0x8] sm:$0xff]
      %v3497 = vld [vmem:[%s7 + $0x10] sm:$0xff]
      %v3498 = vld [vmem:[%s7 + $0x18] sm:$0xff]
      %v3499 = vld [vmem:[%s7 + $0x20] sm:$0xff]
      %v3500 = vld [vmem:[%s7 + $0x28] sm:$0xff]
      %v3501 = vld [vmem:[%s7 + $0x30] sm:$0xff]
      %v3502 = vld [vmem:[%s7 + $0x38] sm:$0xff]
      %v3503 = vld [vmem:[%s7 + $0x40] sm:$0xff]
      %v3504 = vld [vmem:[%s7 + $0x48] sm:$0xff]
      %v3505 = vld [vmem:[%s7 + $0x50] sm:$0xff]
      %v3506 = vld [vmem:[%s7 + $0x58] sm:$0xff]
      %v3507 = vld [vmem:[%s7 + $0x60] sm:$0xff]
      %v3508 = vld [vmem:[%s7 + $0x68] sm:$0xff]
      %v3509 = vld [vmem:[%s7 + $0x70] sm:$0xff]
      %v3510 = vld [vmem:[%s7 + $0x78] sm:$0xff]
      %v3511 = vld [vmem:[%s8] sm:$0x1]
      %3512 = vmatpush.msra.mxu0 %v3510
      %3513 = vmatpush.msra.mxu0 %v3509
      %3514 = vmatpush.msra.mxu0 %v3508
      %3515 = vmatpush.msra.mxu0 %v3507
      %3516 = vmatpush.msra.mxu0 %v3506
      %3517 = vmatpush.msra.mxu0 %v3505
      %3518 = vmatpush.msra.mxu0 %v3504
      %3519 = vmatpush.msra.mxu0 %v3503
      %3520 = vmatpush.msra.mxu0 %v3502
      %3521 = vmatpush.msra.mxu0 %v3501
      %3522 = vmatpush.msra.mxu0 %v3500
      %3523 = vmatpush.msra.mxu0 %v3499
      %3524 = vmatpush.msra.mxu0 %v3498
      %3525 = vmatpush.msra.mxu0 %v3497
      %3526 = vmatpush.msra.mxu0 %v3496
      %3527 = vmatpush.msra.mxu0 %v3495
      %3528 = vmatmul.f32.gmra.mxu0 %v3494
      %v3529 = vpop.f32.mrf.mxu0
      %v3530 = vadd.f32 %v3511, %v3529
      %3531 = vdwg.mxu0
      %v3532 = vmax.f32 %v3530, 0.0
      %v3533 = vld [vmem:[%s9] sm:$0xff]
      %v3534 = vld [vmem:[%s9 + $0x8] sm:$0xff]
      %v3535 = vld [vmem:[%s9 + $0x10] sm:$0xff]
      %v3536 = vld [vmem:[%s9 + $0x18] sm:$0xff]
      %v3537 = vld [vmem:[%s10] sm:$0x1]
      %vm3538 = vcmask 261120
      %v3540 = vsel %vm3538, %v3532, 0
      %3542 = vmatpush.msra.mxu0 0.0
      %3543 = vmatpush.msra.mxu0 0.0
      %3544 = vmatpush.msra.mxu0 0.0
      %3545 = vmatpush.msra.mxu0 0.0
      %3546 = vmatpush.msra.mxu0 0.0
      %3547 = vmatpush.msra.mxu0 0.0
      %3548 = vmatpush.msra.mxu0 0.0
      %3549 = vmatpush.msra.mxu0 0.0
      %3550 = vmatpush.msra.mxu0 0.0
      %3551 = vmatpush.msra.mxu0 0.0
      %3552 = vmatpush.msra.mxu0 0.0
      %3553 = vmatpush.msra.mxu0 0.0
      %3554 = vmatpush.msra.mxu0 %v3536
      %3555 = vmatpush.msra.mxu0 %v3535
      %3556 = vmatpush.msra.mxu0 %v3534
      %3557 = vmatpush.msra.mxu0 %v3533
      %3558 = vmatmul.f32.gmra.mxu0 %v3540
      %v3559 = vpop.f32.mrf.mxu0
      %v3560 = vadd.f32 %v3537, %v3559
      %3561 = vdwg.mxu0
      %v3562 = vmax.f32 %v3560, -30.0
      %v3563 = vmin.f32 %v3562, 30.0
      %v3564 = vsub.f32 0.0, %v3563
      %v3565 = vmul.f32 %v3564, 1.442695
      %v3566 = vpow.pop %v3565
      %v3567 = vadd.f32 %v3566, 1.0
      %v3568 = vrcp.pop %v3567
      %v3569 = vmul.f32 %v3567, %v3568
      %v3570 = vsub.f32 1.0, %v3569
      %v3571 = vmul.f32 %v3568, %v3570
      %v3572 = vadd.f32 %v3568, %v3571
      %vm3573 = vweird.f32 %v3567
      %vm3574 = vweird.f32 %v3568
      %vm3575 = vmor %vm3573, %vm3574
      %v3576 = vsel %vm3575, %v3568, %v3572
      %v3577 = vand.u32 2147483647, %v3567
      %vm3578 = vcmp.eq.f32.partialorder %v3577, 8.507059e+37
      %v3579 = vand.u32 %v3567, 2147483648
      %v3580 = vor.u32 1.1754944e-38, %v3579
      %v3581 = vsel %vm3578, %v3580, %v3576
      %v3582 = vmul.f32 1.0, %v3581
      %v3583 = vperm.slane %v3582, 0
      %v3584 = vmul.f32 %v3425, %v3583
      %v3585 = vmul.f32 %v3426, %v3583
      %v3586 = vmul.f32 %v3427, %v3583
      %v3587 = vmul.f32 %v3428, %v3583
      %v3588 = vmul.f32 %v3429, %v3583
      %v3589 = vmul.f32 %v3430, %v3583
      %v3590 = vmul.f32 %v3431, %v3583
      %v3591 = vmul.f32 %v3432, %v3583
      %v3592 = vmul.f32 %v3433, %v3583
      %v3593 = vmul.f32 %v3434, %v3583
      %v3594 = vmul.f32 %v3435, %v3583
      %v3595 = vmul.f32 %v3436, %v3583
      %v3596 = vmul.f32 %v3437, %v3583
      %v3597 = vmul.f32 %v3438, %v3583
      %v3598 = vmul.f32 %v3439, %v3583
      %v3599 = vmul.f32 %v3440, %v3583
      %v3600 = vmul.f32 %v3441, %v3583
      %v3601 = vmul.f32 %v3442, %v3583
      %v3602 = vmul.f32 %v3443, %v3583
      %v3603 = vmul.f32 %v3444, %v3583
      %v3604 = vmul.f32 %v3445, %v3583
      %v3605 = vmul.f32 %v3446, %v3583
      %v3606 = vmul.f32 %v3447, %v3583
      %v3607 = vmul.f32 %v3448, %v3583
      %v3608 = vmul.f32 %v3449, %v3583
      %v3609 = vmul.f32 %v3450, %v3583
      %v3610 = vmul.f32 %v3451, %v3583
      %v3611 = vmul.f32 %v3452, %v3583
      %v3612 = vmul.f32 %v3453, %v3583
      %v3613 = vmul.f32 %v3454, %v3583
      %v3614 = vmul.f32 %v3455, %v3583
      %v3615 = vmul.f32 %v3456, %v3583
      %v3616 = vld [vmem:[%s11] sm:$0xff]
      %v3617 = vld [vmem:[%s11 + $0x8] sm:$0xff]
      %v3618 = vld [vmem:[%s11 + $0x10] sm:$0xff]
      %v3619 = vld [vmem:[%s11 + $0x18] sm:$0xff]
      %v3620 = vld [vmem:[%s11 + $0x20] sm:$0xff]
      %v3621 = vld [vmem:[%s11 + $0x28] sm:$0xff]
      %v3622 = vld [vmem:[%s11 + $0x30] sm:$0xff]
      %v3623 = vld [vmem:[%s11 + $0x38] sm:$0xff]
      %v3624 = vld [vmem:[%s11 + $0x40] sm:$0xff]
      %v3625 = vld [vmem:[%s11 + $0x48] sm:$0xff]
      %v3626 = vld [vmem:[%s11 + $0x50] sm:$0xff]
      %v3627 = vld [vmem:[%s11 + $0x58] sm:$0xff]
      %v3628 = vld [vmem:[%s11 + $0x60] sm:$0xff]
      %v3629 = vld [vmem:[%s11 + $0x68] sm:$0xff]
      %v3630 = vld [vmem:[%s11 + $0x70] sm:$0xff]
      %v3631 = vld [vmem:[%s11 + $0x78] sm:$0xff]
      %3632 = vmatpush.msra.mxu0 %v3631
      %3633 = vmatpush.msra.mxu0 %v3630
      %3634 = vmatpush.msra.mxu0 %v3629
      %3635 = vmatpush.msra.mxu0 %v3628
      %3636 = vmatpush.msra.mxu0 %v3627
      %3637 = vmatpush.msra.mxu0 %v3626
      %3638 = vmatpush.msra.mxu0 %v3625
      %3639 = vmatpush.msra.mxu0 %v3624
      %3640 = vmatpush.msra.mxu0 %v3623
      %3641 = vmatpush.msra.mxu0 %v3622
      %3642 = vmatpush.msra.mxu0 %v3621
      %3643 = vmatpush.msra.mxu0 %v3620
      %3644 = vmatpush.msra.mxu0 %v3619
      %3645 = vmatpush.msra.mxu0 %v3618
      %3646 = vmatpush.msra.mxu0 %v3617
      %3647 = vmatpush.msra.mxu0 %v3616
      %3648 = vmatmul.f32.gmra.mxu0 %v3584
      %v3649 = vpop.f32.mrf.mxu0
      %v3650 = vadd.f32 0.0, %v3649
      %3651 = vmatmul.f32.gmra.mxu0 %v3585
      %v3652 = vpop.f32.mrf.mxu0
      %v3653 = vadd.f32 0.0, %v3652
      %3654 = vmatmul.f32.gmra.mxu0 %v3586
      %v3655 = vpop.f32.mrf.mxu0
      %v3656 = vadd.f32 0.0, %v3655
      %3657 = vmatmul.f32.gmra.mxu0 %v3587
      %v3658 = vpop.f32.mrf.mxu0
      %v3659 = vadd.f32 0.0, %v3658
      %3660 = vmatmul.f32.gmra.mxu0 %v3588
      %v3661 = vpop.f32.mrf.mxu0
      %v3662 = vadd.f32 0.0, %v3661
      %3663 = vmatmul.f32.gmra.mxu0 %v3589
      %v3664 = vpop.f32.mrf.mxu0
      %v3665 = vadd.f32 0.0, %v3664
      %3666 = vmatmul.f32.gmra.mxu0 %v3590
      %v3667 = vpop.f32.mrf.mxu0
      %v3668 = vadd.f32 0.0, %v3667
      %3669 = vmatmul.f32.gmra.mxu0 %v3591
      %v3670 = vpop.f32.mrf.mxu0
      %v3671 = vadd.f32 0.0, %v3670
      %3672 = vmatmul.f32.gmra.mxu0 %v3592
      %v3673 = vpop.f32.mrf.mxu0
      %v3674 = vadd.f32 0.0, %v3673
      %3675 = vmatmul.f32.gmra.mxu0 %v3593
      %v3676 = vpop.f32.mrf.mxu0
      %v3677 = vadd.f32 0.0, %v3676
      %3678 = vmatmul.f32.gmra.mxu0 %v3594
      %v3679 = vpop.f32.mrf.mxu0
      %v3680 = vadd.f32 0.0, %v3679
      %3681 = vmatmul.f32.gmra.mxu0 %v3595
      %v3682 = vpop.f32.mrf.mxu0
      %v3683 = vadd.f32 0.0, %v3682
      %3684 = vmatmul.f32.gmra.mxu0 %v3596
      %v3685 = vpop.f32.mrf.mxu0
      %v3686 = vadd.f32 0.0, %v3685
      %3687 = vmatmul.f32.gmra.mxu0 %v3597
      %v3688 = vpop.f32.mrf.mxu0
      %v3689 = vadd.f32 0.0, %v3688
      %3690 = vmatmul.f32.gmra.mxu0 %v3598
      %v3691 = vpop.f32.mrf.mxu0
      %v3692 = vadd.f32 0.0, %v3691
      %3693 = vmatmul.f32.gmra.mxu0 %v3599
      %v3694 = vpop.f32.mrf.mxu0
      %v3695 = vadd.f32 0.0, %v3694
      %3696 = vmatmul.f32.gmra.mxu0 %v3600
      %v3697 = vpop.f32.mrf.mxu0
      %v3698 = vadd.f32 0.0, %v3697
      %3699 = vmatmul.f32.gmra.mxu0 %v3601
      %v3700 = vpop.f32.mrf.mxu0
      %v3701 = vadd.f32 0.0, %v3700
      %3702 = vmatmul.f32.gmra.mxu0 %v3602
      %v3703 = vpop.f32.mrf.mxu0
      %v3704 = vadd.f32 0.0, %v3703
      %3705 = vmatmul.f32.gmra.mxu0 %v3603
      %v3706 = vpop.f32.mrf.mxu0
      %v3707 = vadd.f32 0.0, %v3706
      %3708 = vmatmul.f32.gmra.mxu0 %v3604
      %v3709 = vpop.f32.mrf.mxu0
      %v3710 = vadd.f32 0.0, %v3709
      %3711 = vmatmul.f32.gmra.mxu0 %v3605
      %v3712 = vpop.f32.mrf.mxu0
      %v3713 = vadd.f32 0.0, %v3712
      %3714 = vmatmul.f32.gmra.mxu0 %v3606
      %v3715 = vpop.f32.mrf.mxu0
      %v3716 = vadd.f32 0.0, %v3715
      %3717 = vmatmul.f32.gmra.mxu0 %v3607
      %v3718 = vpop.f32.mrf.mxu0
      %v3719 = vadd.f32 0.0, %v3718
      %3720 = vmatmul.f32.gmra.mxu0 %v3608
      %v3721 = vpop.f32.mrf.mxu0
      %v3722 = vadd.f32 0.0, %v3721
      %3723 = vmatmul.f32.gmra.mxu0 %v3609
      %v3724 = vpop.f32.mrf.mxu0
      %v3725 = vadd.f32 0.0, %v3724
      %3726 = vmatmul.f32.gmra.mxu0 %v3610
      %v3727 = vpop.f32.mrf.mxu0
      %v3728 = vadd.f32 0.0, %v3727
      %3729 = vmatmul.f32.gmra.mxu0 %v3611
      %v3730 = vpop.f32.mrf.mxu0
      %v3731 = vadd.f32 0.0, %v3730
      %3732 = vmatmul.f32.gmra.mxu0 %v3612
      %v3733 = vpop.f32.mrf.mxu0
      %v3734 = vadd.f32 0.0, %v3733
      %3735 = vmatmul.f32.gmra.mxu0 %v3613
      %v3736 = vpop.f32.mrf.mxu0
      %v3737 = vadd.f32 0.0, %v3736
      %3738 = vmatmul.f32.gmra.mxu0 %v3614
      %v3739 = vpop.f32.mrf.mxu0
      %v3740 = vadd.f32 0.0, %v3739
      %3741 = vmatmul.f32.gmra.mxu0 %v3615
      %v3742 = vpop.f32.mrf.mxu0
      %v3743 = vadd.f32 0.0, %v3742
      %3744 = vdwg.mxu0
      %v3745 = vld [vmem:[%s12] sm:$0x1]
      %v3747 = vperm.slane %v3745, 0
      %v3749 = vmul.f32 %v3650, %v3747
      %v3750 = vmul.f32 %v3653, %v3747
      %v3751 = vmul.f32 %v3656, %v3747
      %v3752 = vmul.f32 %v3659, %v3747
      %v3753 = vmul.f32 %v3662, %v3747
      %v3754 = vmul.f32 %v3665, %v3747
      %v3755 = vmul.f32 %v3668, %v3747
      %v3756 = vmul.f32 %v3671, %v3747
      %v3757 = vmul.f32 %v3674, %v3747
      %v3758 = vmul.f32 %v3677, %v3747
      %v3759 = vmul.f32 %v3680, %v3747
      %v3760 = vmul.f32 %v3683, %v3747
      %v3761 = vmul.f32 %v3686, %v3747
      %v3762 = vmul.f32 %v3689, %v3747
      %v3763 = vmul.f32 %v3692, %v3747
      %v3764 = vmul.f32 %v3695, %v3747
      %v3765 = vmul.f32 %v3698, %v3747
      %v3766 = vmul.f32 %v3701, %v3747
      %v3767 = vmul.f32 %v3704, %v3747
      %v3768 = vmul.f32 %v3707, %v3747
      %v3769 = vmul.f32 %v3710, %v3747
      %v3770 = vmul.f32 %v3713, %v3747
      %v3771 = vmul.f32 %v3716, %v3747
      %v3772 = vmul.f32 %v3719, %v3747
      %v3773 = vmul.f32 %v3722, %v3747
      %v3774 = vmul.f32 %v3725, %v3747
      %v3775 = vmul.f32 %v3728, %v3747
      %v3776 = vmul.f32 %v3731, %v3747
      %v3777 = vmul.f32 %v3734, %v3747
      %v3778 = vmul.f32 %v3737, %v3747
      %v3779 = vmul.f32 %v3740, %v3747
      %v3780 = vmul.f32 %v3743, %v3747
      %v3781 = vld [vmem:[%s13] sm:$0x1]
      %v3783 = vperm.slane %v3781, 0
      %v3785 = vadd.f32 %v3749, %v3783
      %v3786 = vadd.f32 %v3750, %v3783
      %v3787 = vadd.f32 %v3751, %v3783
      %v3788 = vadd.f32 %v3752, %v3783
      %v3789 = vadd.f32 %v3753, %v3783
      %v3790 = vadd.f32 %v3754, %v3783
      %v3791 = vadd.f32 %v3755, %v3783
      %v3792 = vadd.f32 %v3756, %v3783
      %v3793 = vadd.f32 %v3757, %v3783
      %v3794 = vadd.f32 %v3758, %v3783
      %v3795 = vadd.f32 %v3759, %v3783
      %v3796 = vadd.f32 %v3760, %v3783
      %v3797 = vadd.f32 %v3761, %v3783
      %v3798 = vadd.f32 %v3762, %v3783
      %v3799 = vadd.f32 %v3763, %v3783
      %v3800 = vadd.f32 %v3764, %v3783
      %v3801 = vadd.f32 %v3765, %v3783
      %v3802 = vadd.f32 %v3766, %v3783
      %v3803 = vadd.f32 %v3767, %v3783
      %v3804 = vadd.f32 %v3768, %v3783
      %v3805 = vadd.f32 %v3769, %v3783
      %v3806 = vadd.f32 %v3770, %v3783
      %v3807 = vadd.f32 %v3771, %v3783
      %v3808 = vadd.f32 %v3772, %v3783
      %v3809 = vadd.f32 %v3773, %v3783
      %v3810 = vadd.f32 %v3774, %v3783
      %v3811 = vadd.f32 %v3775, %v3783
      %v3812 = vadd.f32 %v3776, %v3783
      %v3813 = vadd.f32 %v3777, %v3783
      %v3814 = vadd.f32 %v3778, %v3783
      %v3815 = vadd.f32 %v3779, %v3783
      %v3816 = vadd.f32 %v3780, %v3783
      %v3817 = vadd.f32 %v3785, %v468
      %v3818 = vadd.f32 %v3786, %v469
      %v3819 = vadd.f32 %v3787, %v470
      %v3820 = vadd.f32 %v3788, %v471
      %v3821 = vadd.f32 %v3789, %v472
      %v3822 = vadd.f32 %v3790, %v473
      %v3823 = vadd.f32 %v3791, %v474
      %v3824 = vadd.f32 %v3792, %v475
      %v3825 = vadd.f32 %v3793, %v476
      %v3826 = vadd.f32 %v3794, %v477
      %v3827 = vadd.f32 %v3795, %v478
      %v3828 = vadd.f32 %v3796, %v479
      %v3829 = vadd.f32 %v3797, %v480
      %v3830 = vadd.f32 %v3798, %v481
      %v3831 = vadd.f32 %v3799, %v482
      %v3832 = vadd.f32 %v3800, %v483
      %v3833 = vadd.f32 %v3801, %v484
      %v3834 = vadd.f32 %v3802, %v485
      %v3835 = vadd.f32 %v3803, %v486
      %v3836 = vadd.f32 %v3804, %v487
      %v3837 = vadd.f32 %v3805, %v488
      %v3838 = vadd.f32 %v3806, %v489
      %v3839 = vadd.f32 %v3807, %v490
      %v3840 = vadd.f32 %v3808, %v491
      %v3841 = vadd.f32 %v3809, %v492
      %v3842 = vadd.f32 %v3810, %v493
      %v3843 = vadd.f32 %v3811, %v494
      %v3844 = vadd.f32 %v3812, %v495
      %v3845 = vadd.f32 %v3813, %v496
      %v3846 = vadd.f32 %v3814, %v497
      %v3847 = vadd.f32 %v3815, %v498
      %v3848 = vadd.f32 %v3816, %v499
      %3849 = vst.msk [vmem:[%s467] sm:$0xff] %vm508, %v3817
      %3850 = vst.msk [vmem:[%s467 + $0x8] sm:$0xff] %vm508, %v3818
      %3851 = vst.msk [vmem:[%s467 + $0x10] sm:$0xff] %vm508, %v3819
      %3852 = vst.msk [vmem:[%s467 + $0x18] sm:$0xff] %vm508, %v3820
      %3853 = vst.msk [vmem:[%s467 + $0x20] sm:$0xff] %vm508, %v3821
      %3854 = vst.msk [vmem:[%s467 + $0x28] sm:$0xff] %vm508, %v3822
      %3855 = vst.msk [vmem:[%s467 + $0x30] sm:$0xff] %vm508, %v3823
      %3856 = vst.msk [vmem:[%s467 + $0x38] sm:$0xff] %vm508, %v3824
      %3857 = vst.msk [vmem:[%s467 + $0x40] sm:$0xff] %vm508, %v3825
      %3858 = vst.msk [vmem:[%s467 + $0x48] sm:$0xff] %vm508, %v3826
      %3859 = vst.msk [vmem:[%s467 + $0x50] sm:$0xff] %vm508, %v3827
      %3860 = vst.msk [vmem:[%s467 + $0x58] sm:$0xff] %vm508, %v3828
      %3861 = vst.msk [vmem:[%s467 + $0x60] sm:$0xff] %vm508, %v3829
      %3862 = vst.msk [vmem:[%s467 + $0x68] sm:$0xff] %vm508, %v3830
      %3863 = vst.msk [vmem:[%s467 + $0x70] sm:$0xff] %vm508, %v3831
      %3864 = vst.msk [vmem:[%s467 + $0x78] sm:$0xff] %vm508, %v3832
      %3865 = vst.msk [vmem:[%s467 + $0x80] sm:$0xff] %vm508, %v3833
      %3866 = vst.msk [vmem:[%s467 + $0x88] sm:$0xff] %vm508, %v3834
      %3867 = vst.msk [vmem:[%s467 + $0x90] sm:$0xff] %vm508, %v3835
      %3868 = vst.msk [vmem:[%s467 + $0x98] sm:$0xff] %vm508, %v3836
      %3869 = vst.msk [vmem:[%s467 + $0xa0] sm:$0xff] %vm508, %v3837
      %3870 = vst.msk [vmem:[%s467 + $0xa8] sm:$0xff] %vm508, %v3838
      %3871 = vst.msk [vmem:[%s467 + $0xb0] sm:$0xff] %vm508, %v3839
      %3872 = vst.msk [vmem:[%s467 + $0xb8] sm:$0xff] %vm508, %v3840
      %3873 = vst.msk [vmem:[%s467 + $0xc0] sm:$0xff] %vm508, %v3841
      %3874 = vst.msk [vmem:[%s467 + $0xc8] sm:$0xff] %vm508, %v3842
      %3875 = vst.msk [vmem:[%s467 + $0xd0] sm:$0xff] %vm508, %v3843
      %3876 = vst.msk [vmem:[%s467 + $0xd8] sm:$0xff] %vm508, %v3844
      %3877 = vst.msk [vmem:[%s467 + $0xe0] sm:$0xff] %vm508, %v3845
      %3878 = vst.msk [vmem:[%s467 + $0xe8] sm:$0xff] %vm508, %v3846
      %3879 = vst.msk [vmem:[%s467 + $0xf0] sm:$0xff] %vm508, %v3847
      %3880 = vst.msk [vmem:[%s467 + $0xf8] sm:$0xff] %vm508, %v3848
      %p3881 = scmp.lt.s32.totalorder %s25, 1
      %s3882 = scalar_select %p3881, %s25, 1
      %s3883 = smul.addr %s3882, 32
      %s3884 = smul.addr %s3883, 8
      %s3885 = scalar_lea.vmem %s14, %s3884
      // Predicated region
      $region77: #{tpu_custom_call.1} parent=75 // pred_check
        %p3886 = pneg %p342
      $region78: #{tpu_custom_call.1} parent=75 // pred_check_branch
        %3888 = sbr.rel (%p3886) target = $region80
      $region79: #{tpu_custom_call.1} parent=75 // pred_region
        _
      $region80: #{tpu_custom_call.1} parent=75 // pred_fallthru
        _
    $region76: #{tpu_custom_call.1} parent=5 // pred_fallthru
      _
    %p3889 = scmp.le.s32.totalorder 2, %s20
    // Predicated region
    $region81: #{tpu_custom_call.1} parent=5 // pred_check
      %p3890 = pneg %p3889
    $region82: #{tpu_custom_call.1} parent=5 // pred_check_branch
      %3892 = sbr.rel (%p3890) target = $region84
    $region83: #{tpu_custom_call.1} parent=5 // pred_region
      %s3893 = ssub.s32 %s20, 2
      // Predicated region
      $region85: #{tpu_custom_call.1} parent=83 // pred_check
        %p3894 = pneg %p348
      $region86: #{tpu_custom_call.1} parent=83 // pred_check_branch
        %3896 = sbr.rel (%p3894) target = $region88
      $region87: #{tpu_custom_call.1} parent=83 // pred_region
        %p3897 = scmp.lt.s32.totalorder %s26, 1
        %s3898 = scalar_select %p3897, %s26, 1
        %s3899 = smul.addr %s3898, 32
        %s3900 = smul.addr %s3899, 8
        %s3901 = scalar_lea.vmem %s14, %s3900
      $region88: #{tpu_custom_call.1} parent=83 // pred_fallthru
        _
    $region84: #{tpu_custom_call.1} parent=5 // pred_fallthru
      _
  $region6: #{tpu_custom_call.1} parent=0 // loop_footer
    %s24 = sadd.s32 1, %s20
  $region7: #{tpu_custom_call.1} parent=0 // loop_footer_branch
    %19 = sbr.rel target = $region3
  $region8: #{tpu_custom_call.1} parent=0 // loop_exit
    _

</llo_original>
